<compile_context>
chip_gen: v7x
topology: tpu7x:2x2x1
jax: 0.10.0
libtpu: 0.0.40
codegen_flags: <defaults>
</compile_context>

<pallas_src>
import math

import jax
import jax.numpy as jnp
from jax import lax
from jax.experimental import pallas as pl
from jax.experimental.pallas import tpu as pltpu

# ---- small synthetic stand-in config for bert-base-cased + CRF ----
VOCAB = 100
MAX_POS = 32
HIDDEN = 32
NUM_HEADS = 2
HEAD_DIM = HIDDEN // NUM_HEADS
FFN = 64
NUM_LAYERS = 2
NUM_TAGS = 6
BATCH = 2
SEQ = 8
LN_EPS = 1e-12


# ----------------------------- shared math helpers -----------------------------
def _layernorm(x, g, b):
    mu = jnp.mean(x, axis=-1, keepdims=True)
    var = jnp.mean(jnp.square(x - mu), axis=-1, keepdims=True)
    return (x - mu) * lax.rsqrt(var + LN_EPS) * g + b


def _gelu(x):
    # tanh-approx GELU (keeps the lowering simple; BERT's erf GELU is numerically close)
    c = math.sqrt(2.0 / math.pi)
    return 0.5 * x * (1.0 + jnp.tanh(c * (x + 0.044715 * x * x * x)))


# ------------------------------ Pallas kernels -----------------------------
def encoder_layer_kernel(mask_ref, h_in_ref,
                         wqkv_ref, bqkv_ref, wo_ref, bo_ref, ln1g_ref, ln1b_ref,
                         wi_ref, bi_ref, wo2_ref, bo2_ref, ln2g_ref, ln2b_ref,
                         h_ref):
    # grid axis = encoder layer; per-layer weights stream in via the layer index_map,
    # the hidden slab lives in the (constant-index) output block across all layers.
    #   h_in_ref / h_ref: (B*S, D)   flat hidden slab (f32, VMEM-resident)
    #   mask_ref:         (B, 1, S)  1.0 = real token, 0.0 = padding
    layer = pl.program_id(0)

    @pl.when(layer == 0)
    def _():
        h_ref[...] = h_in_ref[...]

    Bx, _, Sx = mask_ref.shape
    Dx = h_ref.shape[1]

    h2 = h_ref[...]                                               # (B*S, D)
    bias = (1.0 - mask_ref[...]) * -10000.0                       # (B, 1, S)
    bias_b = jnp.broadcast_to(bias, (Bx, Sx, Sx))                 # hoisted: reused per head

    # Fused QKV projection (bf16 MXU inputs, f32 accumulation).
    qkv = jnp.dot(h2.astype(jnp.bfloat16), wqkv_ref[...],
                  preferred_element_type=jnp.float32) + bqkv_ref[...]   # (B*S, 3D)
    qkv = qkv.reshape(Bx, Sx, 3 * Dx)

    scale = 1.0 / math.sqrt(HEAD_DIM)
    wo = wo_ref[...]                                              # (D, D) bf16
    attn = jnp.zeros((Bx * Sx, Dx), jnp.float32)
    for hh in range(NUM_HEADS):                                   # tiny static loop
        lo = hh * HEAD_DIM
        qh = qkv[:, :, lo:lo + HEAD_DIM]                          # (B, S, dh) f32
        kh = qkv[:, :, Dx + lo:Dx + lo + HEAD_DIM]
        vh = qkv[:, :, 2 * Dx + lo:2 * Dx + lo + HEAD_DIM]
        sc = jnp.einsum("bqd,bkd->bqk", qh, kh,
                        preferred_element_type=jnp.float32) * scale + bias_b
        sc = sc - jnp.max(sc, axis=-1, keepdims=True)
        p = jnp.exp(sc)
        # EUP reciprocal instead of a VALU divide.
        p = p * pl.reciprocal(jnp.sum(p, axis=-1, keepdims=True), approx=True)
        ctx_h = jnp.einsum("bqk,bkd->bqd", p, vh,
                           preferred_element_type=jnp.float32)
        ctx_h = ctx_h.reshape(Bx * Sx, HEAD_DIM).astype(jnp.bfloat16)
        # Fold the head concat into the output-projection MXU accumulation.
        attn = attn + jnp.dot(ctx_h, wo[lo:lo + HEAD_DIM, :],
                              preferred_element_type=jnp.float32)
    attn = attn + bo_ref[...]
    h1 = _layernorm(h2 + attn, ln1g_ref[...], ln1b_ref[...])

    ff = _gelu(jnp.dot(h1.astype(jnp.bfloat16), wi_ref[...],
                       preferred_element_type=jnp.float32) + bi_ref[...])
    ff = jnp.dot(ff.astype(jnp.bfloat16), wo2_ref[...],
                 preferred_element_type=jnp.float32) + bo2_ref[...]
    h_ref[...] = _layernorm(h1 + ff, ln2g_ref[...], ln2b_ref[...])


def crf_viterbi_kernel(mask_ref, h_ref, fcw_ref, fcb_ref,
                       start_ref, end_ref, trans_ref, tags_ref):
    # Single grid step, whole batch vectorized (batch on the sublane axis).
    #   h_ref:    (S*B, D)  hidden rows, TIME-major (rows for time t are contiguous)
    #   mask_ref: (B, S)    1.0 = real token, 0.0 = padding (mask[:,0] must be 1)
    Bx, Sx = mask_ref.shape
    Tx = trans_ref.shape[0]
    NEG = -1e30

    # Fused emission projection: emissions never leave VMEM.
    emis = jnp.dot(h_ref[...], fcw_ref[...],
                   preferred_element_type=jnp.float32) + fcb_ref[...]   # (S*B, T)
    emis = emis.reshape(Sx, Bx, Tx)                                     # (S, B, T)

    trans = trans_ref[...]                                              # (T, T)
    mask = mask_ref[...]                                                # (B, S)
    iota_tags = lax.broadcasted_iota(jnp.int32, (Bx, Tx), 1)
    iota_seq = lax.broadcasted_iota(jnp.int32, (Bx, Sx), 1)

    # Forward Viterbi DP, vectorized over batch; score stays in vregs.
    # Matches torchcrf: masked steps keep the previous score; their backpointers are
    # the identity so backtracking carries the tag through padding.
    score = start_ref[...] + emis[0]                                    # (B, T)
    bps = []                                                            # (B, T) per t=1..S-1
    for t in range(1, Sx):
        # T-way unrolled VPU max/argmax over the previous-tag axis (no XLU transpose).
        best = jnp.full((Bx, Tx), NEG, jnp.float32)
        bidx = jnp.zeros((Bx, Tx), jnp.int32)
        for i in range(Tx):
            cand = score[:, i:i + 1] + trans[i:i + 1, :]                # (B, T)
            take = cand > best                                          # first-max tie-break
            best = jnp.where(take, cand, best)
            bidx = jnp.where(take, i, bidx)
        step_on = mask[:, t:t + 1] > 0.5                                # (B, 1)
        bps.append(jnp.where(step_on, bidx, iota_tags))
        score = jnp.where(step_on, best + emis[t], score)

    # Final argmax over tags (T-way unrolled, per batch row).
    final = score + end_ref[...]                                        # (B, T)
    bestv = jnp.full((Bx, 1), NEG, jnp.float32)
    last_tag = jnp.zeros((Bx, 1), jnp.int32)
    for j in range(Tx):
        v = final[:, j:j + 1]
        take = v > bestv
        bestv = jnp.where(take, v, bestv)
        last_tag = jnp.where(take, j, last_tag)

    # Backtrack (positions past the true sequence end repeat the final tag, since
    # torchcrf returns variable-length Python lists).
    tags = jnp.where(iota_seq == (Sx - 1), last_tag, 0)                 # (B, S) int32
    cur = last_tag                                                      # (B, 1) int32
    for t in range(Sx - 1, 0, -1):
        bp_row = bps[t - 1]                                             # (B, T)
        prev = jnp.sum(jnp.where(iota_tags == cur, bp_row, 0),
                       axis=1, keepdims=True)                           # (B, 1)
        tags = jnp.where(iota_seq == (t - 1), prev, tags)
        cur = prev
    tags_ref[...] = tags


# ------------------------------ Pallas wrappers -----------------------------
def pallas_bert_encoder(h2d, mask_f3, enc):
    """All NUM_LAYERS encoder layers in one pallas_call; hidden slab stays in VMEM."""
    BS, Dx = h2d.shape
    Lx = enc["wqkv"].shape[0]
    Ix = enc["wi"].shape[2]
    Bx, _, Sx = mask_f3.shape

    def wspec(r, c):
        # per-layer weight: leading (squeezed) layer axis streamed by the grid index
        return pl.BlockSpec((None, r, c), lambda l: (l, 0, 0))

    in_specs = [
        pl.BlockSpec((Bx, 1, Sx), lambda l: (0, 0, 0)),   # mask (resident across layers)
        pl.BlockSpec((BS, Dx), lambda l: (0, 0)),         # initial hidden slab (resident)
        wspec(Dx, 3 * Dx), wspec(1, 3 * Dx),              # wqkv, bqkv
        wspec(Dx, Dx), wspec(1, Dx),                      # wo, bo
        wspec(1, Dx), wspec(1, Dx),                       # ln1 gamma, beta
        wspec(Dx, Ix), wspec(1, Ix),                      # wi, bi
        wspec(Ix, Dx), wspec(1, Dx),                      # wo2, bo2
        wspec(1, Dx), wspec(1, Dx),                       # ln2 gamma, beta
    ]
    return pl.pallas_call(
        encoder_layer_kernel,
        out_shape=jax.ShapeDtypeStruct((BS, Dx), jnp.float32),
        grid=(Lx,),
        in_specs=in_specs,
        # constant index_map -> output block (the hidden slab) resident across layers;
        # written back to HBM only once at the end.
        out_specs=pl.BlockSpec((BS, Dx), lambda l: (0, 0)),
        compiler_params=pltpu.CompilerParams(dimension_semantics=("arbitrary",)),
    )(mask_f3, h2d,
      enc["wqkv"], enc["bqkv"], enc["wo"], enc["bo"], enc["ln1_g"], enc["ln1_b"],
      enc["wi"], enc["bi"], enc["wo2"], enc["bo2"], enc["ln2_g"], enc["ln2_b"])


def pallas_crf_decode(h_tm, mask_f, fc_w, fc_b, start, end, trans):
    """Viterbi decode for the whole batch in one grid step (batch on sublanes)."""
    SB, Dx = h_tm.shape
    Bx, Sx = mask_f.shape
    Tx = trans.shape[0]

    def full(shape):
        n = len(shape)
        return pl.BlockSpec(shape, lambda i, n=n: (0,) * n)

    return pl.pallas_call(
        crf_viterbi_kernel,
        out_shape=jax.ShapeDtypeStruct((Bx, Sx), jnp.int32),
        grid=(1,),
        in_specs=[full((Bx, Sx)),        # mask
                  full((SB, Dx)),        # hidden slab (time-major)
                  full((Dx, Tx)), full((1, Tx)),    # fc weight / bias (fused emissions)
                  full((1, Tx)), full((1, Tx)),     # start / end transitions
                  full((Tx, Tx))],                  # transitions
        out_specs=full((Bx, Sx)),
        compiler_params=pltpu.CompilerParams(dimension_semantics=("arbitrary",)),
    )(mask_f, h_tm, fc_w, fc_b, start, end, trans)


# ------------------------------ model assembly -----------------------------
def init_params(key):
    ks = jax.random.split(key, 32)
    ki = iter(range(32))

    def nrm(shape):
        return jax.random.normal(ks[next(ki)], shape, jnp.float32) * 0.02

    def uni(shape):
        return jax.random.uniform(ks[next(ki)], shape, jnp.float32, -0.1, 0.1)

    # Stacked per-layer encoder weights; QKV fused once here (not per forward call).
    wq = nrm((NUM_LAYERS, HIDDEN, HIDDEN))
    wk = nrm((NUM_LAYERS, HIDDEN, HIDDEN))
    wv = nrm((NUM_LAYERS, HIDDEN, HIDDEN))
    enc = {
        "wqkv": jnp.concatenate([wq, wk, wv], axis=2).astype(jnp.bfloat16),
        "bqkv": jnp.zeros((NUM_LAYERS, 1, 3 * HIDDEN), jnp.float32),
        "wo": nrm((NUM_LAYERS, HIDDEN, HIDDEN)).astype(jnp.bfloat16),
        "bo": jnp.zeros((NUM_LAYERS, 1, HIDDEN), jnp.float32),
        "ln1_g": jnp.ones((NUM_LAYERS, 1, HIDDEN), jnp.float32),
        "ln1_b": jnp.zeros((NUM_LAYERS, 1, HIDDEN), jnp.float32),
        "wi": nrm((NUM_LAYERS, HIDDEN, FFN)).astype(jnp.bfloat16),
        "bi": jnp.zeros((NUM_LAYERS, 1, FFN), jnp.float32),
        "wo2": nrm((NUM_LAYERS, FFN, HIDDEN)).astype(jnp.bfloat16),
        "bo2": jnp.zeros((NUM_LAYERS, 1, HIDDEN), jnp.float32),
        "ln2_g": jnp.ones((NUM_LAYERS, 1, HIDDEN), jnp.float32),
        "ln2_b": jnp.zeros((NUM_LAYERS, 1, HIDDEN), jnp.float32),
    }
    return {
        "word_emb": nrm((VOCAB, HIDDEN)),
        "pos_emb": nrm((MAX_POS, HIDDEN)),
        "type_emb": nrm((2, HIDDEN)),
        "emb_ln_g": jnp.ones((HIDDEN,), jnp.float32),
        "emb_ln_b": jnp.zeros((HIDDEN,), jnp.float32),
        "enc": enc,
        "fc_w": nrm((HIDDEN, NUM_TAGS)),
        "fc_b": jnp.zeros((1, NUM_TAGS), jnp.float32),
        "crf_start": uni((1, NUM_TAGS)),
        "crf_end": uni((1, NUM_TAGS)),
        "crf_trans": uni((NUM_TAGS, NUM_TAGS)),
    }


def bert_crf_decode(params, input_ids, attention_mask):
    """Equivalent of BERT_CRF.forward(x, tags=None, mask=attention_mask).

    Returns an int32 array (B, S); for each row, the first sum(mask[b]) entries
    are the Viterbi tag path (positions past the sequence end repeat the last tag,
    since torchcrf returns variable-length Python lists).
    """
    Bx, Sx = input_ids.shape
    positions = jnp.arange(Sx)
    emb = (params["word_emb"][input_ids]
           + params["pos_emb"][positions][None, :, :]
           + params["type_emb"][0][None, None, :])
    # Embedding LayerNorm in plain jnp: XLA fuses it with the gathers.
    h = _layernorm(emb, params["emb_ln_g"][None, None, :], params["emb_ln_b"][None, None, :])
    h = h.reshape(Bx * Sx, HIDDEN)                      # flat (B*S, D) activation slab

    mask_f = attention_mask.astype(jnp.float32)
    h = pallas_bert_encoder(h, mask_f.reshape(Bx, 1, Sx), params["enc"])

    # Time-major layout for the CRF so each DP step reads contiguous rows (all batches).
    h_tm = h.reshape(Bx, Sx, HIDDEN).transpose(1, 0, 2).reshape(Sx * Bx, HIDDEN)
    tags = pallas_crf_decode(h_tm, mask_f,
                             params["fc_w"], params["fc_b"],
                             params["crf_start"], params["crf_end"], params["crf_trans"])
    return tags


if __name__ == "__main__":
    key = jax.random.PRNGKey(0)
    pkey, dkey = jax.random.split(key)
    params = init_params(pkey)

    input_ids = jax.random.randint(dkey, (BATCH, SEQ), 0, VOCAB, dtype=jnp.int32)
    lengths = jnp.array([SEQ, 5], dtype=jnp.int32)               # variable-length batch
    attention_mask = (jnp.arange(SEQ)[None, :] < lengths[:, None]).astype(jnp.int32)

    tags = jax.jit(bert_crf_decode)(params, input_ids, attention_mask)
    tags = jax.block_until_ready(tags)
    assert tags.shape == (BATCH, SEQ) and tags.dtype == jnp.int32
    assert bool(jnp.all((tags >= 0) & (tags < NUM_TAGS)))
    print("KERNEL_OK")
</pallas_src>

<mosaic_0001>
module attributes {stable_mosaic.version = 11 : i64} {
  func.func @encoder_layer_kernel(%arg0: i32, %arg1: memref<2x1x8xf32, #tpu.memory_space<vmem>>, %arg2: memref<16x32xf32, #tpu.memory_space<vmem>>, %arg3: memref<1x32x96xbf16, #tpu.memory_space<vmem>>, %arg4: memref<1x1x96xf32, #tpu.memory_space<vmem>>, %arg5: memref<1x32x32xbf16, #tpu.memory_space<vmem>>, %arg6: memref<1x1x32xf32, #tpu.memory_space<vmem>>, %arg7: memref<1x1x32xf32, #tpu.memory_space<vmem>>, %arg8: memref<1x1x32xf32, #tpu.memory_space<vmem>>, %arg9: memref<1x32x64xbf16, #tpu.memory_space<vmem>>, %arg10: memref<1x1x64xf32, #tpu.memory_space<vmem>>, %arg11: memref<1x64x32xbf16, #tpu.memory_space<vmem>>, %arg12: memref<1x1x32xf32, #tpu.memory_space<vmem>>, %arg13: memref<1x1x32xf32, #tpu.memory_space<vmem>>, %arg14: memref<1x1x32xf32, #tpu.memory_space<vmem>>, %arg15: memref<16x32xf32, #tpu.memory_space<vmem>>) attributes {dimension_semantics = [#tpu.dimension_semantics<arbitrary>], iteration_bounds = array<i64: 2>, scalar_prefetch = 0 : i64, scratch_operands = 0 : i64, tpu.core_type = #tpu.core_type<tc>, window_params = [{pipeline_mode = #tpu.pipeline_mode<synchronous>, transform_indices = @transform_0, window_bounds = array<i64: 2, 1, 8>}, {pipeline_mode = #tpu.pipeline_mode<synchronous>, transform_indices = @transform_1, window_bounds = array<i64: 16, 32>}, {transform_indices = @transform_2, window_bounds = array<i64: 1, 32, 96>}, {transform_indices = @transform_3, window_bounds = array<i64: 1, 1, 96>}, {transform_indices = @transform_4, window_bounds = array<i64: 1, 32, 32>}, {transform_indices = @transform_5, window_bounds = array<i64: 1, 1, 32>}, {transform_indices = @transform_6, window_bounds = array<i64: 1, 1, 32>}, {transform_indices = @transform_7, window_bounds = array<i64: 1, 1, 32>}, {transform_indices = @transform_8, window_bounds = array<i64: 1, 32, 64>}, {transform_indices = @transform_9, window_bounds = array<i64: 1, 1, 64>}, {transform_indices = @transform_10, window_bounds = array<i64: 1, 64, 32>}, {transform_indices = @transform_11, window_bounds = array<i64: 1, 1, 32>}, {transform_indices = @transform_12, window_bounds = array<i64: 1, 1, 32>}, {transform_indices = @transform_13, window_bounds = array<i64: 1, 1, 32>}, {pipeline_mode = #tpu.pipeline_mode<synchronous>, transform_indices = @transform_14, window_bounds = array<i64: 16, 32>}]} {
    %c0_i32 = arith.constant 0 : i32
    %0 = arith.cmpi eq, %arg0, %c0_i32 : i32
    %1 = arith.extui %0 : i1 to i32
    %c0_i32_0 = arith.constant 0 : i32
    %2 = arith.cmpi ne, %1, %c0_i32_0 : i32
    scf.if %2 {
      %c0_74 = arith.constant 0 : index
      %c0_75 = arith.constant 0 : index
      %157 = vector.load %arg2[%c0_74, %c0_75] : memref<16x32xf32, #tpu.memory_space<vmem>>, vector<16x32xf32>
      %c0_76 = arith.constant 0 : index
      %c0_77 = arith.constant 0 : index
      %158 = vector.load %arg15[%c0_76, %c0_77] : memref<16x32xf32, #tpu.memory_space<vmem>>, vector<16x32xf32>
      tpu.vector_store %arg15[%c0_76, %c0_77], %157 {strides = array<i32>} : memref<16x32xf32, #tpu.memory_space<vmem>>, vector<16x32xf32>,
    } else {
    }
    %c0 = arith.constant 0 : index
    %c0_1 = arith.constant 0 : index
    %3 = vector.load %arg15[%c0, %c0_1] : memref<16x32xf32, #tpu.memory_space<vmem>>, vector<16x32xf32>
    %c0_2 = arith.constant 0 : index
    %c0_3 = arith.constant 0 : index
    %c0_4 = arith.constant 0 : index
    %4 = vector.load %arg1[%c0_2, %c0_3, %c0_4] : memref<2x1x8xf32, #tpu.memory_space<vmem>>, vector<2x1x8xf32>
    %cst = arith.constant 1.000000e+00 : f32
    %5 = vector.broadcast %cst : f32 to vector<2x1x8xf32>
    %6 = arith.subf %5, %4 : vector<2x1x8xf32>
    %cst_5 = arith.constant -1.000000e+04 : f32
    %7 = vector.broadcast %cst_5 : f32 to vector<2x1x8xf32>
    %8 = arith.mulf %6, %7 : vector<2x1x8xf32>
    %9 = vector.shape_cast %8 : vector<2x1x8xf32> to vector<2x1x8xf32>
    %10 = vector.broadcast %9 : vector<2x1x8xf32> to vector<2x8x8xf32>
    %11 = arith.truncf %3 : vector<16x32xf32> to vector<16x32xbf16>
    %c0_6 = arith.constant 0 : index
    %c0_7 = arith.constant 0 : index
    %c0_8 = arith.constant 0 : index
    %12 = vector.load %arg3[%c0_6, %c0_7, %c0_8] : memref<1x32x96xbf16, #tpu.memory_space<vmem>>, vector<1x32x96xbf16>
    %13 = vector.shape_cast %12 : vector<1x32x96xbf16> to vector<32x96xbf16>
    %cst_9 = arith.constant dense<0.000000e+00> : vector<16x96xf32>
    %14 = tpu.matmul %11, %13, %cst_9 {dimension_numbers = #tpu.dot_dimension_numbers<[1], [0], [0], [1], [0, 0, 1, 1], [], []>} : vector<16x32xbf16>, vector<32x96xbf16>, vector<16x96xf32> -> vector<16x96xf32>
    %c0_10 = arith.constant 0 : index
    %c0_11 = arith.constant 0 : index
    %c0_12 = arith.constant 0 : index
    %15 = vector.load %arg4[%c0_10, %c0_11, %c0_12] : memref<1x1x96xf32, #tpu.memory_space<vmem>>, vector<1x1x96xf32>
    %16 = vector.shape_cast %15 : vector<1x1x96xf32> to vector<1x96xf32>
    %17 = vector.broadcast %16 : vector<1x96xf32> to vector<16x96xf32>
    %18 = arith.addf %14, %17 : vector<16x96xf32>
    %19 = vector.shape_cast %18 : vector<16x96xf32> to vector<2x8x96xf32>
    %c0_13 = arith.constant 0 : index
    %c0_14 = arith.constant 0 : index
    %c0_15 = arith.constant 0 : index
    %20 = vector.load %arg5[%c0_13, %c0_14, %c0_15] : memref<1x32x32xbf16, #tpu.memory_space<vmem>>, vector<1x32x32xbf16>
    %21 = vector.shape_cast %20 : vector<1x32x32xbf16> to vector<32x32xbf16>
    %cst_16 = arith.constant 0.000000e+00 : f32
    %22 = vector.broadcast %cst_16 : f32 to vector<16x32xf32>
    %23 = vector.extract_strided_slice %19 {offsets = [0, 0, 0], sizes = [2, 8, 16], strides = [1, 1, 1]} : vector<2x8x96xf32> to vector<2x8x16xf32>
    %24 = vector.extract_strided_slice %19 {offsets = [0, 0, 32], sizes = [2, 8, 16], strides = [1, 1, 1]} : vector<2x8x96xf32> to vector<2x8x16xf32>
    %25 = vector.extract_strided_slice %19 {offsets = [0, 0, 64], sizes = [2, 8, 16], strides = [1, 1, 1]} : vector<2x8x96xf32> to vector<2x8x16xf32>
    "tpu.trace_start"() <{level = 10 : i32, message = "bqd,bkd->bqk"}> : () -> ()
    %cst_17 = arith.constant dense<0.000000e+00> : vector<2x8x8xf32>
    %26 = tpu.matmul %23, %24, %cst_17 {dimension_numbers = #tpu.dot_dimension_numbers<[2], [2], [1], [1], [0, 0, 0, 1, 1, 1], [0], [0]>} : vector<2x8x16xf32>, vector<2x8x16xf32>, vector<2x8x8xf32> -> vector<2x8x8xf32>
    "tpu.trace_stop"() : () -> ()
    %cst_18 = arith.constant 2.500000e-01 : f32
    %27 = vector.broadcast %cst_18 : f32 to vector<2x8x8xf32>
    %28 = arith.mulf %26, %27 : vector<2x8x8xf32>
    %29 = arith.addf %28, %10 : vector<2x8x8xf32>
    %cst_19 = arith.constant dense<0xFF800000> : vector<2x8xf32>
    %30 = vector.multi_reduction <maximumf>, %29, %cst_19 [2] : vector<2x8x8xf32> to vector<2x8xf32>
    %31 = vector.shape_cast %30 : vector<2x8xf32> to vector<2x8x1xf32>
    %32 = vector.broadcast %31 : vector<2x8x1xf32> to vector<2x8x8xf32>
    %33 = arith.subf %29, %32 : vector<2x8x8xf32>
    %34 = math.exp %33 : vector<2x8x8xf32>
    %cst_20 = arith.constant dense<0.000000e+00> : vector<2x8xf32>
    %35 = vector.multi_reduction <add>, %34, %cst_20 [2] : vector<2x8x8xf32> to vector<2x8xf32>
    %36 = vector.shape_cast %35 : vector<2x8xf32> to vector<2x8x1xf32>
    %37 = tpu.reciprocal %36 {approx = true} : vector<2x8x1xf32> -> vector<2x8x1xf32>
    %38 = vector.broadcast %37 : vector<2x8x1xf32> to vector<2x8x8xf32>
    %39 = arith.mulf %34, %38 : vector<2x8x8xf32>
    "tpu.trace_start"() <{level = 10 : i32, message = "bqk,bkd->bqd"}> : () -> ()
    %cst_21 = arith.constant dense<0.000000e+00> : vector<2x8x16xf32>
    %40 = tpu.matmul %39, %25, %cst_21 {dimension_numbers = #tpu.dot_dimension_numbers<[2], [1], [1], [2], [0, 0, 0, 1, 1, 2], [0], [0]>} : vector<2x8x8xf32>, vector<2x8x16xf32>, vector<2x8x16xf32> -> vector<2x8x16xf32>
    "tpu.trace_stop"() : () -> ()
    %41 = vector.shape_cast %40 : vector<2x8x16xf32> to vector<16x16xf32>
    %42 = arith.truncf %41 : vector<16x16xf32> to vector<16x16xbf16>
    %43 = vector.extract_strided_slice %21 {offsets = [0, 0], sizes = [16, 32], strides = [1, 1]} : vector<32x32xbf16> to vector<16x32xbf16>
    %cst_22 = arith.constant dense<0.000000e+00> : vector<16x32xf32>
    %44 = tpu.matmul %42, %43, %cst_22 {dimension_numbers = #tpu.dot_dimension_numbers<[1], [0], [0], [1], [0, 0, 1, 1], [], []>} : vector<16x16xbf16>, vector<16x32xbf16>, vector<16x32xf32> -> vector<16x32xf32>
    %45 = arith.addf %22, %44 : vector<16x32xf32>
    %46 = vector.extract_strided_slice %19 {offsets = [0, 0, 16], sizes = [2, 8, 16], strides = [1, 1, 1]} : vector<2x8x96xf32> to vector<2x8x16xf32>
    %47 = vector.extract_strided_slice %19 {offsets = [0, 0, 48], sizes = [2, 8, 16], strides = [1, 1, 1]} : vector<2x8x96xf32> to vector<2x8x16xf32>
    %48 = vector.extract_strided_slice %19 {offsets = [0, 0, 80], sizes = [2, 8, 16], strides = [1, 1, 1]} : vector<2x8x96xf32> to vector<2x8x16xf32>
    "tpu.trace_start"() <{level = 10 : i32, message = "bqd,bkd->bqk"}> : () -> ()
    %cst_23 = arith.constant dense<0.000000e+00> : vector<2x8x8xf32>
    %49 = tpu.matmul %46, %47, %cst_23 {dimension_numbers = #tpu.dot_dimension_numbers<[2], [2], [1], [1], [0, 0, 0, 1, 1, 1], [0], [0]>} : vector<2x8x16xf32>, vector<2x8x16xf32>, vector<2x8x8xf32> -> vector<2x8x8xf32>
    "tpu.trace_stop"() : () -> ()
    %cst_24 = arith.constant 2.500000e-01 : f32
    %50 = vector.broadcast %cst_24 : f32 to vector<2x8x8xf32>
    %51 = arith.mulf %49, %50 : vector<2x8x8xf32>
    %52 = arith.addf %51, %10 : vector<2x8x8xf32>
    %cst_25 = arith.constant dense<0xFF800000> : vector<2x8xf32>
    %53 = vector.multi_reduction <maximumf>, %52, %cst_25 [2] : vector<2x8x8xf32> to vector<2x8xf32>
    %54 = vector.shape_cast %53 : vector<2x8xf32> to vector<2x8x1xf32>
    %55 = vector.broadcast %54 : vector<2x8x1xf32> to vector<2x8x8xf32>
    %56 = arith.subf %52, %55 : vector<2x8x8xf32>
    %57 = math.exp %56 : vector<2x8x8xf32>
    %cst_26 = arith.constant dense<0.000000e+00> : vector<2x8xf32>
    %58 = vector.multi_reduction <add>, %57, %cst_26 [2] : vector<2x8x8xf32> to vector<2x8xf32>
    %59 = vector.shape_cast %58 : vector<2x8xf32> to vector<2x8x1xf32>
    %60 = tpu.reciprocal %59 {approx = true} : vector<2x8x1xf32> -> vector<2x8x1xf32>
    %61 = vector.broadcast %60 : vector<2x8x1xf32> to vector<2x8x8xf32>
    %62 = arith.mulf %57, %61 : vector<2x8x8xf32>
    "tpu.trace_start"() <{level = 10 : i32, message = "bqk,bkd->bqd"}> : () -> ()
    %cst_27 = arith.constant dense<0.000000e+00> : vector<2x8x16xf32>
    %63 = tpu.matmul %62, %48, %cst_27 {dimension_numbers = #tpu.dot_dimension_numbers<[2], [1], [1], [2], [0, 0, 0, 1, 1, 2], [0], [0]>} : vector<2x8x8xf32>, vector<2x8x16xf32>, vector<2x8x16xf32> -> vector<2x8x16xf32>
    "tpu.trace_stop"() : () -> ()
    %64 = vector.shape_cast %63 : vector<2x8x16xf32> to vector<16x16xf32>
    %65 = arith.truncf %64 : vector<16x16xf32> to vector<16x16xbf16>
    %66 = vector.extract_strided_slice %21 {offsets = [16, 0], sizes = [16, 32], strides = [1, 1]} : vector<32x32xbf16> to vector<16x32xbf16>
    %cst_28 = arith.constant dense<0.000000e+00> : vector<16x32xf32>
    %67 = tpu.matmul %65, %66, %cst_28 {dimension_numbers = #tpu.dot_dimension_numbers<[1], [0], [0], [1], [0, 0, 1, 1], [], []>} : vector<16x16xbf16>, vector<16x32xbf16>, vector<16x32xf32> -> vector<16x32xf32>
    %68 = arith.addf %45, %67 : vector<16x32xf32>
    %c0_29 = arith.constant 0 : index
    %c0_30 = arith.constant 0 : index
    %c0_31 = arith.constant 0 : index
    %69 = vector.load %arg6[%c0_29, %c0_30, %c0_31] : memref<1x1x32xf32, #tpu.memory_space<vmem>>, vector<1x1x32xf32>
    %70 = vector.shape_cast %69 : vector<1x1x32xf32> to vector<1x32xf32>
    %71 = vector.broadcast %70 : vector<1x32xf32> to vector<16x32xf32>
    %72 = arith.addf %68, %71 : vector<16x32xf32>
    %73 = arith.addf %3, %72 : vector<16x32xf32>
    %c0_32 = arith.constant 0 : index
    %c0_33 = arith.constant 0 : index
    %c0_34 = arith.constant 0 : index
    %74 = vector.load %arg7[%c0_32, %c0_33, %c0_34] : memref<1x1x32xf32, #tpu.memory_space<vmem>>, vector<1x1x32xf32>
    %75 = vector.shape_cast %74 : vector<1x1x32xf32> to vector<1x32xf32>
    %c0_35 = arith.constant 0 : index
    %c0_36 = arith.constant 0 : index
    %c0_37 = arith.constant 0 : index
    %76 = vector.load %arg8[%c0_35, %c0_36, %c0_37] : memref<1x1x32xf32, #tpu.memory_space<vmem>>, vector<1x1x32xf32>
    %77 = vector.shape_cast %76 : vector<1x1x32xf32> to vector<1x32xf32>
    %cst_38 = arith.constant dense<0.000000e+00> : vector<16xf32>
    %78 = vector.multi_reduction <add>, %73, %cst_38 [1] : vector<16x32xf32> to vector<16xf32>
    %79 = vector.shape_cast %78 : vector<16xf32> to vector<16x1xf32>
    %cst_39 = arith.constant 3.200000e+01 : f32
    %80 = vector.broadcast %cst_39 : f32 to vector<16x1xf32>
    %81 = arith.divf %79, %80 : vector<16x1xf32>
    %82 = vector.broadcast %81 : vector<16x1xf32> to vector<16x32xf32>
    %83 = arith.subf %73, %82 : vector<16x32xf32>
    %84 = arith.mulf %83, %83 : vector<16x32xf32>
    %cst_40 = arith.constant dense<0.000000e+00> : vector<16xf32>
    %85 = vector.multi_reduction <add>, %84, %cst_40 [1] : vector<16x32xf32> to vector<16xf32>
    %86 = vector.shape_cast %85 : vector<16xf32> to vector<16x1xf32>
    %cst_41 = arith.constant 3.200000e+01 : f32
    %87 = vector.broadcast %cst_41 : f32 to vector<16x1xf32>
    %88 = arith.divf %86, %87 : vector<16x1xf32>
    %89 = vector.broadcast %81 : vector<16x1xf32> to vector<16x32xf32>
    %90 = arith.subf %73, %89 : vector<16x32xf32>
    %cst_42 = arith.constant 9.99999996E-13 : f32
    %91 = vector.broadcast %cst_42 : f32 to vector<16x1xf32>
    %92 = arith.addf %88, %91 : vector<16x1xf32>
    %93 = math.rsqrt %92 : vector<16x1xf32>
    %94 = vector.broadcast %93 : vector<16x1xf32> to vector<16x32xf32>
    %95 = arith.mulf %90, %94 : vector<16x32xf32>
    %96 = vector.broadcast %75 : vector<1x32xf32> to vector<16x32xf32>
    %97 = arith.mulf %95, %96 : vector<16x32xf32>
    %98 = vector.broadcast %77 : vector<1x32xf32> to vector<16x32xf32>
    %99 = arith.addf %97, %98 : vector<16x32xf32>
    %100 = arith.truncf %99 : vector<16x32xf32> to vector<16x32xbf16>
    %c0_43 = arith.constant 0 : index
    %c0_44 = arith.constant 0 : index
    %c0_45 = arith.constant 0 : index
    %101 = vector.load %arg9[%c0_43, %c0_44, %c0_45] : memref<1x32x64xbf16, #tpu.memory_space<vmem>>, vector<1x32x64xbf16>
    %102 = vector.shape_cast %101 : vector<1x32x64xbf16> to vector<32x64xbf16>
    %cst_46 = arith.constant dense<0.000000e+00> : vector<16x64xf32>
    %103 = tpu.matmul %100, %102, %cst_46 {dimension_numbers = #tpu.dot_dimension_numbers<[1], [0], [0], [1], [0, 0, 1, 1], [], []>} : vector<16x32xbf16>, vector<32x64xbf16>, vector<16x64xf32> -> vector<16x64xf32>
    %c0_47 = arith.constant 0 : index
    %c0_48 = arith.constant 0 : index
    %c0_49 = arith.constant 0 : index
    %104 = vector.load %arg10[%c0_47, %c0_48, %c0_49] : memref<1x1x64xf32, #tpu.memory_space<vmem>>, vector<1x1x64xf32>
    %105 = vector.shape_cast %104 : vector<1x1x64xf32> to vector<1x64xf32>
    %106 = vector.broadcast %105 : vector<1x64xf32> to vector<16x64xf32>
    %107 = arith.addf %103, %106 : vector<16x64xf32>
    %cst_50 = arith.constant 5.000000e-01 : f32
    %108 = vector.broadcast %cst_50 : f32 to vector<16x64xf32>
    %109 = arith.mulf %108, %107 : vector<16x64xf32>
    %cst_51 = arith.constant 4.471500e-02 : f32
    %110 = vector.broadcast %cst_51 : f32 to vector<16x64xf32>
    %111 = arith.mulf %110, %107 : vector<16x64xf32>
    %112 = arith.mulf %111, %107 : vector<16x64xf32>
    %113 = arith.mulf %112, %107 : vector<16x64xf32>
    %114 = arith.addf %107, %113 : vector<16x64xf32>
    %cst_52 = arith.constant 0.797884583 : f32
    %115 = vector.broadcast %cst_52 : f32 to vector<16x64xf32>
    %116 = arith.mulf %115, %114 : vector<16x64xf32>
    %117 = math.tanh %116 : vector<16x64xf32>
    %cst_53 = arith.constant 1.000000e+00 : f32
    %118 = vector.broadcast %cst_53 : f32 to vector<16x64xf32>
    %119 = arith.addf %118, %117 : vector<16x64xf32>
    %120 = arith.mulf %109, %119 : vector<16x64xf32>
    %121 = arith.truncf %120 : vector<16x64xf32> to vector<16x64xbf16>
    %c0_54 = arith.constant 0 : index
    %c0_55 = arith.constant 0 : index
    %c0_56 = arith.constant 0 : index
    %122 = vector.load %arg11[%c0_54, %c0_55, %c0_56] : memref<1x64x32xbf16, #tpu.memory_space<vmem>>, vector<1x64x32xbf16>
    %123 = vector.shape_cast %122 : vector<1x64x32xbf16> to vector<64x32xbf16>
    %cst_57 = arith.constant dense<0.000000e+00> : vector<16x32xf32>
    %124 = tpu.matmul %121, %123, %cst_57 {dimension_numbers = #tpu.dot_dimension_numbers<[1], [0], [0], [1], [0, 0, 1, 1], [], []>} : vector<16x64xbf16>, vector<64x32xbf16>, vector<16x32xf32> -> vector<16x32xf32>
    %c0_58 = arith.constant 0 : index
    %c0_59 = arith.constant 0 : index
    %c0_60 = arith.constant 0 : index
    %125 = vector.load %arg12[%c0_58, %c0_59, %c0_60] : memref<1x1x32xf32, #tpu.memory_space<vmem>>, vector<1x1x32xf32>
    %126 = vector.shape_cast %125 : vector<1x1x32xf32> to vector<1x32xf32>
    %127 = vector.broadcast %126 : vector<1x32xf32> to vector<16x32xf32>
    %128 = arith.addf %124, %127 : vector<16x32xf32>
    %129 = arith.addf %99, %128 : vector<16x32xf32>
    %c0_61 = arith.constant 0 : index
    %c0_62 = arith.constant 0 : index
    %c0_63 = arith.constant 0 : index
    %130 = vector.load %arg13[%c0_61, %c0_62, %c0_63] : memref<1x1x32xf32, #tpu.memory_space<vmem>>, vector<1x1x32xf32>
    %131 = vector.shape_cast %130 : vector<1x1x32xf32> to vector<1x32xf32>
    %c0_64 = arith.constant 0 : index
    %c0_65 = arith.constant 0 : index
    %c0_66 = arith.constant 0 : index
    %132 = vector.load %arg14[%c0_64, %c0_65, %c0_66] : memref<1x1x32xf32, #tpu.memory_space<vmem>>, vector<1x1x32xf32>
    %133 = vector.shape_cast %132 : vector<1x1x32xf32> to vector<1x32xf32>
    %cst_67 = arith.constant dense<0.000000e+00> : vector<16xf32>
    %134 = vector.multi_reduction <add>, %129, %cst_67 [1] : vector<16x32xf32> to vector<16xf32>
    %135 = vector.shape_cast %134 : vector<16xf32> to vector<16x1xf32>
    %cst_68 = arith.constant 3.200000e+01 : f32
    %136 = vector.broadcast %cst_68 : f32 to vector<16x1xf32>
    %137 = arith.divf %135, %136 : vector<16x1xf32>
    %138 = vector.broadcast %137 : vector<16x1xf32> to vector<16x32xf32>
    %139 = arith.subf %129, %138 : vector<16x32xf32>
    %140 = arith.mulf %139, %139 : vector<16x32xf32>
    %cst_69 = arith.constant dense<0.000000e+00> : vector<16xf32>
    %141 = vector.multi_reduction <add>, %140, %cst_69 [1] : vector<16x32xf32> to vector<16xf32>
    %142 = vector.shape_cast %141 : vector<16xf32> to vector<16x1xf32>
    %cst_70 = arith.constant 3.200000e+01 : f32
    %143 = vector.broadcast %cst_70 : f32 to vector<16x1xf32>
    %144 = arith.divf %142, %143 : vector<16x1xf32>
    %145 = vector.broadcast %137 : vector<16x1xf32> to vector<16x32xf32>
    %146 = arith.subf %129, %145 : vector<16x32xf32>
    %cst_71 = arith.constant 9.99999996E-13 : f32
    %147 = vector.broadcast %cst_71 : f32 to vector<16x1xf32>
    %148 = arith.addf %144, %147 : vector<16x1xf32>
    %149 = math.rsqrt %148 : vector<16x1xf32>
    %150 = vector.broadcast %149 : vector<16x1xf32> to vector<16x32xf32>
    %151 = arith.mulf %146, %150 : vector<16x32xf32>
    %152 = vector.broadcast %131 : vector<1x32xf32> to vector<16x32xf32>
    %153 = arith.mulf %151, %152 : vector<16x32xf32>
    %154 = vector.broadcast %133 : vector<1x32xf32> to vector<16x32xf32>
    %155 = arith.addf %153, %154 : vector<16x32xf32>
    %c0_72 = arith.constant 0 : index
    %c0_73 = arith.constant 0 : index
    %156 = vector.load %arg15[%c0_72, %c0_73] : memref<16x32xf32, #tpu.memory_space<vmem>>, vector<16x32xf32>
    tpu.vector_store %arg15[%c0_72, %c0_73], %155 {strides = array<i32>} : memref<16x32xf32, #tpu.memory_space<vmem>>, vector<16x32xf32>,
    return
  }
  func.func @transform_0(%arg0: i32) -> (i32, i32, i32) {
    %c0_i32 = arith.constant 0 : i32
    %c0_i32_0 = arith.constant 0 : i32
    %c0_i32_1 = arith.constant 0 : i32
    %c0_i32_2 = arith.constant 0 : i32
    return %c0_i32, %c0_i32_0, %c0_i32_1 : i32, i32, i32
  }
  func.func @transform_1(%arg0: i32) -> (i32, i32) {
    %c0_i32 = arith.constant 0 : i32
    %c0_i32_0 = arith.constant 0 : i32
    %c0_i32_1 = arith.constant 0 : i32
    return %c0_i32, %c0_i32_0 : i32, i32
  }
  func.func @transform_2(%arg0: i32) -> (i32, i32, i32) {
    %c0_i32 = arith.constant 0 : i32
    %c0_i32_0 = arith.constant 0 : i32
    %c0_i32_1 = arith.constant 0 : i32
    return %arg0, %c0_i32, %c0_i32_0 : i32, i32, i32
  }
  func.func @transform_3(%arg0: i32) -> (i32, i32, i32) {
    %c0_i32 = arith.constant 0 : i32
    %c0_i32_0 = arith.constant 0 : i32
    %c0_i32_1 = arith.constant 0 : i32
    return %arg0, %c0_i32, %c0_i32_0 : i32, i32, i32
  }
  func.func @transform_4(%arg0: i32) -> (i32, i32, i32) {
    %c0_i32 = arith.constant 0 : i32
    %c0_i32_0 = arith.constant 0 : i32
    %c0_i32_1 = arith.constant 0 : i32
    return %arg0, %c0_i32, %c0_i32_0 : i32, i32, i32
  }
  func.func @transform_5(%arg0: i32) -> (i32, i32, i32) {
    %c0_i32 = arith.constant 0 : i32
    %c0_i32_0 = arith.constant 0 : i32
    %c0_i32_1 = arith.constant 0 : i32
    return %arg0, %c0_i32, %c0_i32_0 : i32, i32, i32
  }
  func.func @transform_6(%arg0: i32) -> (i32, i32, i32) {
    %c0_i32 = arith.constant 0 : i32
    %c0_i32_0 = arith.constant 0 : i32
    %c0_i32_1 = arith.constant 0 : i32
    return %arg0, %c0_i32, %c0_i32_0 : i32, i32, i32
  }
  func.func @transform_7(%arg0: i32) -> (i32, i32, i32) {
    %c0_i32 = arith.constant 0 : i32
    %c0_i32_0 = arith.constant 0 : i32
    %c0_i32_1 = arith.constant 0 : i32
    return %arg0, %c0_i32, %c0_i32_0 : i32, i32, i32
  }
  func.func @transform_8(%arg0: i32) -> (i32, i32, i32) {
    %c0_i32 = arith.constant 0 : i32
    %c0_i32_0 = arith.constant 0 : i32
    %c0_i32_1 = arith.constant 0 : i32
    return %arg0, %c0_i32, %c0_i32_0 : i32, i32, i32
  }
  func.func @transform_9(%arg0: i32) -> (i32, i32, i32) {
    %c0_i32 = arith.constant 0 : i32
    %c0_i32_0 = arith.constant 0 : i32
    %c0_i32_1 = arith.constant 0 : i32
    return %arg0, %c0_i32, %c0_i32_0 : i32, i32, i32
  }
  func.func @transform_10(%arg0: i32) -> (i32, i32, i32) {
    %c0_i32 = arith.constant 0 : i32
    %c0_i32_0 = arith.constant 0 : i32
    %c0_i32_1 = arith.constant 0 : i32
    return %arg0, %c0_i32, %c0_i32_0 : i32, i32, i32
  }
  func.func @transform_11(%arg0: i32) -> (i32, i32, i32) {
    %c0_i32 = arith.constant 0 : i32
    %c0_i32_0 = arith.constant 0 : i32
    %c0_i32_1 = arith.constant 0 : i32
    return %arg0, %c0_i32, %c0_i32_0 : i32, i32, i32
  }
  func.func @transform_12(%arg0: i32) -> (i32, i32, i32) {
    %c0_i32 = arith.constant 0 : i32
    %c0_i32_0 = arith.constant 0 : i32
    %c0_i32_1 = arith.constant 0 : i32
    return %arg0, %c0_i32, %c0_i32_0 : i32, i32, i32
  }
  func.func @transform_13(%arg0: i32) -> (i32, i32, i32) {
    %c0_i32 = arith.constant 0 : i32
    %c0_i32_0 = arith.constant 0 : i32
    %c0_i32_1 = arith.constant 0 : i32
    return %arg0, %c0_i32, %c0_i32_0 : i32, i32, i32
  }
  func.func @transform_14(%arg0: i32) -> (i32, i32) {
    %c0_i32 = arith.constant 0 : i32
    %c0_i32_0 = arith.constant 0 : i32
    %c0_i32_1 = arith.constant 0 : i32
    return %c0_i32, %c0_i32_0 : i32, i32
  }
}

module attributes {stable_mosaic.version = 11 : i64} {
  func.func @crf_viterbi_kernel(%arg0: i32, %arg1: memref<2x8xf32, #tpu.memory_space<vmem>>, %arg2: memref<16x32xf32, #tpu.memory_space<vmem>>, %arg3: memref<32x6xf32, #tpu.memory_space<vmem>>, %arg4: memref<1x6xf32, #tpu.memory_space<vmem>>, %arg5: memref<1x6xf32, #tpu.memory_space<vmem>>, %arg6: memref<1x6xf32, #tpu.memory_space<vmem>>, %arg7: memref<6x6xf32, #tpu.memory_space<vmem>>, %arg8: memref<2x8xi32, #tpu.memory_space<vmem>>) attributes {dimension_semantics = [#tpu.dimension_semantics<arbitrary>], iteration_bounds = array<i64: 1>, scalar_prefetch = 0 : i64, scratch_operands = 0 : i64, tpu.core_type = #tpu.core_type<tc>, window_params = [{pipeline_mode = #tpu.pipeline_mode<synchronous>, transform_indices = @transform_0, window_bounds = array<i64: 2, 8>}, {pipeline_mode = #tpu.pipeline_mode<synchronous>, transform_indices = @transform_1, window_bounds = array<i64: 16, 32>}, {pipeline_mode = #tpu.pipeline_mode<synchronous>, transform_indices = @transform_2, window_bounds = array<i64: 32, 6>}, {pipeline_mode = #tpu.pipeline_mode<synchronous>, transform_indices = @transform_3, window_bounds = array<i64: 1, 6>}, {pipeline_mode = #tpu.pipeline_mode<synchronous>, transform_indices = @transform_4, window_bounds = array<i64: 1, 6>}, {pipeline_mode = #tpu.pipeline_mode<synchronous>, transform_indices = @transform_5, window_bounds = array<i64: 1, 6>}, {pipeline_mode = #tpu.pipeline_mode<synchronous>, transform_indices = @transform_6, window_bounds = array<i64: 6, 6>}, {pipeline_mode = #tpu.pipeline_mode<synchronous>, transform_indices = @transform_7, window_bounds = array<i64: 2, 8>}]} {
    %c0 = arith.constant 0 : index
    %c0_0 = arith.constant 0 : index
    %0 = vector.load %arg2[%c0, %c0_0] : memref<16x32xf32, #tpu.memory_space<vmem>>, vector<16x32xf32>
    %c0_1 = arith.constant 0 : index
    %c0_2 = arith.constant 0 : index
    %1 = vector.load %arg3[%c0_1, %c0_2] : memref<32x6xf32, #tpu.memory_space<vmem>>, vector<32x6xf32>
    %cst = arith.constant dense<0.000000e+00> : vector<16x6xf32>
    %2 = tpu.matmul %0, %1, %cst {dimension_numbers = #tpu.dot_dimension_numbers<[1], [0], [0], [1], [0, 0, 1, 1], [], []>} : vector<16x32xf32>, vector<32x6xf32>, vector<16x6xf32> -> vector<16x6xf32>
    %c0_3 = arith.constant 0 : index
    %c0_4 = arith.constant 0 : index
    %3 = vector.load %arg4[%c0_3, %c0_4] : memref<1x6xf32, #tpu.memory_space<vmem>>, vector<1x6xf32>
    %4 = vector.broadcast %3 : vector<1x6xf32> to vector<16x6xf32>
    %5 = arith.addf %2, %4 : vector<16x6xf32>
    %6 = vector.shape_cast %5 : vector<16x6xf32> to vector<8x2x6xf32>
    %c0_5 = arith.constant 0 : index
    %c0_6 = arith.constant 0 : index
    %7 = vector.load %arg7[%c0_5, %c0_6] : memref<6x6xf32, #tpu.memory_space<vmem>>, vector<6x6xf32>
    %c0_7 = arith.constant 0 : index
    %c0_8 = arith.constant 0 : index
    %8 = vector.load %arg1[%c0_7, %c0_8] : memref<2x8xf32, #tpu.memory_space<vmem>>, vector<2x8xf32>
    %9 = tpu.iota {dimensions = array<i32: 1>} : vector<2x6xi32>
    %10 = tpu.iota {dimensions = array<i32: 1>} : vector<2x8xi32>
    %c0_9 = arith.constant 0 : index
    %c0_10 = arith.constant 0 : index
    %11 = vector.load %arg5[%c0_9, %c0_10] : memref<1x6xf32, #tpu.memory_space<vmem>>, vector<1x6xf32>
    %12 = vector.extract_strided_slice %6 {offsets = [0, 0, 0], sizes = [1, 2, 6], strides = [1, 1, 1]} : vector<8x2x6xf32> to vector<1x2x6xf32>
    %13 = vector.shape_cast %12 : vector<1x2x6xf32> to vector<2x6xf32>
    %14 = vector.broadcast %11 : vector<1x6xf32> to vector<2x6xf32>
    %15 = arith.addf %14, %13 : vector<2x6xf32>
    %cst_11 = arith.constant -1.000000e+30 : f32
    %16 = vector.broadcast %cst_11 : f32 to vector<2x6xf32>
    %c0_i32 = arith.constant 0 : i32
    %17 = vector.broadcast %c0_i32 : i32 to vector<2x6xi32>
    %18 = vector.extract_strided_slice %15 {offsets = [0, 0], sizes = [2, 1], strides = [1, 1]} : vector<2x6xf32> to vector<2x1xf32>
    %19 = vector.extract_strided_slice %7 {offsets = [0, 0], sizes = [1, 6], strides = [1, 1]} : vector<6x6xf32> to vector<1x6xf32>
    %20 = vector.broadcast %18 : vector<2x1xf32> to vector<2x6xf32>
    %21 = vector.broadcast %19 : vector<1x6xf32> to vector<2x6xf32>
    %22 = arith.addf %20, %21 : vector<2x6xf32>
    %23 = arith.cmpf ogt, %22, %16 : vector<2x6xf32>
    %24 = arith.select %23, %22, %16 : vector<2x6xi1>, vector<2x6xf32>
    %c0_i32_12 = arith.constant 0 : i32
    %25 = vector.broadcast %c0_i32_12 : i32 to vector<2x6xi32>
    %26 = arith.select %23, %25, %17 : vector<2x6xi1>, vector<2x6xi32>
    %27 = vector.extract_strided_slice %15 {offsets = [0, 1], sizes = [2, 1], strides = [1, 1]} : vector<2x6xf32> to vector<2x1xf32>
    %28 = vector.extract_strided_slice %7 {offsets = [1, 0], sizes = [1, 6], strides = [1, 1]} : vector<6x6xf32> to vector<1x6xf32>
    %29 = vector.broadcast %27 : vector<2x1xf32> to vector<2x6xf32>
    %30 = vector.broadcast %28 : vector<1x6xf32> to vector<2x6xf32>
    %31 = arith.addf %29, %30 : vector<2x6xf32>
    %32 = arith.cmpf ogt, %31, %24 : vector<2x6xf32>
    %33 = arith.select %32, %31, %24 : vector<2x6xi1>, vector<2x6xf32>
    %c1_i32 = arith.constant 1 : i32
    %34 = vector.broadcast %c1_i32 : i32 to vector<2x6xi32>
    %35 = arith.select %32, %34, %26 : vector<2x6xi1>, vector<2x6xi32>
    %36 = vector.extract_strided_slice %15 {offsets = [0, 2], sizes = [2, 1], strides = [1, 1]} : vector<2x6xf32> to vector<2x1xf32>
    %37 = vector.extract_strided_slice %7 {offsets = [2, 0], sizes = [1, 6], strides = [1, 1]} : vector<6x6xf32> to vector<1x6xf32>
    %38 = vector.broadcast %36 : vector<2x1xf32> to vector<2x6xf32>
    %39 = vector.broadcast %37 : vector<1x6xf32> to vector<2x6xf32>
    %40 = arith.addf %38, %39 : vector<2x6xf32>
    %41 = arith.cmpf ogt, %40, %33 : vector<2x6xf32>
    %42 = arith.select %41, %40, %33 : vector<2x6xi1>, vector<2x6xf32>
    %c2_i32 = arith.constant 2 : i32
    %43 = vector.broadcast %c2_i32 : i32 to vector<2x6xi32>
    %44 = arith.select %41, %43, %35 : vector<2x6xi1>, vector<2x6xi32>
    %45 = vector.extract_strided_slice %15 {offsets = [0, 3], sizes = [2, 1], strides = [1, 1]} : vector<2x6xf32> to vector<2x1xf32>
    %46 = vector.extract_strided_slice %7 {offsets = [3, 0], sizes = [1, 6], strides = [1, 1]} : vector<6x6xf32> to vector<1x6xf32>
    %47 = vector.broadcast %45 : vector<2x1xf32> to vector<2x6xf32>
    %48 = vector.broadcast %46 : vector<1x6xf32> to vector<2x6xf32>
    %49 = arith.addf %47, %48 : vector<2x6xf32>
    %50 = arith.cmpf ogt, %49, %42 : vector<2x6xf32>
    %51 = arith.select %50, %49, %42 : vector<2x6xi1>, vector<2x6xf32>
    %c3_i32 = arith.constant 3 : i32
    %52 = vector.broadcast %c3_i32 : i32 to vector<2x6xi32>
    %53 = arith.select %50, %52, %44 : vector<2x6xi1>, vector<2x6xi32>
    %54 = vector.extract_strided_slice %15 {offsets = [0, 4], sizes = [2, 1], strides = [1, 1]} : vector<2x6xf32> to vector<2x1xf32>
    %55 = vector.extract_strided_slice %7 {offsets = [4, 0], sizes = [1, 6], strides = [1, 1]} : vector<6x6xf32> to vector<1x6xf32>
    %56 = vector.broadcast %54 : vector<2x1xf32> to vector<2x6xf32>
    %57 = vector.broadcast %55 : vector<1x6xf32> to vector<2x6xf32>
    %58 = arith.addf %56, %57 : vector<2x6xf32>
    %59 = arith.cmpf ogt, %58, %51 : vector<2x6xf32>
    %60 = arith.select %59, %58, %51 : vector<2x6xi1>, vector<2x6xf32>
    %c4_i32 = arith.constant 4 : i32
    %61 = vector.broadcast %c4_i32 : i32 to vector<2x6xi32>
    %62 = arith.select %59, %61, %53 : vector<2x6xi1>, vector<2x6xi32>
    %63 = vector.extract_strided_slice %15 {offsets = [0, 5], sizes = [2, 1], strides = [1, 1]} : vector<2x6xf32> to vector<2x1xf32>
    %64 = vector.extract_strided_slice %7 {offsets = [5, 0], sizes = [1, 6], strides = [1, 1]} : vector<6x6xf32> to vector<1x6xf32>
    %65 = vector.broadcast %63 : vector<2x1xf32> to vector<2x6xf32>
    %66 = vector.broadcast %64 : vector<1x6xf32> to vector<2x6xf32>
    %67 = arith.addf %65, %66 : vector<2x6xf32>
    %68 = arith.cmpf ogt, %67, %60 : vector<2x6xf32>
    %69 = arith.select %68, %67, %60 : vector<2x6xi1>, vector<2x6xf32>
    %c5_i32 = arith.constant 5 : i32
    %70 = vector.broadcast %c5_i32 : i32 to vector<2x6xi32>
    %71 = arith.select %68, %70, %62 : vector<2x6xi1>, vector<2x6xi32>
    %72 = vector.extract_strided_slice %8 {offsets = [0, 1], sizes = [2, 1], strides = [1, 1]} : vector<2x8xf32> to vector<2x1xf32>
    %cst_13 = arith.constant 5.000000e-01 : f32
    %73 = vector.broadcast %cst_13 : f32 to vector<2x1xf32>
    %74 = arith.cmpf ogt, %72, %73 : vector<2x1xf32>
    %75 = vector.shape_cast %74 : vector<2x1xi1> to vector<2x1xi1>
    %76 = vector.broadcast %75 : vector<2x1xi1> to vector<2x6xi1>
    %77 = arith.select %76, %71, %9 : vector<2x6xi1>, vector<2x6xi32>
    %78 = vector.extract_strided_slice %6 {offsets = [1, 0, 0], sizes = [1, 2, 6], strides = [1, 1, 1]} : vector<8x2x6xf32> to vector<1x2x6xf32>
    %79 = vector.shape_cast %78 : vector<1x2x6xf32> to vector<2x6xf32>
    %80 = arith.addf %69, %79 : vector<2x6xf32>
    %81 = vector.shape_cast %74 : vector<2x1xi1> to vector<2x1xi1>
    %82 = vector.broadcast %81 : vector<2x1xi1> to vector<2x6xi1>
    %83 = arith.select %82, %80, %15 : vector<2x6xi1>, vector<2x6xf32>
    %cst_14 = arith.constant -1.000000e+30 : f32
    %84 = vector.broadcast %cst_14 : f32 to vector<2x6xf32>
    %c0_i32_15 = arith.constant 0 : i32
    %85 = vector.broadcast %c0_i32_15 : i32 to vector<2x6xi32>
    %86 = vector.extract_strided_slice %83 {offsets = [0, 0], sizes = [2, 1], strides = [1, 1]} : vector<2x6xf32> to vector<2x1xf32>
    %87 = vector.extract_strided_slice %7 {offsets = [0, 0], sizes = [1, 6], strides = [1, 1]} : vector<6x6xf32> to vector<1x6xf32>
    %88 = vector.broadcast %86 : vector<2x1xf32> to vector<2x6xf32>
    %89 = vector.broadcast %87 : vector<1x6xf32> to vector<2x6xf32>
    %90 = arith.addf %88, %89 : vector<2x6xf32>
    %91 = arith.cmpf ogt, %90, %84 : vector<2x6xf32>
    %92 = arith.select %91, %90, %84 : vector<2x6xi1>, vector<2x6xf32>
    %c0_i32_16 = arith.constant 0 : i32
    %93 = vector.broadcast %c0_i32_16 : i32 to vector<2x6xi32>
    %94 = arith.select %91, %93, %85 : vector<2x6xi1>, vector<2x6xi32>
    %95 = vector.extract_strided_slice %83 {offsets = [0, 1], sizes = [2, 1], strides = [1, 1]} : vector<2x6xf32> to vector<2x1xf32>
    %96 = vector.extract_strided_slice %7 {offsets = [1, 0], sizes = [1, 6], strides = [1, 1]} : vector<6x6xf32> to vector<1x6xf32>
    %97 = vector.broadcast %95 : vector<2x1xf32> to vector<2x6xf32>
    %98 = vector.broadcast %96 : vector<1x6xf32> to vector<2x6xf32>
    %99 = arith.addf %97, %98 : vector<2x6xf32>
    %100 = arith.cmpf ogt, %99, %92 : vector<2x6xf32>
    %101 = arith.select %100, %99, %92 : vector<2x6xi1>, vector<2x6xf32>
    %c1_i32_17 = arith.constant 1 : i32
    %102 = vector.broadcast %c1_i32_17 : i32 to vector<2x6xi32>
    %103 = arith.select %100, %102, %94 : vector<2x6xi1>, vector<2x6xi32>
    %104 = vector.extract_strided_slice %83 {offsets = [0, 2], sizes = [2, 1], strides = [1, 1]} : vector<2x6xf32> to vector<2x1xf32>
    %105 = vector.extract_strided_slice %7 {offsets = [2, 0], sizes = [1, 6], strides = [1, 1]} : vector<6x6xf32> to vector<1x6xf32>
    %106 = vector.broadcast %104 : vector<2x1xf32> to vector<2x6xf32>
    %107 = vector.broadcast %105 : vector<1x6xf32> to vector<2x6xf32>
    %108 = arith.addf %106, %107 : vector<2x6xf32>
    %109 = arith.cmpf ogt, %108, %101 : vector<2x6xf32>
    %110 = arith.select %109, %108, %101 : vector<2x6xi1>, vector<2x6xf32>
    %c2_i32_18 = arith.constant 2 : i32
    %111 = vector.broadcast %c2_i32_18 : i32 to vector<2x6xi32>
    %112 = arith.select %109, %111, %103 : vector<2x6xi1>, vector<2x6xi32>
    %113 = vector.extract_strided_slice %83 {offsets = [0, 3], sizes = [2, 1], strides = [1, 1]} : vector<2x6xf32> to vector<2x1xf32>
    %114 = vector.extract_strided_slice %7 {offsets = [3, 0], sizes = [1, 6], strides = [1, 1]} : vector<6x6xf32> to vector<1x6xf32>
    %115 = vector.broadcast %113 : vector<2x1xf32> to vector<2x6xf32>
    %116 = vector.broadcast %114 : vector<1x6xf32> to vector<2x6xf32>
    %117 = arith.addf %115, %116 : vector<2x6xf32>
    %118 = arith.cmpf ogt, %117, %110 : vector<2x6xf32>
    %119 = arith.select %118, %117, %110 : vector<2x6xi1>, vector<2x6xf32>
    %c3_i32_19 = arith.constant 3 : i32
    %120 = vector.broadcast %c3_i32_19 : i32 to vector<2x6xi32>
    %121 = arith.select %118, %120, %112 : vector<2x6xi1>, vector<2x6xi32>
    %122 = vector.extract_strided_slice %83 {offsets = [0, 4], sizes = [2, 1], strides = [1, 1]} : vector<2x6xf32> to vector<2x1xf32>
    %123 = vector.extract_strided_slice %7 {offsets = [4, 0], sizes = [1, 6], strides = [1, 1]} : vector<6x6xf32> to vector<1x6xf32>
    %124 = vector.broadcast %122 : vector<2x1xf32> to vector<2x6xf32>
    %125 = vector.broadcast %123 : vector<1x6xf32> to vector<2x6xf32>
    %126 = arith.addf %124, %125 : vector<2x6xf32>
    %127 = arith.cmpf ogt, %126, %119 : vector<2x6xf32>
    %128 = arith.select %127, %126, %119 : vector<2x6xi1>, vector<2x6xf32>
    %c4_i32_20 = arith.constant 4 : i32
    %129 = vector.broadcast %c4_i32_20 : i32 to vector<2x6xi32>
    %130 = arith.select %127, %129, %121 : vector<2x6xi1>, vector<2x6xi32>
    %131 = vector.extract_strided_slice %83 {offsets = [0, 5], sizes = [2, 1], strides = [1, 1]} : vector<2x6xf32> to vector<2x1xf32>
    %132 = vector.extract_strided_slice %7 {offsets = [5, 0], sizes = [1, 6], strides = [1, 1]} : vector<6x6xf32> to vector<1x6xf32>
    %133 = vector.broadcast %131 : vector<2x1xf32> to vector<2x6xf32>
    %134 = vector.broadcast %132 : vector<1x6xf32> to vector<2x6xf32>
    %135 = arith.addf %133, %134 : vector<2x6xf32>
    %136 = arith.cmpf ogt, %135, %128 : vector<2x6xf32>
    %137 = arith.select %136, %135, %128 : vector<2x6xi1>, vector<2x6xf32>
    %c5_i32_21 = arith.constant 5 : i32
    %138 = vector.broadcast %c5_i32_21 : i32 to vector<2x6xi32>
    %139 = arith.select %136, %138, %130 : vector<2x6xi1>, vector<2x6xi32>
    %140 = vector.extract_strided_slice %8 {offsets = [0, 2], sizes = [2, 1], strides = [1, 1]} : vector<2x8xf32> to vector<2x1xf32>
    %cst_22 = arith.constant 5.000000e-01 : f32
    %141 = vector.broadcast %cst_22 : f32 to vector<2x1xf32>
    %142 = arith.cmpf ogt, %140, %141 : vector<2x1xf32>
    %143 = vector.shape_cast %142 : vector<2x1xi1> to vector<2x1xi1>
    %144 = vector.broadcast %143 : vector<2x1xi1> to vector<2x6xi1>
    %145 = arith.select %144, %139, %9 : vector<2x6xi1>, vector<2x6xi32>
    %146 = vector.extract_strided_slice %6 {offsets = [2, 0, 0], sizes = [1, 2, 6], strides = [1, 1, 1]} : vector<8x2x6xf32> to vector<1x2x6xf32>
    %147 = vector.shape_cast %146 : vector<1x2x6xf32> to vector<2x6xf32>
    %148 = arith.addf %137, %147 : vector<2x6xf32>
    %149 = vector.shape_cast %142 : vector<2x1xi1> to vector<2x1xi1>
    %150 = vector.broadcast %149 : vector<2x1xi1> to vector<2x6xi1>
    %151 = arith.select %150, %148, %83 : vector<2x6xi1>, vector<2x6xf32>
    %cst_23 = arith.constant -1.000000e+30 : f32
    %152 = vector.broadcast %cst_23 : f32 to vector<2x6xf32>
    %c0_i32_24 = arith.constant 0 : i32
    %153 = vector.broadcast %c0_i32_24 : i32 to vector<2x6xi32>
    %154 = vector.extract_strided_slice %151 {offsets = [0, 0], sizes = [2, 1], strides = [1, 1]} : vector<2x6xf32> to vector<2x1xf32>
    %155 = vector.extract_strided_slice %7 {offsets = [0, 0], sizes = [1, 6], strides = [1, 1]} : vector<6x6xf32> to vector<1x6xf32>
    %156 = vector.broadcast %154 : vector<2x1xf32> to vector<2x6xf32>
    %157 = vector.broadcast %155 : vector<1x6xf32> to vector<2x6xf32>
    %158 = arith.addf %156, %157 : vector<2x6xf32>
    %159 = arith.cmpf ogt, %158, %152 : vector<2x6xf32>
    %160 = arith.select %159, %158, %152 : vector<2x6xi1>, vector<2x6xf32>
    %c0_i32_25 = arith.constant 0 : i32
    %161 = vector.broadcast %c0_i32_25 : i32 to vector<2x6xi32>
    %162 = arith.select %159, %161, %153 : vector<2x6xi1>, vector<2x6xi32>
    %163 = vector.extract_strided_slice %151 {offsets = [0, 1], sizes = [2, 1], strides = [1, 1]} : vector<2x6xf32> to vector<2x1xf32>
    %164 = vector.extract_strided_slice %7 {offsets = [1, 0], sizes = [1, 6], strides = [1, 1]} : vector<6x6xf32> to vector<1x6xf32>
    %165 = vector.broadcast %163 : vector<2x1xf32> to vector<2x6xf32>
    %166 = vector.broadcast %164 : vector<1x6xf32> to vector<2x6xf32>
    %167 = arith.addf %165, %166 : vector<2x6xf32>
    %168 = arith.cmpf ogt, %167, %160 : vector<2x6xf32>
    %169 = arith.select %168, %167, %160 : vector<2x6xi1>, vector<2x6xf32>
    %c1_i32_26 = arith.constant 1 : i32
    %170 = vector.broadcast %c1_i32_26 : i32 to vector<2x6xi32>
    %171 = arith.select %168, %170, %162 : vector<2x6xi1>, vector<2x6xi32>
    %172 = vector.extract_strided_slice %151 {offsets = [0, 2], sizes = [2, 1], strides = [1, 1]} : vector<2x6xf32> to vector<2x1xf32>
    %173 = vector.extract_strided_slice %7 {offsets = [2, 0], sizes = [1, 6], strides = [1, 1]} : vector<6x6xf32> to vector<1x6xf32>
    %174 = vector.broadcast %172 : vector<2x1xf32> to vector<2x6xf32>
    %175 = vector.broadcast %173 : vector<1x6xf32> to vector<2x6xf32>
    %176 = arith.addf %174, %175 : vector<2x6xf32>
    %177 = arith.cmpf ogt, %176, %169 : vector<2x6xf32>
    %178 = arith.select %177, %176, %169 : vector<2x6xi1>, vector<2x6xf32>
    %c2_i32_27 = arith.constant 2 : i32
    %179 = vector.broadcast %c2_i32_27 : i32 to vector<2x6xi32>
    %180 = arith.select %177, %179, %171 : vector<2x6xi1>, vector<2x6xi32>
    %181 = vector.extract_strided_slice %151 {offsets = [0, 3], sizes = [2, 1], strides = [1, 1]} : vector<2x6xf32> to vector<2x1xf32>
    %182 = vector.extract_strided_slice %7 {offsets = [3, 0], sizes = [1, 6], strides = [1, 1]} : vector<6x6xf32> to vector<1x6xf32>
    %183 = vector.broadcast %181 : vector<2x1xf32> to vector<2x6xf32>
    %184 = vector.broadcast %182 : vector<1x6xf32> to vector<2x6xf32>
    %185 = arith.addf %183, %184 : vector<2x6xf32>
    %186 = arith.cmpf ogt, %185, %178 : vector<2x6xf32>
    %187 = arith.select %186, %185, %178 : vector<2x6xi1>, vector<2x6xf32>
    %c3_i32_28 = arith.constant 3 : i32
    %188 = vector.broadcast %c3_i32_28 : i32 to vector<2x6xi32>
    %189 = arith.select %186, %188, %180 : vector<2x6xi1>, vector<2x6xi32>
    %190 = vector.extract_strided_slice %151 {offsets = [0, 4], sizes = [2, 1], strides = [1, 1]} : vector<2x6xf32> to vector<2x1xf32>
    %191 = vector.extract_strided_slice %7 {offsets = [4, 0], sizes = [1, 6], strides = [1, 1]} : vector<6x6xf32> to vector<1x6xf32>
    %192 = vector.broadcast %190 : vector<2x1xf32> to vector<2x6xf32>
    %193 = vector.broadcast %191 : vector<1x6xf32> to vector<2x6xf32>
    %194 = arith.addf %192, %193 : vector<2x6xf32>
    %195 = arith.cmpf ogt, %194, %187 : vector<2x6xf32>
    %196 = arith.select %195, %194, %187 : vector<2x6xi1>, vector<2x6xf32>
    %c4_i32_29 = arith.constant 4 : i32
    %197 = vector.broadcast %c4_i32_29 : i32 to vector<2x6xi32>
    %198 = arith.select %195, %197, %189 : vector<2x6xi1>, vector<2x6xi32>
    %199 = vector.extract_strided_slice %151 {offsets = [0, 5], sizes = [2, 1], strides = [1, 1]} : vector<2x6xf32> to vector<2x1xf32>
    %200 = vector.extract_strided_slice %7 {offsets = [5, 0], sizes = [1, 6], strides = [1, 1]} : vector<6x6xf32> to vector<1x6xf32>
    %201 = vector.broadcast %199 : vector<2x1xf32> to vector<2x6xf32>
    %202 = vector.broadcast %200 : vector<1x6xf32> to vector<2x6xf32>
    %203 = arith.addf %201, %202 : vector<2x6xf32>
    %204 = arith.cmpf ogt, %203, %196 : vector<2x6xf32>
    %205 = arith.select %204, %203, %196 : vector<2x6xi1>, vector<2x6xf32>
    %c5_i32_30 = arith.constant 5 : i32
    %206 = vector.broadcast %c5_i32_30 : i32 to vector<2x6xi32>
    %207 = arith.select %204, %206, %198 : vector<2x6xi1>, vector<2x6xi32>
    %208 = vector.extract_strided_slice %8 {offsets = [0, 3], sizes = [2, 1], strides = [1, 1]} : vector<2x8xf32> to vector<2x1xf32>
    %cst_31 = arith.constant 5.000000e-01 : f32
    %209 = vector.broadcast %cst_31 : f32 to vector<2x1xf32>
    %210 = arith.cmpf ogt, %208, %209 : vector<2x1xf32>
    %211 = vector.shape_cast %210 : vector<2x1xi1> to vector<2x1xi1>
    %212 = vector.broadcast %211 : vector<2x1xi1> to vector<2x6xi1>
    %213 = arith.select %212, %207, %9 : vector<2x6xi1>, vector<2x6xi32>
    %214 = vector.extract_strided_slice %6 {offsets = [3, 0, 0], sizes = [1, 2, 6], strides = [1, 1, 1]} : vector<8x2x6xf32> to vector<1x2x6xf32>
    %215 = vector.shape_cast %214 : vector<1x2x6xf32> to vector<2x6xf32>
    %216 = arith.addf %205, %215 : vector<2x6xf32>
    %217 = vector.shape_cast %210 : vector<2x1xi1> to vector<2x1xi1>
    %218 = vector.broadcast %217 : vector<2x1xi1> to vector<2x6xi1>
    %219 = arith.select %218, %216, %151 : vector<2x6xi1>, vector<2x6xf32>
    %cst_32 = arith.constant -1.000000e+30 : f32
    %220 = vector.broadcast %cst_32 : f32 to vector<2x6xf32>
    %c0_i32_33 = arith.constant 0 : i32
    %221 = vector.broadcast %c0_i32_33 : i32 to vector<2x6xi32>
    %222 = vector.extract_strided_slice %219 {offsets = [0, 0], sizes = [2, 1], strides = [1, 1]} : vector<2x6xf32> to vector<2x1xf32>
    %223 = vector.extract_strided_slice %7 {offsets = [0, 0], sizes = [1, 6], strides = [1, 1]} : vector<6x6xf32> to vector<1x6xf32>
    %224 = vector.broadcast %222 : vector<2x1xf32> to vector<2x6xf32>
    %225 = vector.broadcast %223 : vector<1x6xf32> to vector<2x6xf32>
    %226 = arith.addf %224, %225 : vector<2x6xf32>
    %227 = arith.cmpf ogt, %226, %220 : vector<2x6xf32>
    %228 = arith.select %227, %226, %220 : vector<2x6xi1>, vector<2x6xf32>
    %c0_i32_34 = arith.constant 0 : i32
    %229 = vector.broadcast %c0_i32_34 : i32 to vector<2x6xi32>
    %230 = arith.select %227, %229, %221 : vector<2x6xi1>, vector<2x6xi32>
    %231 = vector.extract_strided_slice %219 {offsets = [0, 1], sizes = [2, 1], strides = [1, 1]} : vector<2x6xf32> to vector<2x1xf32>
    %232 = vector.extract_strided_slice %7 {offsets = [1, 0], sizes = [1, 6], strides = [1, 1]} : vector<6x6xf32> to vector<1x6xf32>
    %233 = vector.broadcast %231 : vector<2x1xf32> to vector<2x6xf32>
    %234 = vector.broadcast %232 : vector<1x6xf32> to vector<2x6xf32>
    %235 = arith.addf %233, %234 : vector<2x6xf32>
    %236 = arith.cmpf ogt, %235, %228 : vector<2x6xf32>
    %237 = arith.select %236, %235, %228 : vector<2x6xi1>, vector<2x6xf32>
    %c1_i32_35 = arith.constant 1 : i32
    %238 = vector.broadcast %c1_i32_35 : i32 to vector<2x6xi32>
    %239 = arith.select %236, %238, %230 : vector<2x6xi1>, vector<2x6xi32>
    %240 = vector.extract_strided_slice %219 {offsets = [0, 2], sizes = [2, 1], strides = [1, 1]} : vector<2x6xf32> to vector<2x1xf32>
    %241 = vector.extract_strided_slice %7 {offsets = [2, 0], sizes = [1, 6], strides = [1, 1]} : vector<6x6xf32> to vector<1x6xf32>
    %242 = vector.broadcast %240 : vector<2x1xf32> to vector<2x6xf32>
    %243 = vector.broadcast %241 : vector<1x6xf32> to vector<2x6xf32>
    %244 = arith.addf %242, %243 : vector<2x6xf32>
    %245 = arith.cmpf ogt, %244, %237 : vector<2x6xf32>
    %246 = arith.select %245, %244, %237 : vector<2x6xi1>, vector<2x6xf32>
    %c2_i32_36 = arith.constant 2 : i32
    %247 = vector.broadcast %c2_i32_36 : i32 to vector<2x6xi32>
    %248 = arith.select %245, %247, %239 : vector<2x6xi1>, vector<2x6xi32>
    %249 = vector.extract_strided_slice %219 {offsets = [0, 3], sizes = [2, 1], strides = [1, 1]} : vector<2x6xf32> to vector<2x1xf32>
    %250 = vector.extract_strided_slice %7 {offsets = [3, 0], sizes = [1, 6], strides = [1, 1]} : vector<6x6xf32> to vector<1x6xf32>
    %251 = vector.broadcast %249 : vector<2x1xf32> to vector<2x6xf32>
    %252 = vector.broadcast %250 : vector<1x6xf32> to vector<2x6xf32>
    %253 = arith.addf %251, %252 : vector<2x6xf32>
    %254 = arith.cmpf ogt, %253, %246 : vector<2x6xf32>
    %255 = arith.select %254, %253, %246 : vector<2x6xi1>, vector<2x6xf32>
    %c3_i32_37 = arith.constant 3 : i32
    %256 = vector.broadcast %c3_i32_37 : i32 to vector<2x6xi32>
    %257 = arith.select %254, %256, %248 : vector<2x6xi1>, vector<2x6xi32>
    %258 = vector.extract_strided_slice %219 {offsets = [0, 4], sizes = [2, 1], strides = [1, 1]} : vector<2x6xf32> to vector<2x1xf32>
    %259 = vector.extract_strided_slice %7 {offsets = [4, 0], sizes = [1, 6], strides = [1, 1]} : vector<6x6xf32> to vector<1x6xf32>
    %260 = vector.broadcast %258 : vector<2x1xf32> to vector<2x6xf32>
    %261 = vector.broadcast %259 : vector<1x6xf32> to vector<2x6xf32>
    %262 = arith.addf %260, %261 : vector<2x6xf32>
    %263 = arith.cmpf ogt, %262, %255 : vector<2x6xf32>
    %264 = arith.select %263, %262, %255 : vector<2x6xi1>, vector<2x6xf32>
    %c4_i32_38 = arith.constant 4 : i32
    %265 = vector.broadcast %c4_i32_38 : i32 to vector<2x6xi32>
    %266 = arith.select %263, %265, %257 : vector<2x6xi1>, vector<2x6xi32>
    %267 = vector.extract_strided_slice %219 {offsets = [0, 5], sizes = [2, 1], strides = [1, 1]} : vector<2x6xf32> to vector<2x1xf32>
    %268 = vector.extract_strided_slice %7 {offsets = [5, 0], sizes = [1, 6], strides = [1, 1]} : vector<6x6xf32> to vector<1x6xf32>
    %269 = vector.broadcast %267 : vector<2x1xf32> to vector<2x6xf32>
    %270 = vector.broadcast %268 : vector<1x6xf32> to vector<2x6xf32>
    %271 = arith.addf %269, %270 : vector<2x6xf32>
    %272 = arith.cmpf ogt, %271, %264 : vector<2x6xf32>
    %273 = arith.select %272, %271, %264 : vector<2x6xi1>, vector<2x6xf32>
    %c5_i32_39 = arith.constant 5 : i32
    %274 = vector.broadcast %c5_i32_39 : i32 to vector<2x6xi32>
    %275 = arith.select %272, %274, %266 : vector<2x6xi1>, vector<2x6xi32>
    %276 = vector.extract_strided_slice %8 {offsets = [0, 4], sizes = [2, 1], strides = [1, 1]} : vector<2x8xf32> to vector<2x1xf32>
    %cst_40 = arith.constant 5.000000e-01 : f32
    %277 = vector.broadcast %cst_40 : f32 to vector<2x1xf32>
    %278 = arith.cmpf ogt, %276, %277 : vector<2x1xf32>
    %279 = vector.shape_cast %278 : vector<2x1xi1> to vector<2x1xi1>
    %280 = vector.broadcast %279 : vector<2x1xi1> to vector<2x6xi1>
    %281 = arith.select %280, %275, %9 : vector<2x6xi1>, vector<2x6xi32>
    %282 = vector.extract_strided_slice %6 {offsets = [4, 0, 0], sizes = [1, 2, 6], strides = [1, 1, 1]} : vector<8x2x6xf32> to vector<1x2x6xf32>
    %283 = vector.shape_cast %282 : vector<1x2x6xf32> to vector<2x6xf32>
    %284 = arith.addf %273, %283 : vector<2x6xf32>
    %285 = vector.shape_cast %278 : vector<2x1xi1> to vector<2x1xi1>
    %286 = vector.broadcast %285 : vector<2x1xi1> to vector<2x6xi1>
    %287 = arith.select %286, %284, %219 : vector<2x6xi1>, vector<2x6xf32>
    %cst_41 = arith.constant -1.000000e+30 : f32
    %288 = vector.broadcast %cst_41 : f32 to vector<2x6xf32>
    %c0_i32_42 = arith.constant 0 : i32
    %289 = vector.broadcast %c0_i32_42 : i32 to vector<2x6xi32>
    %290 = vector.extract_strided_slice %287 {offsets = [0, 0], sizes = [2, 1], strides = [1, 1]} : vector<2x6xf32> to vector<2x1xf32>
    %291 = vector.extract_strided_slice %7 {offsets = [0, 0], sizes = [1, 6], strides = [1, 1]} : vector<6x6xf32> to vector<1x6xf32>
    %292 = vector.broadcast %290 : vector<2x1xf32> to vector<2x6xf32>
    %293 = vector.broadcast %291 : vector<1x6xf32> to vector<2x6xf32>
    %294 = arith.addf %292, %293 : vector<2x6xf32>
    %295 = arith.cmpf ogt, %294, %288 : vector<2x6xf32>
    %296 = arith.select %295, %294, %288 : vector<2x6xi1>, vector<2x6xf32>
    %c0_i32_43 = arith.constant 0 : i32
    %297 = vector.broadcast %c0_i32_43 : i32 to vector<2x6xi32>
    %298 = arith.select %295, %297, %289 : vector<2x6xi1>, vector<2x6xi32>
    %299 = vector.extract_strided_slice %287 {offsets = [0, 1], sizes = [2, 1], strides = [1, 1]} : vector<2x6xf32> to vector<2x1xf32>
    %300 = vector.extract_strided_slice %7 {offsets = [1, 0], sizes = [1, 6], strides = [1, 1]} : vector<6x6xf32> to vector<1x6xf32>
    %301 = vector.broadcast %299 : vector<2x1xf32> to vector<2x6xf32>
    %302 = vector.broadcast %300 : vector<1x6xf32> to vector<2x6xf32>
    %303 = arith.addf %301, %302 : vector<2x6xf32>
    %304 = arith.cmpf ogt, %303, %296 : vector<2x6xf32>
    %305 = arith.select %304, %303, %296 : vector<2x6xi1>, vector<2x6xf32>
    %c1_i32_44 = arith.constant 1 : i32
    %306 = vector.broadcast %c1_i32_44 : i32 to vector<2x6xi32>
    %307 = arith.select %304, %306, %298 : vector<2x6xi1>, vector<2x6xi32>
    %308 = vector.extract_strided_slice %287 {offsets = [0, 2], sizes = [2, 1], strides = [1, 1]} : vector<2x6xf32> to vector<2x1xf32>
    %309 = vector.extract_strided_slice %7 {offsets = [2, 0], sizes = [1, 6], strides = [1, 1]} : vector<6x6xf32> to vector<1x6xf32>
    %310 = vector.broadcast %308 : vector<2x1xf32> to vector<2x6xf32>
    %311 = vector.broadcast %309 : vector<1x6xf32> to vector<2x6xf32>
    %312 = arith.addf %310, %311 : vector<2x6xf32>
    %313 = arith.cmpf ogt, %312, %305 : vector<2x6xf32>
    %314 = arith.select %313, %312, %305 : vector<2x6xi1>, vector<2x6xf32>
    %c2_i32_45 = arith.constant 2 : i32
    %315 = vector.broadcast %c2_i32_45 : i32 to vector<2x6xi32>
    %316 = arith.select %313, %315, %307 : vector<2x6xi1>, vector<2x6xi32>
    %317 = vector.extract_strided_slice %287 {offsets = [0, 3], sizes = [2, 1], strides = [1, 1]} : vector<2x6xf32> to vector<2x1xf32>
    %318 = vector.extract_strided_slice %7 {offsets = [3, 0], sizes = [1, 6], strides = [1, 1]} : vector<6x6xf32> to vector<1x6xf32>
    %319 = vector.broadcast %317 : vector<2x1xf32> to vector<2x6xf32>
    %320 = vector.broadcast %318 : vector<1x6xf32> to vector<2x6xf32>
    %321 = arith.addf %319, %320 : vector<2x6xf32>
    %322 = arith.cmpf ogt, %321, %314 : vector<2x6xf32>
    %323 = arith.select %322, %321, %314 : vector<2x6xi1>, vector<2x6xf32>
    %c3_i32_46 = arith.constant 3 : i32
    %324 = vector.broadcast %c3_i32_46 : i32 to vector<2x6xi32>
    %325 = arith.select %322, %324, %316 : vector<2x6xi1>, vector<2x6xi32>
    %326 = vector.extract_strided_slice %287 {offsets = [0, 4], sizes = [2, 1], strides = [1, 1]} : vector<2x6xf32> to vector<2x1xf32>
    %327 = vector.extract_strided_slice %7 {offsets = [4, 0], sizes = [1, 6], strides = [1, 1]} : vector<6x6xf32> to vector<1x6xf32>
    %328 = vector.broadcast %326 : vector<2x1xf32> to vector<2x6xf32>
    %329 = vector.broadcast %327 : vector<1x6xf32> to vector<2x6xf32>
    %330 = arith.addf %328, %329 : vector<2x6xf32>
    %331 = arith.cmpf ogt, %330, %323 : vector<2x6xf32>
    %332 = arith.select %331, %330, %323 : vector<2x6xi1>, vector<2x6xf32>
    %c4_i32_47 = arith.constant 4 : i32
    %333 = vector.broadcast %c4_i32_47 : i32 to vector<2x6xi32>
    %334 = arith.select %331, %333, %325 : vector<2x6xi1>, vector<2x6xi32>
    %335 = vector.extract_strided_slice %287 {offsets = [0, 5], sizes = [2, 1], strides = [1, 1]} : vector<2x6xf32> to vector<2x1xf32>
    %336 = vector.extract_strided_slice %7 {offsets = [5, 0], sizes = [1, 6], strides = [1, 1]} : vector<6x6xf32> to vector<1x6xf32>
    %337 = vector.broadcast %335 : vector<2x1xf32> to vector<2x6xf32>
    %338 = vector.broadcast %336 : vector<1x6xf32> to vector<2x6xf32>
    %339 = arith.addf %337, %338 : vector<2x6xf32>
    %340 = arith.cmpf ogt, %339, %332 : vector<2x6xf32>
    %341 = arith.select %340, %339, %332 : vector<2x6xi1>, vector<2x6xf32>
    %c5_i32_48 = arith.constant 5 : i32
    %342 = vector.broadcast %c5_i32_48 : i32 to vector<2x6xi32>
    %343 = arith.select %340, %342, %334 : vector<2x6xi1>, vector<2x6xi32>
    %344 = vector.extract_strided_slice %8 {offsets = [0, 5], sizes = [2, 1], strides = [1, 1]} : vector<2x8xf32> to vector<2x1xf32>
    %cst_49 = arith.constant 5.000000e-01 : f32
    %345 = vector.broadcast %cst_49 : f32 to vector<2x1xf32>
    %346 = arith.cmpf ogt, %344, %345 : vector<2x1xf32>
    %347 = vector.shape_cast %346 : vector<2x1xi1> to vector<2x1xi1>
    %348 = vector.broadcast %347 : vector<2x1xi1> to vector<2x6xi1>
    %349 = arith.select %348, %343, %9 : vector<2x6xi1>, vector<2x6xi32>
    %350 = vector.extract_strided_slice %6 {offsets = [5, 0, 0], sizes = [1, 2, 6], strides = [1, 1, 1]} : vector<8x2x6xf32> to vector<1x2x6xf32>
    %351 = vector.shape_cast %350 : vector<1x2x6xf32> to vector<2x6xf32>
    %352 = arith.addf %341, %351 : vector<2x6xf32>
    %353 = vector.shape_cast %346 : vector<2x1xi1> to vector<2x1xi1>
    %354 = vector.broadcast %353 : vector<2x1xi1> to vector<2x6xi1>
    %355 = arith.select %354, %352, %287 : vector<2x6xi1>, vector<2x6xf32>
    %cst_50 = arith.constant -1.000000e+30 : f32
    %356 = vector.broadcast %cst_50 : f32 to vector<2x6xf32>
    %c0_i32_51 = arith.constant 0 : i32
    %357 = vector.broadcast %c0_i32_51 : i32 to vector<2x6xi32>
    %358 = vector.extract_strided_slice %355 {offsets = [0, 0], sizes = [2, 1], strides = [1, 1]} : vector<2x6xf32> to vector<2x1xf32>
    %359 = vector.extract_strided_slice %7 {offsets = [0, 0], sizes = [1, 6], strides = [1, 1]} : vector<6x6xf32> to vector<1x6xf32>
    %360 = vector.broadcast %358 : vector<2x1xf32> to vector<2x6xf32>
    %361 = vector.broadcast %359 : vector<1x6xf32> to vector<2x6xf32>
    %362 = arith.addf %360, %361 : vector<2x6xf32>
    %363 = arith.cmpf ogt, %362, %356 : vector<2x6xf32>
    %364 = arith.select %363, %362, %356 : vector<2x6xi1>, vector<2x6xf32>
    %c0_i32_52 = arith.constant 0 : i32
    %365 = vector.broadcast %c0_i32_52 : i32 to vector<2x6xi32>
    %366 = arith.select %363, %365, %357 : vector<2x6xi1>, vector<2x6xi32>
    %367 = vector.extract_strided_slice %355 {offsets = [0, 1], sizes = [2, 1], strides = [1, 1]} : vector<2x6xf32> to vector<2x1xf32>
    %368 = vector.extract_strided_slice %7 {offsets = [1, 0], sizes = [1, 6], strides = [1, 1]} : vector<6x6xf32> to vector<1x6xf32>
    %369 = vector.broadcast %367 : vector<2x1xf32> to vector<2x6xf32>
    %370 = vector.broadcast %368 : vector<1x6xf32> to vector<2x6xf32>
    %371 = arith.addf %369, %370 : vector<2x6xf32>
    %372 = arith.cmpf ogt, %371, %364 : vector<2x6xf32>
    %373 = arith.select %372, %371, %364 : vector<2x6xi1>, vector<2x6xf32>
    %c1_i32_53 = arith.constant 1 : i32
    %374 = vector.broadcast %c1_i32_53 : i32 to vector<2x6xi32>
    %375 = arith.select %372, %374, %366 : vector<2x6xi1>, vector<2x6xi32>
    %376 = vector.extract_strided_slice %355 {offsets = [0, 2], sizes = [2, 1], strides = [1, 1]} : vector<2x6xf32> to vector<2x1xf32>
    %377 = vector.extract_strided_slice %7 {offsets = [2, 0], sizes = [1, 6], strides = [1, 1]} : vector<6x6xf32> to vector<1x6xf32>
    %378 = vector.broadcast %376 : vector<2x1xf32> to vector<2x6xf32>
    %379 = vector.broadcast %377 : vector<1x6xf32> to vector<2x6xf32>
    %380 = arith.addf %378, %379 : vector<2x6xf32>
    %381 = arith.cmpf ogt, %380, %373 : vector<2x6xf32>
    %382 = arith.select %381, %380, %373 : vector<2x6xi1>, vector<2x6xf32>
    %c2_i32_54 = arith.constant 2 : i32
    %383 = vector.broadcast %c2_i32_54 : i32 to vector<2x6xi32>
    %384 = arith.select %381, %383, %375 : vector<2x6xi1>, vector<2x6xi32>
    %385 = vector.extract_strided_slice %355 {offsets = [0, 3], sizes = [2, 1], strides = [1, 1]} : vector<2x6xf32> to vector<2x1xf32>
    %386 = vector.extract_strided_slice %7 {offsets = [3, 0], sizes = [1, 6], strides = [1, 1]} : vector<6x6xf32> to vector<1x6xf32>
    %387 = vector.broadcast %385 : vector<2x1xf32> to vector<2x6xf32>
    %388 = vector.broadcast %386 : vector<1x6xf32> to vector<2x6xf32>
    %389 = arith.addf %387, %388 : vector<2x6xf32>
    %390 = arith.cmpf ogt, %389, %382 : vector<2x6xf32>
    %391 = arith.select %390, %389, %382 : vector<2x6xi1>, vector<2x6xf32>
    %c3_i32_55 = arith.constant 3 : i32
    %392 = vector.broadcast %c3_i32_55 : i32 to vector<2x6xi32>
    %393 = arith.select %390, %392, %384 : vector<2x6xi1>, vector<2x6xi32>
    %394 = vector.extract_strided_slice %355 {offsets = [0, 4], sizes = [2, 1], strides = [1, 1]} : vector<2x6xf32> to vector<2x1xf32>
    %395 = vector.extract_strided_slice %7 {offsets = [4, 0], sizes = [1, 6], strides = [1, 1]} : vector<6x6xf32> to vector<1x6xf32>
    %396 = vector.broadcast %394 : vector<2x1xf32> to vector<2x6xf32>
    %397 = vector.broadcast %395 : vector<1x6xf32> to vector<2x6xf32>
    %398 = arith.addf %396, %397 : vector<2x6xf32>
    %399 = arith.cmpf ogt, %398, %391 : vector<2x6xf32>
    %400 = arith.select %399, %398, %391 : vector<2x6xi1>, vector<2x6xf32>
    %c4_i32_56 = arith.constant 4 : i32
    %401 = vector.broadcast %c4_i32_56 : i32 to vector<2x6xi32>
    %402 = arith.select %399, %401, %393 : vector<2x6xi1>, vector<2x6xi32>
    %403 = vector.extract_strided_slice %355 {offsets = [0, 5], sizes = [2, 1], strides = [1, 1]} : vector<2x6xf32> to vector<2x1xf32>
    %404 = vector.extract_strided_slice %7 {offsets = [5, 0], sizes = [1, 6], strides = [1, 1]} : vector<6x6xf32> to vector<1x6xf32>
    %405 = vector.broadcast %403 : vector<2x1xf32> to vector<2x6xf32>
    %406 = vector.broadcast %404 : vector<1x6xf32> to vector<2x6xf32>
    %407 = arith.addf %405, %406 : vector<2x6xf32>
    %408 = arith.cmpf ogt, %407, %400 : vector<2x6xf32>
    %409 = arith.select %408, %407, %400 : vector<2x6xi1>, vector<2x6xf32>
    %c5_i32_57 = arith.constant 5 : i32
    %410 = vector.broadcast %c5_i32_57 : i32 to vector<2x6xi32>
    %411 = arith.select %408, %410, %402 : vector<2x6xi1>, vector<2x6xi32>
    %412 = vector.extract_strided_slice %8 {offsets = [0, 6], sizes = [2, 1], strides = [1, 1]} : vector<2x8xf32> to vector<2x1xf32>
    %cst_58 = arith.constant 5.000000e-01 : f32
    %413 = vector.broadcast %cst_58 : f32 to vector<2x1xf32>
    %414 = arith.cmpf ogt, %412, %413 : vector<2x1xf32>
    %415 = vector.shape_cast %414 : vector<2x1xi1> to vector<2x1xi1>
    %416 = vector.broadcast %415 : vector<2x1xi1> to vector<2x6xi1>
    %417 = arith.select %416, %411, %9 : vector<2x6xi1>, vector<2x6xi32>
    %418 = vector.extract_strided_slice %6 {offsets = [6, 0, 0], sizes = [1, 2, 6], strides = [1, 1, 1]} : vector<8x2x6xf32> to vector<1x2x6xf32>
    %419 = vector.shape_cast %418 : vector<1x2x6xf32> to vector<2x6xf32>
    %420 = arith.addf %409, %419 : vector<2x6xf32>
    %421 = vector.shape_cast %414 : vector<2x1xi1> to vector<2x1xi1>
    %422 = vector.broadcast %421 : vector<2x1xi1> to vector<2x6xi1>
    %423 = arith.select %422, %420, %355 : vector<2x6xi1>, vector<2x6xf32>
    %cst_59 = arith.constant -1.000000e+30 : f32
    %424 = vector.broadcast %cst_59 : f32 to vector<2x6xf32>
    %c0_i32_60 = arith.constant 0 : i32
    %425 = vector.broadcast %c0_i32_60 : i32 to vector<2x6xi32>
    %426 = vector.extract_strided_slice %423 {offsets = [0, 0], sizes = [2, 1], strides = [1, 1]} : vector<2x6xf32> to vector<2x1xf32>
    %427 = vector.extract_strided_slice %7 {offsets = [0, 0], sizes = [1, 6], strides = [1, 1]} : vector<6x6xf32> to vector<1x6xf32>
    %428 = vector.broadcast %426 : vector<2x1xf32> to vector<2x6xf32>
    %429 = vector.broadcast %427 : vector<1x6xf32> to vector<2x6xf32>
    %430 = arith.addf %428, %429 : vector<2x6xf32>
    %431 = arith.cmpf ogt, %430, %424 : vector<2x6xf32>
    %432 = arith.select %431, %430, %424 : vector<2x6xi1>, vector<2x6xf32>
    %c0_i32_61 = arith.constant 0 : i32
    %433 = vector.broadcast %c0_i32_61 : i32 to vector<2x6xi32>
    %434 = arith.select %431, %433, %425 : vector<2x6xi1>, vector<2x6xi32>
    %435 = vector.extract_strided_slice %423 {offsets = [0, 1], sizes = [2, 1], strides = [1, 1]} : vector<2x6xf32> to vector<2x1xf32>
    %436 = vector.extract_strided_slice %7 {offsets = [1, 0], sizes = [1, 6], strides = [1, 1]} : vector<6x6xf32> to vector<1x6xf32>
    %437 = vector.broadcast %435 : vector<2x1xf32> to vector<2x6xf32>
    %438 = vector.broadcast %436 : vector<1x6xf32> to vector<2x6xf32>
    %439 = arith.addf %437, %438 : vector<2x6xf32>
    %440 = arith.cmpf ogt, %439, %432 : vector<2x6xf32>
    %441 = arith.select %440, %439, %432 : vector<2x6xi1>, vector<2x6xf32>
    %c1_i32_62 = arith.constant 1 : i32
    %442 = vector.broadcast %c1_i32_62 : i32 to vector<2x6xi32>
    %443 = arith.select %440, %442, %434 : vector<2x6xi1>, vector<2x6xi32>
    %444 = vector.extract_strided_slice %423 {offsets = [0, 2], sizes = [2, 1], strides = [1, 1]} : vector<2x6xf32> to vector<2x1xf32>
    %445 = vector.extract_strided_slice %7 {offsets = [2, 0], sizes = [1, 6], strides = [1, 1]} : vector<6x6xf32> to vector<1x6xf32>
    %446 = vector.broadcast %444 : vector<2x1xf32> to vector<2x6xf32>
    %447 = vector.broadcast %445 : vector<1x6xf32> to vector<2x6xf32>
    %448 = arith.addf %446, %447 : vector<2x6xf32>
    %449 = arith.cmpf ogt, %448, %441 : vector<2x6xf32>
    %450 = arith.select %449, %448, %441 : vector<2x6xi1>, vector<2x6xf32>
    %c2_i32_63 = arith.constant 2 : i32
    %451 = vector.broadcast %c2_i32_63 : i32 to vector<2x6xi32>
    %452 = arith.select %449, %451, %443 : vector<2x6xi1>, vector<2x6xi32>
    %453 = vector.extract_strided_slice %423 {offsets = [0, 3], sizes = [2, 1], strides = [1, 1]} : vector<2x6xf32> to vector<2x1xf32>
    %454 = vector.extract_strided_slice %7 {offsets = [3, 0], sizes = [1, 6], strides = [1, 1]} : vector<6x6xf32> to vector<1x6xf32>
    %455 = vector.broadcast %453 : vector<2x1xf32> to vector<2x6xf32>
    %456 = vector.broadcast %454 : vector<1x6xf32> to vector<2x6xf32>
    %457 = arith.addf %455, %456 : vector<2x6xf32>
    %458 = arith.cmpf ogt, %457, %450 : vector<2x6xf32>
    %459 = arith.select %458, %457, %450 : vector<2x6xi1>, vector<2x6xf32>
    %c3_i32_64 = arith.constant 3 : i32
    %460 = vector.broadcast %c3_i32_64 : i32 to vector<2x6xi32>
    %461 = arith.select %458, %460, %452 : vector<2x6xi1>, vector<2x6xi32>
    %462 = vector.extract_strided_slice %423 {offsets = [0, 4], sizes = [2, 1], strides = [1, 1]} : vector<2x6xf32> to vector<2x1xf32>
    %463 = vector.extract_strided_slice %7 {offsets = [4, 0], sizes = [1, 6], strides = [1, 1]} : vector<6x6xf32> to vector<1x6xf32>
    %464 = vector.broadcast %462 : vector<2x1xf32> to vector<2x6xf32>
    %465 = vector.broadcast %463 : vector<1x6xf32> to vector<2x6xf32>
    %466 = arith.addf %464, %465 : vector<2x6xf32>
    %467 = arith.cmpf ogt, %466, %459 : vector<2x6xf32>
    %468 = arith.select %467, %466, %459 : vector<2x6xi1>, vector<2x6xf32>
    %c4_i32_65 = arith.constant 4 : i32
    %469 = vector.broadcast %c4_i32_65 : i32 to vector<2x6xi32>
    %470 = arith.select %467, %469, %461 : vector<2x6xi1>, vector<2x6xi32>
    %471 = vector.extract_strided_slice %423 {offsets = [0, 5], sizes = [2, 1], strides = [1, 1]} : vector<2x6xf32> to vector<2x1xf32>
    %472 = vector.extract_strided_slice %7 {offsets = [5, 0], sizes = [1, 6], strides = [1, 1]} : vector<6x6xf32> to vector<1x6xf32>
    %473 = vector.broadcast %471 : vector<2x1xf32> to vector<2x6xf32>
    %474 = vector.broadcast %472 : vector<1x6xf32> to vector<2x6xf32>
    %475 = arith.addf %473, %474 : vector<2x6xf32>
    %476 = arith.cmpf ogt, %475, %468 : vector<2x6xf32>
    %477 = arith.select %476, %475, %468 : vector<2x6xi1>, vector<2x6xf32>
    %c5_i32_66 = arith.constant 5 : i32
    %478 = vector.broadcast %c5_i32_66 : i32 to vector<2x6xi32>
    %479 = arith.select %476, %478, %470 : vector<2x6xi1>, vector<2x6xi32>
    %480 = vector.extract_strided_slice %8 {offsets = [0, 7], sizes = [2, 1], strides = [1, 1]} : vector<2x8xf32> to vector<2x1xf32>
    %cst_67 = arith.constant 5.000000e-01 : f32
    %481 = vector.broadcast %cst_67 : f32 to vector<2x1xf32>
    %482 = arith.cmpf ogt, %480, %481 : vector<2x1xf32>
    %483 = vector.shape_cast %482 : vector<2x1xi1> to vector<2x1xi1>
    %484 = vector.broadcast %483 : vector<2x1xi1> to vector<2x6xi1>
    %485 = arith.select %484, %479, %9 : vector<2x6xi1>, vector<2x6xi32>
    %486 = vector.extract_strided_slice %6 {offsets = [7, 0, 0], sizes = [1, 2, 6], strides = [1, 1, 1]} : vector<8x2x6xf32> to vector<1x2x6xf32>
    %487 = vector.shape_cast %486 : vector<1x2x6xf32> to vector<2x6xf32>
    %488 = arith.addf %477, %487 : vector<2x6xf32>
    %489 = vector.shape_cast %482 : vector<2x1xi1> to vector<2x1xi1>
    %490 = vector.broadcast %489 : vector<2x1xi1> to vector<2x6xi1>
    %491 = arith.select %490, %488, %423 : vector<2x6xi1>, vector<2x6xf32>
    %c0_68 = arith.constant 0 : index
    %c0_69 = arith.constant 0 : index
    %492 = vector.load %arg6[%c0_68, %c0_69] : memref<1x6xf32, #tpu.memory_space<vmem>>, vector<1x6xf32>
    %493 = vector.broadcast %492 : vector<1x6xf32> to vector<2x6xf32>
    %494 = arith.addf %491, %493 : vector<2x6xf32>
    %cst_70 = arith.constant -1.000000e+30 : f32
    %495 = vector.broadcast %cst_70 : f32 to vector<2x1xf32>
    %c0_i32_71 = arith.constant 0 : i32
    %496 = vector.broadcast %c0_i32_71 : i32 to vector<2x1xi32>
    %497 = vector.extract_strided_slice %494 {offsets = [0, 0], sizes = [2, 1], strides = [1, 1]} : vector<2x6xf32> to vector<2x1xf32>
    %498 = arith.cmpf ogt, %497, %495 : vector<2x1xf32>
    %499 = arith.select %498, %497, %495 : vector<2x1xi1>, vector<2x1xf32>
    %c0_i32_72 = arith.constant 0 : i32
    %500 = vector.broadcast %c0_i32_72 : i32 to vector<2x1xi32>
    %501 = arith.select %498, %500, %496 : vector<2x1xi1>, vector<2x1xi32>
    %502 = vector.extract_strided_slice %494 {offsets = [0, 1], sizes = [2, 1], strides = [1, 1]} : vector<2x6xf32> to vector<2x1xf32>
    %503 = arith.cmpf ogt, %502, %499 : vector<2x1xf32>
    %504 = arith.select %503, %502, %499 : vector<2x1xi1>, vector<2x1xf32>
    %c1_i32_73 = arith.constant 1 : i32
    %505 = vector.broadcast %c1_i32_73 : i32 to vector<2x1xi32>
    %506 = arith.select %503, %505, %501 : vector<2x1xi1>, vector<2x1xi32>
    %507 = vector.extract_strided_slice %494 {offsets = [0, 2], sizes = [2, 1], strides = [1, 1]} : vector<2x6xf32> to vector<2x1xf32>
    %508 = arith.cmpf ogt, %507, %504 : vector<2x1xf32>
    %509 = arith.select %508, %507, %504 : vector<2x1xi1>, vector<2x1xf32>
    %c2_i32_74 = arith.constant 2 : i32
    %510 = vector.broadcast %c2_i32_74 : i32 to vector<2x1xi32>
    %511 = arith.select %508, %510, %506 : vector<2x1xi1>, vector<2x1xi32>
    %512 = vector.extract_strided_slice %494 {offsets = [0, 3], sizes = [2, 1], strides = [1, 1]} : vector<2x6xf32> to vector<2x1xf32>
    %513 = arith.cmpf ogt, %512, %509 : vector<2x1xf32>
    %514 = arith.select %513, %512, %509 : vector<2x1xi1>, vector<2x1xf32>
    %c3_i32_75 = arith.constant 3 : i32
    %515 = vector.broadcast %c3_i32_75 : i32 to vector<2x1xi32>
    %516 = arith.select %513, %515, %511 : vector<2x1xi1>, vector<2x1xi32>
    %517 = vector.extract_strided_slice %494 {offsets = [0, 4], sizes = [2, 1], strides = [1, 1]} : vector<2x6xf32> to vector<2x1xf32>
    %518 = arith.cmpf ogt, %517, %514 : vector<2x1xf32>
    %519 = arith.select %518, %517, %514 : vector<2x1xi1>, vector<2x1xf32>
    %c4_i32_76 = arith.constant 4 : i32
    %520 = vector.broadcast %c4_i32_76 : i32 to vector<2x1xi32>
    %521 = arith.select %518, %520, %516 : vector<2x1xi1>, vector<2x1xi32>
    %522 = vector.extract_strided_slice %494 {offsets = [0, 5], sizes = [2, 1], strides = [1, 1]} : vector<2x6xf32> to vector<2x1xf32>
    %523 = arith.cmpf ogt, %522, %519 : vector<2x1xf32>
    %c5_i32_77 = arith.constant 5 : i32
    %524 = vector.broadcast %c5_i32_77 : i32 to vector<2x1xi32>
    %525 = arith.select %523, %524, %521 : vector<2x1xi1>, vector<2x1xi32>
    %c7_i32 = arith.constant 7 : i32
    %526 = vector.broadcast %c7_i32 : i32 to vector<2x8xi32>
    %527 = arith.cmpi eq, %10, %526 : vector<2x8xi32>
    %c0_i32_78 = arith.constant 0 : i32
    %528 = vector.shape_cast %525 : vector<2x1xi32> to vector<2x1xi32>
    %529 = vector.broadcast %528 : vector<2x1xi32> to vector<2x8xi32>
    %530 = vector.broadcast %c0_i32_78 : i32 to vector<2x8xi32>
    %531 = arith.select %527, %529, %530 : vector<2x8xi1>, vector<2x8xi32>
    %532 = vector.broadcast %525 : vector<2x1xi32> to vector<2x6xi32>
    %533 = arith.cmpi eq, %9, %532 : vector<2x6xi32>
    %c0_i32_79 = arith.constant 0 : i32
    %534 = vector.broadcast %c0_i32_79 : i32 to vector<2x6xi32>
    %535 = arith.select %533, %485, %534 : vector<2x6xi1>, vector<2x6xi32>
    %cst_80 = arith.constant dense<0> : vector<2xi32>
    %536 = vector.multi_reduction <add>, %535, %cst_80 [1] : vector<2x6xi32> to vector<2xi32>
    %537 = vector.shape_cast %536 : vector<2xi32> to vector<2x1xi32>
    %c6_i32 = arith.constant 6 : i32
    %538 = vector.broadcast %c6_i32 : i32 to vector<2x8xi32>
    %539 = arith.cmpi eq, %10, %538 : vector<2x8xi32>
    %540 = vector.shape_cast %537 : vector<2x1xi32> to vector<2x1xi32>
    %541 = vector.broadcast %540 : vector<2x1xi32> to vector<2x8xi32>
    %542 = arith.select %539, %541, %531 : vector<2x8xi1>, vector<2x8xi32>
    %543 = vector.broadcast %537 : vector<2x1xi32> to vector<2x6xi32>
    %544 = arith.cmpi eq, %9, %543 : vector<2x6xi32>
    %c0_i32_81 = arith.constant 0 : i32
    %545 = vector.broadcast %c0_i32_81 : i32 to vector<2x6xi32>
    %546 = arith.select %544, %417, %545 : vector<2x6xi1>, vector<2x6xi32>
    %cst_82 = arith.constant dense<0> : vector<2xi32>
    %547 = vector.multi_reduction <add>, %546, %cst_82 [1] : vector<2x6xi32> to vector<2xi32>
    %548 = vector.shape_cast %547 : vector<2xi32> to vector<2x1xi32>
    %c5_i32_83 = arith.constant 5 : i32
    %549 = vector.broadcast %c5_i32_83 : i32 to vector<2x8xi32>
    %550 = arith.cmpi eq, %10, %549 : vector<2x8xi32>
    %551 = vector.shape_cast %548 : vector<2x1xi32> to vector<2x1xi32>
    %552 = vector.broadcast %551 : vector<2x1xi32> to vector<2x8xi32>
    %553 = arith.select %550, %552, %542 : vector<2x8xi1>, vector<2x8xi32>
    %554 = vector.broadcast %548 : vector<2x1xi32> to vector<2x6xi32>
    %555 = arith.cmpi eq, %9, %554 : vector<2x6xi32>
    %c0_i32_84 = arith.constant 0 : i32
    %556 = vector.broadcast %c0_i32_84 : i32 to vector<2x6xi32>
    %557 = arith.select %555, %349, %556 : vector<2x6xi1>, vector<2x6xi32>
    %cst_85 = arith.constant dense<0> : vector<2xi32>
    %558 = vector.multi_reduction <add>, %557, %cst_85 [1] : vector<2x6xi32> to vector<2xi32>
    %559 = vector.shape_cast %558 : vector<2xi32> to vector<2x1xi32>
    %c4_i32_86 = arith.constant 4 : i32
    %560 = vector.broadcast %c4_i32_86 : i32 to vector<2x8xi32>
    %561 = arith.cmpi eq, %10, %560 : vector<2x8xi32>
    %562 = vector.shape_cast %559 : vector<2x1xi32> to vector<2x1xi32>
    %563 = vector.broadcast %562 : vector<2x1xi32> to vector<2x8xi32>
    %564 = arith.select %561, %563, %553 : vector<2x8xi1>, vector<2x8xi32>
    %565 = vector.broadcast %559 : vector<2x1xi32> to vector<2x6xi32>
    %566 = arith.cmpi eq, %9, %565 : vector<2x6xi32>
    %c0_i32_87 = arith.constant 0 : i32
    %567 = vector.broadcast %c0_i32_87 : i32 to vector<2x6xi32>
    %568 = arith.select %566, %281, %567 : vector<2x6xi1>, vector<2x6xi32>
    %cst_88 = arith.constant dense<0> : vector<2xi32>
    %569 = vector.multi_reduction <add>, %568, %cst_88 [1] : vector<2x6xi32> to vector<2xi32>
    %570 = vector.shape_cast %569 : vector<2xi32> to vector<2x1xi32>
    %c3_i32_89 = arith.constant 3 : i32
    %571 = vector.broadcast %c3_i32_89 : i32 to vector<2x8xi32>
    %572 = arith.cmpi eq, %10, %571 : vector<2x8xi32>
    %573 = vector.shape_cast %570 : vector<2x1xi32> to vector<2x1xi32>
    %574 = vector.broadcast %573 : vector<2x1xi32> to vector<2x8xi32>
    %575 = arith.select %572, %574, %564 : vector<2x8xi1>, vector<2x8xi32>
    %576 = vector.broadcast %570 : vector<2x1xi32> to vector<2x6xi32>
    %577 = arith.cmpi eq, %9, %576 : vector<2x6xi32>
    %c0_i32_90 = arith.constant 0 : i32
    %578 = vector.broadcast %c0_i32_90 : i32 to vector<2x6xi32>
    %579 = arith.select %577, %213, %578 : vector<2x6xi1>, vector<2x6xi32>
    %cst_91 = arith.constant dense<0> : vector<2xi32>
    %580 = vector.multi_reduction <add>, %579, %cst_91 [1] : vector<2x6xi32> to vector<2xi32>
    %581 = vector.shape_cast %580 : vector<2xi32> to vector<2x1xi32>
    %c2_i32_92 = arith.constant 2 : i32
    %582 = vector.broadcast %c2_i32_92 : i32 to vector<2x8xi32>
    %583 = arith.cmpi eq, %10, %582 : vector<2x8xi32>
    %584 = vector.shape_cast %581 : vector<2x1xi32> to vector<2x1xi32>
    %585 = vector.broadcast %584 : vector<2x1xi32> to vector<2x8xi32>
    %586 = arith.select %583, %585, %575 : vector<2x8xi1>, vector<2x8xi32>
    %587 = vector.broadcast %581 : vector<2x1xi32> to vector<2x6xi32>
    %588 = arith.cmpi eq, %9, %587 : vector<2x6xi32>
    %c0_i32_93 = arith.constant 0 : i32
    %589 = vector.broadcast %c0_i32_93 : i32 to vector<2x6xi32>
    %590 = arith.select %588, %145, %589 : vector<2x6xi1>, vector<2x6xi32>
    %cst_94 = arith.constant dense<0> : vector<2xi32>
    %591 = vector.multi_reduction <add>, %590, %cst_94 [1] : vector<2x6xi32> to vector<2xi32>
    %592 = vector.shape_cast %591 : vector<2xi32> to vector<2x1xi32>
    %c1_i32_95 = arith.constant 1 : i32
    %593 = vector.broadcast %c1_i32_95 : i32 to vector<2x8xi32>
    %594 = arith.cmpi eq, %10, %593 : vector<2x8xi32>
    %595 = vector.shape_cast %592 : vector<2x1xi32> to vector<2x1xi32>
    %596 = vector.broadcast %595 : vector<2x1xi32> to vector<2x8xi32>
    %597 = arith.select %594, %596, %586 : vector<2x8xi1>, vector<2x8xi32>
    %598 = vector.broadcast %592 : vector<2x1xi32> to vector<2x6xi32>
    %599 = arith.cmpi eq, %9, %598 : vector<2x6xi32>
    %c0_i32_96 = arith.constant 0 : i32
    %600 = vector.broadcast %c0_i32_96 : i32 to vector<2x6xi32>
    %601 = arith.select %599, %77, %600 : vector<2x6xi1>, vector<2x6xi32>
    %cst_97 = arith.constant dense<0> : vector<2xi32>
    %602 = vector.multi_reduction <add>, %601, %cst_97 [1] : vector<2x6xi32> to vector<2xi32>
    %603 = vector.shape_cast %602 : vector<2xi32> to vector<2x1xi32>
    %c0_i32_98 = arith.constant 0 : i32
    %604 = vector.broadcast %c0_i32_98 : i32 to vector<2x8xi32>
    %605 = arith.cmpi eq, %10, %604 : vector<2x8xi32>
    %606 = vector.shape_cast %603 : vector<2x1xi32> to vector<2x1xi32>
    %607 = vector.broadcast %606 : vector<2x1xi32> to vector<2x8xi32>
    %608 = arith.select %605, %607, %597 : vector<2x8xi1>, vector<2x8xi32>
    %c0_99 = arith.constant 0 : index
    %c0_100 = arith.constant 0 : index
    %609 = vector.load %arg8[%c0_99, %c0_100] : memref<2x8xi32, #tpu.memory_space<vmem>>, vector<2x8xi32>
    tpu.vector_store %arg8[%c0_99, %c0_100], %608 {strides = array<i32>} : memref<2x8xi32, #tpu.memory_space<vmem>>, vector<2x8xi32>,
    return
  }
  func.func @transform_0(%arg0: i32) -> (i32, i32) {
    %c0_i32 = arith.constant 0 : i32
    %c0_i32_0 = arith.constant 0 : i32
    %c0_i32_1 = arith.constant 0 : i32
    return %c0_i32, %c0_i32_0 : i32, i32
  }
  func.func @transform_1(%arg0: i32) -> (i32, i32) {
    %c0_i32 = arith.constant 0 : i32
    %c0_i32_0 = arith.constant 0 : i32
    %c0_i32_1 = arith.constant 0 : i32
    return %c0_i32, %c0_i32_0 : i32, i32
  }
  func.func @transform_2(%arg0: i32) -> (i32, i32) {
    %c0_i32 = arith.constant 0 : i32
    %c0_i32_0 = arith.constant 0 : i32
    %c0_i32_1 = arith.constant 0 : i32
    return %c0_i32, %c0_i32_0 : i32, i32
  }
  func.func @transform_3(%arg0: i32) -> (i32, i32) {
    %c0_i32 = arith.constant 0 : i32
    %c0_i32_0 = arith.constant 0 : i32
    %c0_i32_1 = arith.constant 0 : i32
    return %c0_i32, %c0_i32_0 : i32, i32
  }
  func.func @transform_4(%arg0: i32) -> (i32, i32) {
    %c0_i32 = arith.constant 0 : i32
    %c0_i32_0 = arith.constant 0 : i32
    %c0_i32_1 = arith.constant 0 : i32
    return %c0_i32, %c0_i32_0 : i32, i32
  }
  func.func @transform_5(%arg0: i32) -> (i32, i32) {
    %c0_i32 = arith.constant 0 : i32
    %c0_i32_0 = arith.constant 0 : i32
    %c0_i32_1 = arith.constant 0 : i32
    return %c0_i32, %c0_i32_0 : i32, i32
  }
  func.func @transform_6(%arg0: i32) -> (i32, i32) {
    %c0_i32 = arith.constant 0 : i32
    %c0_i32_0 = arith.constant 0 : i32
    %c0_i32_1 = arith.constant 0 : i32
    return %c0_i32, %c0_i32_0 : i32, i32
  }
  func.func @transform_7(%arg0: i32) -> (i32, i32) {
    %c0_i32 = arith.constant 0 : i32
    %c0_i32_0 = arith.constant 0 : i32
    %c0_i32_1 = arith.constant 0 : i32
    return %c0_i32, %c0_i32_0 : i32, i32
  }
}

</mosaic_0001>

<llo_original>
// kernel: bert_crf_decode.3
$region0: #{bert_crf_decode.3}
  #allocation0 [shape = 'u32[]', space=smem, size = 0x4, offset = 0x4, fixed_abs, tag = 'smem constant byte address 0x4 - core index']
  #allocation1 [shape = 'u32[144,128]{1,0:T(1,128)}', space=vmem, size = 0x12000, scoped, tag = 'internal scratch']
  %s0 = inlined_call_operand.vmem [shape: f32[2,8], index: 0, kind: input, shape index: {}]
  %s1 = inlined_call_operand.vmem [shape: f32[16,32], index: 1, kind: input, shape index: {}]
  %s2 = inlined_call_operand.vmem [shape: f32[32,6], index: 2, kind: input, shape index: {}]
  %s3 = inlined_call_operand.vmem [shape: f32[1,6], index: 3, kind: input, shape index: {}]
  %s4 = inlined_call_operand.vmem [shape: f32[1,6], index: 4, kind: input, shape index: {}]
  %s5 = inlined_call_operand.vmem [shape: f32[1,6], index: 5, kind: input, shape index: {}]
  %s6 = inlined_call_operand.vmem [shape: f32[6,6], index: 6, kind: input, shape index: {}]
  %s7 = inlined_call_operand.hbm [shape: s32[2,8], index: 7, kind: output, shape index: {}]
  %s8 = sld [smem:[#allocation0]]
  $region38: #{bert_crf_decode.3} parent=0
    _
  %s10 = ssub.s32 1, %s8
  %s11 = scalar_select 0, %s10, %s8
  $region1: #{bert_crf_decode.3} parent=0
    #allocation2 [shape = 'u8[1024]{0}', space=vmem, size = 0x400, scoped, tag = 'output window, operand 0, single buffered']
    #allocation3 [shape = 's32[1]{0}', space=sflag, size = 0x4, scoped, tag = 'scoped memory for bert_crf_decode.3']
    %12 = vsyncpa [#allocation3], 0
    // Predicated region
    $region2: #{bert_crf_decode.3} parent=1 // pred_check
      _
    $region3: #{bert_crf_decode.3} parent=1 // pred_check_branch
      %14 = sbr.rel (0) target = $region5
    $region4: #{bert_crf_decode.3} parent=1 // pred_region
      _
    $region5: #{bert_crf_decode.3} parent=1 // pred_fallthru
      _
    // Predicated region
    $region6: #{bert_crf_decode.3} parent=1 // pred_check
      _
    $region7: #{bert_crf_decode.3} parent=1 // pred_check_branch
      %16 = sbr.rel (0) target = $region9
    $region8: #{bert_crf_decode.3} parent=1 // pred_region
      _
    $region9: #{bert_crf_decode.3} parent=1 // pred_fallthru
      _
    // Predicated region
    $region10: #{bert_crf_decode.3} parent=1 // pred_check
      _
    $region11: #{bert_crf_decode.3} parent=1 // pred_check_branch
      %18 = sbr.rel (0) target = $region13
    $region12: #{bert_crf_decode.3} parent=1 // pred_region
      _
    $region13: #{bert_crf_decode.3} parent=1 // pred_fallthru
      _
    // Predicated region
    $region14: #{bert_crf_decode.3} parent=1 // pred_check
      _
    $region15: #{bert_crf_decode.3} parent=1 // pred_check_branch
      %20 = sbr.rel (0) target = $region17
    $region16: #{bert_crf_decode.3} parent=1 // pred_region
      _
    $region17: #{bert_crf_decode.3} parent=1 // pred_fallthru
      _
    // Predicated region
    $region18: #{bert_crf_decode.3} parent=1 // pred_check
      _
    $region19: #{bert_crf_decode.3} parent=1 // pred_check_branch
      %22 = sbr.rel (0) target = $region21
    $region20: #{bert_crf_decode.3} parent=1 // pred_region
      _
    $region21: #{bert_crf_decode.3} parent=1 // pred_fallthru
      _
    // Predicated region
    $region22: #{bert_crf_decode.3} parent=1 // pred_check
      _
    $region23: #{bert_crf_decode.3} parent=1 // pred_check_branch
      %24 = sbr.rel (0) target = $region25
    $region24: #{bert_crf_decode.3} parent=1 // pred_region
      _
    $region25: #{bert_crf_decode.3} parent=1 // pred_fallthru
      _
    // Predicated region
    $region26: #{bert_crf_decode.3} parent=1 // pred_check
      _
    $region27: #{bert_crf_decode.3} parent=1 // pred_check_branch
      %26 = sbr.rel (0) target = $region29
    $region28: #{bert_crf_decode.3} parent=1 // pred_region
      _
    $region29: #{bert_crf_decode.3} parent=1 // pred_fallthru
      _
    %v27 = vld [vmem:[%s1] sm:$0xff]
    %v28 = vld [vmem:[%s1 + $0x8] sm:$0xff]
    %v29 = vld [vmem:[%s2] sm:$0xff]
    %v30 = vld [vmem:[%s2 + $0x8] sm:$0xff]
    %v31 = vld [vmem:[%s2 + $0x10] sm:$0xff]
    %v32 = vld [vmem:[%s2 + $0x18] sm:$0xff]
    %v33 = vld [vmem:[%s3] sm:$0x1]
    %v35 = vlaneseq
    %v36 = vshrl.u32 %v35, 7
    %v37 = vsub.s32 0, %v36
    %v38 = vrot.slane %v33, %v37
    %vm40 = vcmask 261120
    %v42 = vsel %vm40, %v27, 0
    %v45 = vsel %vm40, %v28, 0
    %47 = vmatprep.subr.mxu0 0.0
    %48 = vmatpush1.msra.mxu0 %v29
    %49 = vmatprep.subr.mxu0 0.0
    %50 = vmatpush1.msra.mxu0 %v30
    %51 = vmatprep.subr.mxu0 0.0
    %52 = vmatpush1.msra.mxu0 %v31
    %53 = vmatprep.subr.mxu0 0.0
    %54 = vmatpush1.msra.mxu0 %v32
    %55 = vmatprep.subr.mxu0 0.0
    %56 = vmatpush1.msra.mxu0 0.0
    %57 = vmatprep.subr.mxu0 0.0
    %58 = vmatpush1.msra.mxu0 0.0
    %59 = vmatprep.subr.mxu0 0.0
    %60 = vmatpush1.msra.mxu0 0.0
    %61 = vmatprep.subr.mxu0 0.0
    %62 = vmatpush1.msra.mxu0 0.0
    %63 = vmatprep.subr.mxu0 0.0
    %64 = vmatpush1.msra.mxu0 0.0
    %65 = vmatprep.subr.mxu0 0.0
    %66 = vmatpush1.msra.mxu0 0.0
    %67 = vmatprep.subr.mxu0 0.0
    %68 = vmatpush1.msra.mxu0 0.0
    %69 = vmatprep.subr.mxu0 0.0
    %70 = vmatpush1.msra.mxu0 0.0
    %71 = vmatprep.subr.mxu0 0.0
    %72 = vmatpush1.msra.mxu0 0.0
    %73 = vmatprep.subr.mxu0 0.0
    %74 = vmatpush1.msra.mxu0 0.0
    %75 = vmatprep.subr.mxu0 0.0
    %76 = vmatpush1.msra.mxu0 0.0
    %77 = vmatprep.subr.mxu0 0.0
    %78 = vmatpush1.msra.mxu0 0.0
    %79 = vmatprep.subr.mxu0 0.0
    %80 = vmatpush1.msra.mxu0 0.0
    %81 = vmatprep.subr.mxu0 0.0
    %82 = vmatpush1.msra.mxu0 0.0
    %83 = vmatprep.subr.mxu0 0.0
    %84 = vmatpush1.msra.mxu0 0.0
    %85 = vmatprep.subr.mxu0 0.0
    %86 = vmatpush1.msra.mxu0 0.0
    %87 = vmatprep.subr.mxu0 0.0
    %88 = vmatpush1.msra.mxu0 0.0
    %89 = vmatprep.subr.mxu0 0.0
    %90 = vmatpush1.msra.mxu0 0.0
    %91 = vmatprep.subr.mxu0 0.0
    %92 = vmatpush1.msra.mxu0 0.0
    %93 = vmatprep.subr.mxu0 0.0
    %94 = vmatpush1.msra.mxu0 0.0
    %95 = vmatprep.subr.mxu0 0.0
    %96 = vmatpush1.msra.mxu0 0.0
    %97 = vmatprep.subr.mxu0 0.0
    %98 = vmatpush1.msra.mxu0 0.0
    %99 = vmatprep.subr.mxu0 0.0
    %100 = vmatpush1.msra.mxu0 0.0
    %101 = vmatprep.subr.mxu0 0.0
    %102 = vmatpush1.msra.mxu0 0.0
    %103 = vmatprep.subr.mxu0 0.0
    %104 = vmatpush1.msra.mxu0 0.0
    %105 = vmatprep.subr.mxu0 0.0
    %106 = vmatpush1.msra.mxu0 0.0
    %107 = vmatprep.subr.mxu0 0.0
    %108 = vmatpush1.msra.mxu0 0.0
    %109 = vmatprep.subr.mxu0 0.0
    %110 = vmatpush1.msra.mxu0 0.0
    %111 = vmatprep.mubr.f32.mxu0 0.0
    %112 = vmatmul.mubr.f32.gmra.mrb[0].mxu0 %v42
    %v113 = vpop.f32.mrb[0].mxu0
    %v114 = vadd.f32 %v38, %v113
    %v115 = vpop.f32.mrb[0].mxu0
    %116 = vmatprep.mubr.f32.mxu0 0.0
    %117 = vmatmul.mubr.f32.gmra.mrb[0].mxu0 %v45
    %v118 = vpop.f32.mrb[0].mxu0
    %v119 = vadd.f32 %v38, %v118
    %v120 = vpop.f32.mrb[0].mxu0
    %121 = vdwg.mxu0
    %v124 = vcombine.high %v114, %v114
    %v126 = vunpack.c.l.s4 1983009808
    %v127 = vunpack.c.0.s8 %v126
    %v128 = vlaneseq
    %v129 = vshrl.u32 %v128, 7
    %v130 = vsub.s32 %v127, %v129
    %v131 = vrot.slane %v114, %v130
    %v133 = vunpack.c.l.s4 1983009808
    %v134 = vunpack.c.0.s8 %v133
    %v135 = vlaneseq
    %v136 = vshrl.u32 %v135, 7
    %v137 = vsub.s32 %v134, %v136
    %v138 = vrot.slane %v124, %v137
    %v139 = vcombine.high %v131, %v131
    %v140 = vcombine.high %v138, %v138
    %v141 = vcombine.high %v119, %v119
    %v143 = vunpack.c.l.s4 1983009808
    %v144 = vunpack.c.0.s8 %v143
    %v145 = vlaneseq
    %v146 = vshrl.u32 %v145, 7
    %v147 = vsub.s32 %v144, %v146
    %v148 = vrot.slane %v119, %v147
    %v150 = vunpack.c.l.s4 1983009808
    %v151 = vunpack.c.0.s8 %v150
    %v152 = vlaneseq
    %v153 = vshrl.u32 %v152, 7
    %v154 = vsub.s32 %v151, %v153
    %v155 = vrot.slane %v141, %v154
    %v156 = vcombine.high %v148, %v148
    %v157 = vcombine.high %v155, %v155
    %v166 = vld [vmem:[%s6] sm:$0x3f]
    %v167 = vld [vmem:[%s0] sm:$0x3]
    %v168 = vlaneseq
    %v169 = vand.u32 %v168, 127
    %v170 = vld [vmem:[%s4] sm:$0x1]
    %v172 = vlaneseq
    %v173 = vshrl.u32 %v172, 7
    %v174 = vsub.s32 0, %v173
    %v175 = vrot.slane %v170, %v174
    %v177 = vadd.f32 %v175, %v131
    %179 = vset.pattern.permute.xlu0 0
    %180 = vperm.xlu0 %179, %v177
    %v181 = vpop.permute.xlu0 %180
    %v183 = vlaneseq
    %v184 = vshrl.u32 %v183, 7
    %v185 = vsub.s32 0, %v184
    %v186 = vrot.slane %v166, %v185
    %v187 = vadd.f32 %v181, %v186
    %vm188 = vcmp.gt.f32.partialorder %v187, -1e+30
    %v189 = vsel %vm188, %v187, -1e+30
    %190 = vset.pattern.permute.xlu0 1
    %191 = vperm.xlu0 %190, %v177
    %v192 = vpop.permute.xlu0 %191
    %v194 = vlaneseq
    %v195 = vshrl.u32 %v194, 7
    %v196 = vsub.s32 1, %v195
    %v197 = vrot.slane %v166, %v196
    %v198 = vadd.f32 %v192, %v197
    %vm199 = vcmp.gt.f32.partialorder %v198, %v189
    %v200 = vsel %vm199, %v198, %v189
    %v201 = vsel %vm199, 1, 0
    %202 = vset.pattern.permute.xlu0 2
    %203 = vperm.xlu0 %202, %v177
    %v204 = vpop.permute.xlu0 %203
    %v206 = vlaneseq
    %v207 = vshrl.u32 %v206, 7
    %v208 = vsub.s32 2, %v207
    %v209 = vrot.slane %v166, %v208
    %v210 = vadd.f32 %v204, %v209
    %vm211 = vcmp.gt.f32.partialorder %v210, %v200
    %v212 = vsel %vm211, %v210, %v200
    %v213 = vsel %vm211, 2, %v201
    %214 = vset.pattern.permute.xlu0 3
    %215 = vperm.xlu0 %214, %v177
    %v216 = vpop.permute.xlu0 %215
    %v218 = vlaneseq
    %v219 = vshrl.u32 %v218, 7
    %v220 = vsub.s32 3, %v219
    %v221 = vrot.slane %v166, %v220
    %v222 = vadd.f32 %v216, %v221
    %vm223 = vcmp.gt.f32.partialorder %v222, %v212
    %v224 = vsel %vm223, %v222, %v212
    %v225 = vsel %vm223, 3, %v213
    %226 = vset.pattern.permute.xlu0 4
    %227 = vperm.xlu0 %226, %v177
    %v228 = vpop.permute.xlu0 %227
    %v230 = vlaneseq
    %v231 = vshrl.u32 %v230, 7
    %v232 = vsub.s32 4, %v231
    %v233 = vrot.slane %v166, %v232
    %v234 = vadd.f32 %v228, %v233
    %vm235 = vcmp.gt.f32.partialorder %v234, %v224
    %v236 = vsel %vm235, %v234, %v224
    %v237 = vsel %vm235, 4, %v225
    %238 = vset.pattern.permute.xlu0 5
    %239 = vperm.xlu0 %238, %v177
    %v240 = vpop.permute.xlu0 %239
    %v242 = vlaneseq
    %v243 = vshrl.u32 %v242, 7
    %v244 = vsub.s32 5, %v243
    %v245 = vrot.slane %v166, %v244
    %v246 = vadd.f32 %v240, %v245
    %vm247 = vcmp.gt.f32.partialorder %v246, %v236
    %v248 = vsel %vm247, %v246, %v236
    %v249 = vsel %vm247, 5, %v237
    %vm250 = vcmp.gt.f32.partialorder %v167, 0.5
    %v251 = vsel %vm250, 1, 0
    %252 = vset.pattern.permute.xlu0 1
    %253 = vperm.xlu0 %252, %v251
    %v254 = vpop.permute.xlu0 %253
    %vm255 = vcmp.eq.s32.totalorder %v254, 1
    %v256 = vsel %vm255, %v249, %v169
    %v257 = vadd.f32 %v248, %v139
    %v258 = vsel %vm255, %v257, %v177
    %260 = vset.pattern.permute.xlu0 0
    %261 = vperm.xlu0 %260, %v258
    %v262 = vpop.permute.xlu0 %261
    %v264 = vadd.f32 %v262, %v186
    %vm265 = vcmp.gt.f32.partialorder %v264, -1e+30
    %v266 = vsel %vm265, %v264, -1e+30
    %267 = vset.pattern.permute.xlu0 1
    %268 = vperm.xlu0 %267, %v258
    %v269 = vpop.permute.xlu0 %268
    %v271 = vadd.f32 %v269, %v197
    %vm272 = vcmp.gt.f32.partialorder %v271, %v266
    %v273 = vsel %vm272, %v271, %v266
    %v274 = vsel %vm272, 1, 0
    %275 = vset.pattern.permute.xlu0 2
    %276 = vperm.xlu0 %275, %v258
    %v277 = vpop.permute.xlu0 %276
    %v279 = vadd.f32 %v277, %v209
    %vm280 = vcmp.gt.f32.partialorder %v279, %v273
    %v281 = vsel %vm280, %v279, %v273
    %v282 = vsel %vm280, 2, %v274
    %283 = vset.pattern.permute.xlu0 3
    %284 = vperm.xlu0 %283, %v258
    %v285 = vpop.permute.xlu0 %284
    %v287 = vadd.f32 %v285, %v221
    %vm288 = vcmp.gt.f32.partialorder %v287, %v281
    %v289 = vsel %vm288, %v287, %v281
    %v290 = vsel %vm288, 3, %v282
    %291 = vset.pattern.permute.xlu0 4
    %292 = vperm.xlu0 %291, %v258
    %v293 = vpop.permute.xlu0 %292
    %v295 = vadd.f32 %v293, %v233
    %vm296 = vcmp.gt.f32.partialorder %v295, %v289
    %v297 = vsel %vm296, %v295, %v289
    %v298 = vsel %vm296, 4, %v290
    %299 = vset.pattern.permute.xlu0 5
    %300 = vperm.xlu0 %299, %v258
    %v301 = vpop.permute.xlu0 %300
    %v303 = vadd.f32 %v301, %v245
    %vm304 = vcmp.gt.f32.partialorder %v303, %v297
    %v305 = vsel %vm304, %v303, %v297
    %v306 = vsel %vm304, 5, %v298
    %307 = vset.pattern.permute.xlu0 2
    %308 = vperm.xlu0 %307, %v251
    %v309 = vpop.permute.xlu0 %308
    %vm310 = vcmp.eq.s32.totalorder %v309, 1
    %v311 = vsel %vm310, %v306, %v169
    %v312 = vadd.f32 %v305, %v138
    %v313 = vsel %vm310, %v312, %v258
    %315 = vset.pattern.permute.xlu0 0
    %316 = vperm.xlu0 %315, %v313
    %v317 = vpop.permute.xlu0 %316
    %v319 = vadd.f32 %v317, %v186
    %vm320 = vcmp.gt.f32.partialorder %v319, -1e+30
    %v321 = vsel %vm320, %v319, -1e+30
    %322 = vset.pattern.permute.xlu0 1
    %323 = vperm.xlu0 %322, %v313
    %v324 = vpop.permute.xlu0 %323
    %v326 = vadd.f32 %v324, %v197
    %vm327 = vcmp.gt.f32.partialorder %v326, %v321
    %v328 = vsel %vm327, %v326, %v321
    %v329 = vsel %vm327, 1, 0
    %330 = vset.pattern.permute.xlu0 2
    %331 = vperm.xlu0 %330, %v313
    %v332 = vpop.permute.xlu0 %331
    %v334 = vadd.f32 %v332, %v209
    %vm335 = vcmp.gt.f32.partialorder %v334, %v328
    %v336 = vsel %vm335, %v334, %v328
    %v337 = vsel %vm335, 2, %v329
    %338 = vset.pattern.permute.xlu0 3
    %339 = vperm.xlu0 %338, %v313
    %v340 = vpop.permute.xlu0 %339
    %v342 = vadd.f32 %v340, %v221
    %vm343 = vcmp.gt.f32.partialorder %v342, %v336
    %v344 = vsel %vm343, %v342, %v336
    %v345 = vsel %vm343, 3, %v337
    %346 = vset.pattern.permute.xlu0 4
    %347 = vperm.xlu0 %346, %v313
    %v348 = vpop.permute.xlu0 %347
    %v350 = vadd.f32 %v348, %v233
    %vm351 = vcmp.gt.f32.partialorder %v350, %v344
    %v352 = vsel %vm351, %v350, %v344
    %v353 = vsel %vm351, 4, %v345
    %354 = vset.pattern.permute.xlu0 5
    %355 = vperm.xlu0 %354, %v313
    %v356 = vpop.permute.xlu0 %355
    %v358 = vadd.f32 %v356, %v245
    %vm359 = vcmp.gt.f32.partialorder %v358, %v352
    %v360 = vsel %vm359, %v358, %v352
    %v361 = vsel %vm359, 5, %v353
    %362 = vset.pattern.permute.xlu0 3
    %363 = vperm.xlu0 %362, %v251
    %v364 = vpop.permute.xlu0 %363
    %vm365 = vcmp.eq.s32.totalorder %v364, 1
    %v366 = vsel %vm365, %v361, %v169
    %v367 = vadd.f32 %v360, %v140
    %v368 = vsel %vm365, %v367, %v313
    %370 = vset.pattern.permute.xlu0 0
    %371 = vperm.xlu0 %370, %v368
    %v372 = vpop.permute.xlu0 %371
    %v374 = vadd.f32 %v372, %v186
    %vm375 = vcmp.gt.f32.partialorder %v374, -1e+30
    %v376 = vsel %vm375, %v374, -1e+30
    %377 = vset.pattern.permute.xlu0 1
    %378 = vperm.xlu0 %377, %v368
    %v379 = vpop.permute.xlu0 %378
    %v381 = vadd.f32 %v379, %v197
    %vm382 = vcmp.gt.f32.partialorder %v381, %v376
    %v383 = vsel %vm382, %v381, %v376
    %v384 = vsel %vm382, 1, 0
    %385 = vset.pattern.permute.xlu0 2
    %386 = vperm.xlu0 %385, %v368
    %v387 = vpop.permute.xlu0 %386
    %v389 = vadd.f32 %v387, %v209
    %vm390 = vcmp.gt.f32.partialorder %v389, %v383
    %v391 = vsel %vm390, %v389, %v383
    %v392 = vsel %vm390, 2, %v384
    %393 = vset.pattern.permute.xlu0 3
    %394 = vperm.xlu0 %393, %v368
    %v395 = vpop.permute.xlu0 %394
    %v397 = vadd.f32 %v395, %v221
    %vm398 = vcmp.gt.f32.partialorder %v397, %v391
    %v399 = vsel %vm398, %v397, %v391
    %v400 = vsel %vm398, 3, %v392
    %401 = vset.pattern.permute.xlu0 4
    %402 = vperm.xlu0 %401, %v368
    %v403 = vpop.permute.xlu0 %402
    %v405 = vadd.f32 %v403, %v233
    %vm406 = vcmp.gt.f32.partialorder %v405, %v399
    %v407 = vsel %vm406, %v405, %v399
    %v408 = vsel %vm406, 4, %v400
    %409 = vset.pattern.permute.xlu0 5
    %410 = vperm.xlu0 %409, %v368
    %v411 = vpop.permute.xlu0 %410
    %v413 = vadd.f32 %v411, %v245
    %vm414 = vcmp.gt.f32.partialorder %v413, %v407
    %v415 = vsel %vm414, %v413, %v407
    %v416 = vsel %vm414, 5, %v408
    %417 = vset.pattern.permute.xlu0 4
    %418 = vperm.xlu0 %417, %v251
    %v419 = vpop.permute.xlu0 %418
    %vm420 = vcmp.eq.s32.totalorder %v419, 1
    %v421 = vsel %vm420, %v416, %v169
    %v422 = vadd.f32 %v415, %v148
    %v423 = vsel %vm420, %v422, %v368
    %425 = vset.pattern.permute.xlu0 0
    %426 = vperm.xlu0 %425, %v423
    %v427 = vpop.permute.xlu0 %426
    %v429 = vadd.f32 %v427, %v186
    %vm430 = vcmp.gt.f32.partialorder %v429, -1e+30
    %v431 = vsel %vm430, %v429, -1e+30
    %432 = vset.pattern.permute.xlu0 1
    %433 = vperm.xlu0 %432, %v423
    %v434 = vpop.permute.xlu0 %433
    %v436 = vadd.f32 %v434, %v197
    %vm437 = vcmp.gt.f32.partialorder %v436, %v431
    %v438 = vsel %vm437, %v436, %v431
    %v439 = vsel %vm437, 1, 0
    %440 = vset.pattern.permute.xlu0 2
    %441 = vperm.xlu0 %440, %v423
    %v442 = vpop.permute.xlu0 %441
    %v444 = vadd.f32 %v442, %v209
    %vm445 = vcmp.gt.f32.partialorder %v444, %v438
    %v446 = vsel %vm445, %v444, %v438
    %v447 = vsel %vm445, 2, %v439
    %448 = vset.pattern.permute.xlu0 3
    %449 = vperm.xlu0 %448, %v423
    %v450 = vpop.permute.xlu0 %449
    %v452 = vadd.f32 %v450, %v221
    %vm453 = vcmp.gt.f32.partialorder %v452, %v446
    %v454 = vsel %vm453, %v452, %v446
    %v455 = vsel %vm453, 3, %v447
    %456 = vset.pattern.permute.xlu0 4
    %457 = vperm.xlu0 %456, %v423
    %v458 = vpop.permute.xlu0 %457
    %v460 = vadd.f32 %v458, %v233
    %vm461 = vcmp.gt.f32.partialorder %v460, %v454
    %v462 = vsel %vm461, %v460, %v454
    %v463 = vsel %vm461, 4, %v455
    %464 = vset.pattern.permute.xlu0 5
    %465 = vperm.xlu0 %464, %v423
    %v466 = vpop.permute.xlu0 %465
    %v468 = vadd.f32 %v466, %v245
    %vm469 = vcmp.gt.f32.partialorder %v468, %v462
    %v470 = vsel %vm469, %v468, %v462
    %v471 = vsel %vm469, 5, %v463
    %472 = vset.pattern.permute.xlu0 5
    %473 = vperm.xlu0 %472, %v251
    %v474 = vpop.permute.xlu0 %473
    %vm475 = vcmp.eq.s32.totalorder %v474, 1
    %v476 = vsel %vm475, %v471, %v169
    %v477 = vadd.f32 %v470, %v156
    %v478 = vsel %vm475, %v477, %v423
    %480 = vset.pattern.permute.xlu0 0
    %481 = vperm.xlu0 %480, %v478
    %v482 = vpop.permute.xlu0 %481
    %v484 = vadd.f32 %v482, %v186
    %vm485 = vcmp.gt.f32.partialorder %v484, -1e+30
    %v486 = vsel %vm485, %v484, -1e+30
    %487 = vset.pattern.permute.xlu0 1
    %488 = vperm.xlu0 %487, %v478
    %v489 = vpop.permute.xlu0 %488
    %v491 = vadd.f32 %v489, %v197
    %vm492 = vcmp.gt.f32.partialorder %v491, %v486
    %v493 = vsel %vm492, %v491, %v486
    %v494 = vsel %vm492, 1, 0
    %495 = vset.pattern.permute.xlu0 2
    %496 = vperm.xlu0 %495, %v478
    %v497 = vpop.permute.xlu0 %496
    %v499 = vadd.f32 %v497, %v209
    %vm500 = vcmp.gt.f32.partialorder %v499, %v493
    %v501 = vsel %vm500, %v499, %v493
    %v502 = vsel %vm500, 2, %v494
    %503 = vset.pattern.permute.xlu0 3
    %504 = vperm.xlu0 %503, %v478
    %v505 = vpop.permute.xlu0 %504
    %v507 = vadd.f32 %v505, %v221
    %vm508 = vcmp.gt.f32.partialorder %v507, %v501
    %v509 = vsel %vm508, %v507, %v501
    %v510 = vsel %vm508, 3, %v502
    %511 = vset.pattern.permute.xlu0 4
    %512 = vperm.xlu0 %511, %v478
    %v513 = vpop.permute.xlu0 %512
    %v515 = vadd.f32 %v513, %v233
    %vm516 = vcmp.gt.f32.partialorder %v515, %v509
    %v517 = vsel %vm516, %v515, %v509
    %v518 = vsel %vm516, 4, %v510
    %519 = vset.pattern.permute.xlu0 5
    %520 = vperm.xlu0 %519, %v478
    %v521 = vpop.permute.xlu0 %520
    %v523 = vadd.f32 %v521, %v245
    %vm524 = vcmp.gt.f32.partialorder %v523, %v517
    %v525 = vsel %vm524, %v523, %v517
    %v526 = vsel %vm524, 5, %v518
    %527 = vset.pattern.permute.xlu0 6
    %528 = vperm.xlu0 %527, %v251
    %v529 = vpop.permute.xlu0 %528
    %vm530 = vcmp.eq.s32.totalorder %v529, 1
    %v531 = vsel %vm530, %v526, %v169
    %v532 = vadd.f32 %v525, %v155
    %v533 = vsel %vm530, %v532, %v478
    %535 = vset.pattern.permute.xlu0 0
    %536 = vperm.xlu0 %535, %v533
    %v537 = vpop.permute.xlu0 %536
    %v539 = vadd.f32 %v537, %v186
    %vm540 = vcmp.gt.f32.partialorder %v539, -1e+30
    %v541 = vsel %vm540, %v539, -1e+30
    %542 = vset.pattern.permute.xlu0 1
    %543 = vperm.xlu0 %542, %v533
    %v544 = vpop.permute.xlu0 %543
    %v546 = vadd.f32 %v544, %v197
    %vm547 = vcmp.gt.f32.partialorder %v546, %v541
    %v548 = vsel %vm547, %v546, %v541
    %v549 = vsel %vm547, 1, 0
    %550 = vset.pattern.permute.xlu0 2
    %551 = vperm.xlu0 %550, %v533
    %v552 = vpop.permute.xlu0 %551
    %v554 = vadd.f32 %v552, %v209
    %vm555 = vcmp.gt.f32.partialorder %v554, %v548
    %v556 = vsel %vm555, %v554, %v548
    %v557 = vsel %vm555, 2, %v549
    %558 = vset.pattern.permute.xlu0 3
    %559 = vperm.xlu0 %558, %v533
    %v560 = vpop.permute.xlu0 %559
    %v562 = vadd.f32 %v560, %v221
    %vm563 = vcmp.gt.f32.partialorder %v562, %v556
    %v564 = vsel %vm563, %v562, %v556
    %v565 = vsel %vm563, 3, %v557
    %566 = vset.pattern.permute.xlu0 4
    %567 = vperm.xlu0 %566, %v533
    %v568 = vpop.permute.xlu0 %567
    %v570 = vadd.f32 %v568, %v233
    %vm571 = vcmp.gt.f32.partialorder %v570, %v564
    %v572 = vsel %vm571, %v570, %v564
    %v573 = vsel %vm571, 4, %v565
    %574 = vset.pattern.permute.xlu0 5
    %575 = vperm.xlu0 %574, %v533
    %v576 = vpop.permute.xlu0 %575
    %v578 = vadd.f32 %v576, %v245
    %vm579 = vcmp.gt.f32.partialorder %v578, %v572
    %v580 = vsel %vm579, %v578, %v572
    %v581 = vsel %vm579, 5, %v573
    %582 = vset.pattern.permute.xlu0 7
    %583 = vperm.xlu0 %582, %v251
    %v584 = vpop.permute.xlu0 %583
    %vm585 = vcmp.eq.s32.totalorder %v584, 1
    %v586 = vsel %vm585, %v581, %v169
    %v587 = vadd.f32 %v580, %v157
    %v588 = vsel %vm585, %v587, %v533
    %v589 = vld [vmem:[%s5] sm:$0x1]
    %v591 = vlaneseq
    %v592 = vshrl.u32 %v591, 7
    %v593 = vsub.s32 0, %v592
    %v594 = vrot.slane %v589, %v593
    %v596 = vadd.f32 %v588, %v594
    %vm597 = vcmp.gt.f32.partialorder %v596, -1e+30
    %v598 = vsel %vm597, %v596, -1e+30
    %600 = vrot.lane.b32.xlu0 %v598, 1
    %v601 = vpop.permute.xlu0 %600
    %vm603 = vcmp.gt.f32.partialorder %v596, %v601
    %v604 = vsel %vm603, %v596, %v601
    %v605 = vsel %vm603, 1, 0
    %607 = vrot.lane.b32.xlu0 %v604, 1
    %v608 = vpop.permute.xlu0 %607
    %vm610 = vcmp.gt.f32.partialorder %v596, %v608
    %v611 = vsel %vm610, %v596, %v608
    %612 = vrot.lane.b32.xlu0 %v605, 1
    %v613 = vpop.permute.xlu0 %612
    %v614 = vsel %vm610, 2, %v613
    %616 = vrot.lane.b32.xlu0 %v611, 1
    %v617 = vpop.permute.xlu0 %616
    %vm619 = vcmp.gt.f32.partialorder %v596, %v617
    %v620 = vsel %vm619, %v596, %v617
    %621 = vrot.lane.b32.xlu0 %v614, 1
    %v622 = vpop.permute.xlu0 %621
    %v623 = vsel %vm619, 3, %v622
    %625 = vrot.lane.b32.xlu0 %v620, 1
    %v626 = vpop.permute.xlu0 %625
    %vm628 = vcmp.gt.f32.partialorder %v596, %v626
    %v629 = vsel %vm628, %v596, %v626
    %630 = vrot.lane.b32.xlu0 %v623, 1
    %v631 = vpop.permute.xlu0 %630
    %v632 = vsel %vm628, 4, %v631
    %634 = vrot.lane.b32.xlu0 %v629, 1
    %v635 = vpop.permute.xlu0 %634
    %vm637 = vcmp.gt.f32.partialorder %v596, %v635
    %638 = vrot.lane.b32.xlu0 %v632, 1
    %v639 = vpop.permute.xlu0 %638
    %v640 = vsel %vm637, 5, %v639
    %vm641 = vcmp.eq.s32.totalorder %v169, 7
    %642 = vset.pattern.permute.xlu0 5
    %643 = vperm.xlu0 %642, %v640
    %v644 = vpop.permute.xlu0 %643
    %v645 = vsel %vm641, %v644, 0
    %vm646 = vcmp.eq.s32.totalorder %v169, %v644
    %v647 = vsel %vm646, %v586, 0
    %vm648 = vcmask 41984
    %v649 = vsel %vm648, %v647, 0
    %v650 = vand.u32 %v649, 65535
    %v651 = vshrl.u32 %v649, 16
    %v652 = vcvt.s32.f32 %v650
    %v653 = vcvt.s32.f32 %v651
    %654 = vadd.xlane.f32.xlu0 %v652
    %v655 = vpop.xlane.xlu0 %654
    %656 = vadd.xlane.f32.xlu0 %v653
    %v657 = vpop.xlane.xlu0 %656
    %v658 = vcvt.f32.s32 %v655
    %v659 = vcvt.f32.s32 %v657
    %v660 = vshll.u32 %v659, 16
    %v661 = vadd.s32 %v660, %v658
    %vm662 = vcmp.eq.s32.totalorder %v169, 6
    %v663 = vsel %vm662, %v661, %v645
    %vm664 = vcmp.eq.s32.totalorder %v169, %v661
    %v665 = vsel %vm664, %v531, 0
    %v666 = vsel %vm648, %v665, 0
    %v667 = vand.u32 %v666, 65535
    %v668 = vshrl.u32 %v666, 16
    %v669 = vcvt.s32.f32 %v667
    %v670 = vcvt.s32.f32 %v668
    %671 = vadd.xlane.f32.xlu0 %v669
    %v672 = vpop.xlane.xlu0 %671
    %673 = vadd.xlane.f32.xlu0 %v670
    %v674 = vpop.xlane.xlu0 %673
    %v675 = vcvt.f32.s32 %v672
    %v676 = vcvt.f32.s32 %v674
    %v677 = vshll.u32 %v676, 16
    %v678 = vadd.s32 %v677, %v675
    %vm679 = vcmp.eq.s32.totalorder %v169, 5
    %v680 = vsel %vm679, %v678, %v663
    %vm681 = vcmp.eq.s32.totalorder %v169, %v678
    %v682 = vsel %vm681, %v476, 0
    %v683 = vsel %vm648, %v682, 0
    %v684 = vand.u32 %v683, 65535
    %v685 = vshrl.u32 %v683, 16
    %v686 = vcvt.s32.f32 %v684
    %v687 = vcvt.s32.f32 %v685
    %688 = vadd.xlane.f32.xlu0 %v686
    %v689 = vpop.xlane.xlu0 %688
    %690 = vadd.xlane.f32.xlu0 %v687
    %v691 = vpop.xlane.xlu0 %690
    %v692 = vcvt.f32.s32 %v689
    %v693 = vcvt.f32.s32 %v691
    %v694 = vshll.u32 %v693, 16
    %v695 = vadd.s32 %v694, %v692
    %vm696 = vcmp.eq.s32.totalorder %v169, 4
    %v697 = vsel %vm696, %v695, %v680
    %vm698 = vcmp.eq.s32.totalorder %v169, %v695
    %v699 = vsel %vm698, %v421, 0
    %v700 = vsel %vm648, %v699, 0
    %v701 = vand.u32 %v700, 65535
    %v702 = vshrl.u32 %v700, 16
    %v703 = vcvt.s32.f32 %v701
    %v704 = vcvt.s32.f32 %v702
    %705 = vadd.xlane.f32.xlu0 %v703
    %v706 = vpop.xlane.xlu0 %705
    %707 = vadd.xlane.f32.xlu0 %v704
    %v708 = vpop.xlane.xlu0 %707
    %v709 = vcvt.f32.s32 %v706
    %v710 = vcvt.f32.s32 %v708
    %v711 = vshll.u32 %v710, 16
    %v712 = vadd.s32 %v711, %v709
    %vm713 = vcmp.eq.s32.totalorder %v169, 3
    %v714 = vsel %vm713, %v712, %v697
    %vm715 = vcmp.eq.s32.totalorder %v169, %v712
    %v716 = vsel %vm715, %v366, 0
    %v717 = vsel %vm648, %v716, 0
    %v718 = vand.u32 %v717, 65535
    %v719 = vshrl.u32 %v717, 16
    %v720 = vcvt.s32.f32 %v718
    %v721 = vcvt.s32.f32 %v719
    %722 = vadd.xlane.f32.xlu0 %v720
    %v723 = vpop.xlane.xlu0 %722
    %724 = vadd.xlane.f32.xlu0 %v721
    %v725 = vpop.xlane.xlu0 %724
    %v726 = vcvt.f32.s32 %v723
    %v727 = vcvt.f32.s32 %v725
    %v728 = vshll.u32 %v727, 16
    %v729 = vadd.s32 %v728, %v726
    %vm730 = vcmp.eq.s32.totalorder %v169, 2
    %v731 = vsel %vm730, %v729, %v714
    %vm732 = vcmp.eq.s32.totalorder %v169, %v729
    %v733 = vsel %vm732, %v311, 0
    %v734 = vsel %vm648, %v733, 0
    %v735 = vand.u32 %v734, 65535
    %v736 = vshrl.u32 %v734, 16
    %v737 = vcvt.s32.f32 %v735
    %v738 = vcvt.s32.f32 %v736
    %739 = vadd.xlane.f32.xlu0 %v737
    %v740 = vpop.xlane.xlu0 %739
    %741 = vadd.xlane.f32.xlu0 %v738
    %v742 = vpop.xlane.xlu0 %741
    %v743 = vcvt.f32.s32 %v740
    %v744 = vcvt.f32.s32 %v742
    %v745 = vshll.u32 %v744, 16
    %v746 = vadd.s32 %v745, %v743
    %vm747 = vcmp.eq.s32.totalorder %v169, 1
    %v748 = vsel %vm747, %v746, %v731
    %vm749 = vcmp.eq.s32.totalorder %v169, %v746
    %v750 = vsel %vm749, %v256, 0
    %v751 = vsel %vm648, %v750, 0
    %v752 = vand.u32 %v751, 65535
    %v753 = vshrl.u32 %v751, 16
    %v754 = vcvt.s32.f32 %v752
    %v755 = vcvt.s32.f32 %v753
    %756 = vadd.xlane.f32.xlu0 %v754
    %v757 = vpop.xlane.xlu0 %756
    %758 = vadd.xlane.f32.xlu0 %v755
    %v759 = vpop.xlane.xlu0 %758
    %v760 = vcvt.f32.s32 %v757
    %v761 = vcvt.f32.s32 %v759
    %v762 = vshll.u32 %v761, 16
    %v763 = vadd.s32 %v762, %v760
    %vm764 = vcmp.eq.s32.totalorder %v169, 0
    %v765 = vsel %vm764, %v763, %v748
    %vm766 = vcmask 58368
    %767 = vst.msk [vmem:[#allocation2] sm:$0x3] %vm766, %v765
    // Predicated region
    $region30: #{bert_crf_decode.3} parent=1 // pred_check
      _
    $region31: #{bert_crf_decode.3} parent=1 // pred_check_branch
      %769 = sbr.rel (0) target = $region33
    $region32: #{bert_crf_decode.3} parent=1 // pred_region
      %s771 = ssub.s32 32, 32
      %772 = vsyncadd [#allocation3], %s771
      %s774 = sshll.u32 [#allocation2], 4
      %s775 = int_to_ptr.vmem [resolvable:$true] %s774
      %777 = dma.vmem_to_hbm [thread:$0]  %s775, 32, %s7, [#allocation3]
    $region33: #{bert_crf_decode.3} parent=1 // pred_fallthru
      _
    // Predicated region
    $region34: #{bert_crf_decode.3} parent=1 // pred_check
      _
    $region35: #{bert_crf_decode.3} parent=1 // pred_check_branch
      %779 = sbr.rel (0) target = $region37
    $region36: #{bert_crf_decode.3} parent=1 // pred_region
      %780 = dma.done [#allocation3], 32
    $region37: #{bert_crf_decode.3} parent=1 // pred_fallthru
      _
    %781 = vsyncpa [#allocation3], 1

// kernel: bert_crf_decode.2
$region0: #{bert_crf_decode.2}
  #allocation0 [shape = 'u32[]', space=smem, size = 0x4, offset = 0x4, fixed_abs, tag = 'smem constant byte address 0x4 - core index']
  #allocation1 [shape = 'u32[144,128]{1,0:T(1,128)}', space=vmem, size = 0x12000, scoped, tag = 'internal scratch']
  %s0 = inlined_call_operand.vmem [shape: f32[2,1,8], index: 0, kind: input, shape index: {}]
  %s1 = inlined_call_operand.vmem [shape: f32[16,32], index: 1, kind: input, shape index: {}]
  %s2 = inlined_call_operand.vmem [shape: bf16[2,32,96], index: 2, kind: input, shape index: {}]
  %s3 = inlined_call_operand.vmem [shape: f32[2,1,96], index: 3, kind: input, shape index: {}]
  %s4 = inlined_call_operand.vmem [shape: bf16[2,32,32], index: 4, kind: input, shape index: {}]
  %s5 = inlined_call_operand.vmem [shape: f32[2,1,32], index: 5, kind: input, shape index: {}]
  %s6 = inlined_call_operand.vmem [shape: f32[2,1,32], index: 6, kind: input, shape index: {}]
  %s7 = inlined_call_operand.vmem [shape: f32[2,1,32], index: 7, kind: input, shape index: {}]
  %s8 = inlined_call_operand.vmem [shape: bf16[2,32,64], index: 8, kind: input, shape index: {}]
  %s9 = inlined_call_operand.vmem [shape: f32[2,1,64], index: 9, kind: input, shape index: {}]
  %s10 = inlined_call_operand.vmem [shape: bf16[2,64,32], index: 10, kind: input, shape index: {}]
  %s11 = inlined_call_operand.vmem [shape: f32[2,1,32], index: 11, kind: input, shape index: {}]
  %s12 = inlined_call_operand.vmem [shape: f32[2,1,32], index: 12, kind: input, shape index: {}]
  %s13 = inlined_call_operand.vmem [shape: f32[2,1,32], index: 13, kind: input, shape index: {}]
  %s14 = inlined_call_operand.vmem [shape: f32[16,32], index: 14, kind: output, shape index: {}]
  %s15 = sld [smem:[#allocation0]]
  $region93: #{bert_crf_decode.2} parent=0
    _
  %s17 = ssub.s32 1, %s15
  %s18 = scalar_select 0, %s17, %s15
  loop: start=0, step=1, limit=4
  $region2: #{bert_crf_decode.2} parent=0 // loop_pre_header
    _
  $region3: #{bert_crf_decode.2} parent=0 // loop_header
    %s20 = sphi 0, %s24
    %p21 = scmp.ge.s32.totalorder %s20, 4
    %s28 = sphi 0, %s28
    %s30 = sphi 0, %s28
    %s31 = sphi 0, %s30
    %s45 = sphi 0, %s31
    %s49 = sphi 0, %s49
    %s51 = sphi 0, %s49
    %s52 = sphi 0, %s51
    %s66 = sphi 0, %s52
    %s72 = sphi 0, %s74
    %s75 = sphi 0, %s72
    %s76 = sphi 0, %s75
    %s92 = sphi 0, %s76
    %s98 = sphi 0, %s100
    %s101 = sphi 0, %s98
    %s102 = sphi 0, %s101
    %s118 = sphi 0, %s102
    %s124 = sphi 0, %s126
    %s127 = sphi 0, %s124
    %s128 = sphi 0, %s127
    %s144 = sphi 0, %s128
    %s150 = sphi 0, %s152
    %s153 = sphi 0, %s150
    %s154 = sphi 0, %s153
    %s170 = sphi 0, %s154
    %s176 = sphi 0, %s178
    %s179 = sphi 0, %s176
    %s180 = sphi 0, %s179
    %s196 = sphi 0, %s180
    %s202 = sphi 0, %s204
    %s205 = sphi 0, %s202
    %s206 = sphi 0, %s205
    %s222 = sphi 0, %s206
    %s228 = sphi 0, %s230
    %s231 = sphi 0, %s228
    %s232 = sphi 0, %s231
    %s248 = sphi 0, %s232
    %s254 = sphi 0, %s256
    %s257 = sphi 0, %s254
    %s258 = sphi 0, %s257
    %s274 = sphi 0, %s258
    %s280 = sphi 0, %s282
    %s283 = sphi 0, %s280
    %s284 = sphi 0, %s283
    %s300 = sphi 0, %s284
    %s306 = sphi 0, %s308
    %s309 = sphi 0, %s306
    %s310 = sphi 0, %s309
    %s326 = sphi 0, %s310
    %s332 = sphi 0, %s334
    %s335 = sphi 0, %s332
    %s336 = sphi 0, %s335
    %s352 = sphi 0, %s336
    %s358 = sphi 0, %s360
    %s361 = sphi 0, %s358
    %s362 = sphi 0, %s361
    %s378 = sphi 0, %s362
    %s382 = sphi 0, %s382
    %s384 = sphi 0, %s382
    %s385 = sphi 0, %s384
    %s399 = sphi 0, %s385
  $region4: #{bert_crf_decode.2} parent=0 // loop_header_branch
    %23 = sbr.rel (%p21) target = $region8
  $region5: #{bert_crf_decode.2} parent=0 // loop_body
    %s25 = ssub.s32 %s20, 1
    %s26 = ssub.s32 %s20, 2
    %s27 = sadd.s32 %s20, 1
    %s29 = sadd.s32 %s28, 1
    %p32 = scmp.eq.s32.totalorder %s20, 1
    %p33 = scmp.ne.s32.totalorder %s28, %s30
    %p34 = scmp.eq.s32.totalorder %s20, 0
    %p35 = por %p33, %p34
    %p36 = scmp.ne.s32.totalorder %s28, %s30
    %p37 = scmp.eq.s32.totalorder %s25, 1
    %p38 = por %p36, %p37
    %p39 = scmp.ne.s32.totalorder %s30, %s31
    %p40 = scmp.eq.s32.totalorder %s25, 0
    %p41 = por %p39, %p40
    %p42 = scmp.ne.s32.totalorder %s30, %s31
    %p43 = scmp.eq.s32.totalorder %s26, 1
    %p44 = por %p42, %p43
    %p46 = scmp.ne.s32.totalorder %s31, %s45
    %p47 = scmp.eq.s32.totalorder %s26, 0
    %p48 = por %p46, %p47
    %s50 = sadd.s32 %s49, 1
    %p53 = scmp.eq.s32.totalorder %s20, 1
    %p54 = scmp.ne.s32.totalorder %s49, %s51
    %p55 = scmp.eq.s32.totalorder %s20, 0
    %p56 = por %p54, %p55
    %p57 = scmp.ne.s32.totalorder %s49, %s51
    %p58 = scmp.eq.s32.totalorder %s25, 1
    %p59 = por %p57, %p58
    %p60 = scmp.ne.s32.totalorder %s51, %s52
    %p61 = scmp.eq.s32.totalorder %s25, 0
    %p62 = por %p60, %p61
    %p63 = scmp.ne.s32.totalorder %s51, %s52
    %p64 = scmp.eq.s32.totalorder %s26, 1
    %p65 = por %p63, %p64
    %p67 = scmp.ne.s32.totalorder %s52, %s66
    %p68 = scmp.eq.s32.totalorder %s26, 0
    %p69 = por %p67, %p68
    %s70 = ssub.s32 %s20, %s27
    %p71 = scmp.eq.s32.totalorder %s70, 0
    %s73 = sadd.s32 %s72, 1
    %s74 = scalar_select %p71, %s72, %s73
    %p77 = pneg %p71
    %p78 = scmp.eq.s32.totalorder %s20, 1
    %p79 = por %p77, %p78
    %p80 = scmp.ne.s32.totalorder %s72, %s75
    %p81 = scmp.eq.s32.totalorder %s20, 0
    %p82 = por %p80, %p81
    %p83 = scmp.ne.s32.totalorder %s72, %s75
    %p84 = scmp.eq.s32.totalorder %s25, 1
    %p85 = por %p83, %p84
    %p86 = scmp.ne.s32.totalorder %s75, %s76
    %p87 = scmp.eq.s32.totalorder %s25, 0
    %p88 = por %p86, %p87
    %p89 = scmp.ne.s32.totalorder %s75, %s76
    %p90 = scmp.eq.s32.totalorder %s26, 1
    %p91 = por %p89, %p90
    %p93 = scmp.ne.s32.totalorder %s76, %s92
    %p94 = scmp.eq.s32.totalorder %s26, 0
    %p95 = por %p93, %p94
    %s96 = ssub.s32 %s20, %s27
    %p97 = scmp.eq.s32.totalorder %s96, 0
    %s99 = sadd.s32 %s98, 1
    %s100 = scalar_select %p97, %s98, %s99
    %p103 = pneg %p97
    %p104 = scmp.eq.s32.totalorder %s20, 1
    %p105 = por %p103, %p104
    %p106 = scmp.ne.s32.totalorder %s98, %s101
    %p107 = scmp.eq.s32.totalorder %s20, 0
    %p108 = por %p106, %p107
    %p109 = scmp.ne.s32.totalorder %s98, %s101
    %p110 = scmp.eq.s32.totalorder %s25, 1
    %p111 = por %p109, %p110
    %p112 = scmp.ne.s32.totalorder %s101, %s102
    %p113 = scmp.eq.s32.totalorder %s25, 0
    %p114 = por %p112, %p113
    %p115 = scmp.ne.s32.totalorder %s101, %s102
    %p116 = scmp.eq.s32.totalorder %s26, 1
    %p117 = por %p115, %p116
    %p119 = scmp.ne.s32.totalorder %s102, %s118
    %p120 = scmp.eq.s32.totalorder %s26, 0
    %p121 = por %p119, %p120
    %s122 = ssub.s32 %s20, %s27
    %p123 = scmp.eq.s32.totalorder %s122, 0
    %s125 = sadd.s32 %s124, 1
    %s126 = scalar_select %p123, %s124, %s125
    %p129 = pneg %p123
    %p130 = scmp.eq.s32.totalorder %s20, 1
    %p131 = por %p129, %p130
    %p132 = scmp.ne.s32.totalorder %s124, %s127
    %p133 = scmp.eq.s32.totalorder %s20, 0
    %p134 = por %p132, %p133
    %p135 = scmp.ne.s32.totalorder %s124, %s127
    %p136 = scmp.eq.s32.totalorder %s25, 1
    %p137 = por %p135, %p136
    %p138 = scmp.ne.s32.totalorder %s127, %s128
    %p139 = scmp.eq.s32.totalorder %s25, 0
    %p140 = por %p138, %p139
    %p141 = scmp.ne.s32.totalorder %s127, %s128
    %p142 = scmp.eq.s32.totalorder %s26, 1
    %p143 = por %p141, %p142
    %p145 = scmp.ne.s32.totalorder %s128, %s144
    %p146 = scmp.eq.s32.totalorder %s26, 0
    %p147 = por %p145, %p146
    %s148 = ssub.s32 %s20, %s27
    %p149 = scmp.eq.s32.totalorder %s148, 0
    %s151 = sadd.s32 %s150, 1
    %s152 = scalar_select %p149, %s150, %s151
    %p155 = pneg %p149
    %p156 = scmp.eq.s32.totalorder %s20, 1
    %p157 = por %p155, %p156
    %p158 = scmp.ne.s32.totalorder %s150, %s153
    %p159 = scmp.eq.s32.totalorder %s20, 0
    %p160 = por %p158, %p159
    %p161 = scmp.ne.s32.totalorder %s150, %s153
    %p162 = scmp.eq.s32.totalorder %s25, 1
    %p163 = por %p161, %p162
    %p164 = scmp.ne.s32.totalorder %s153, %s154
    %p165 = scmp.eq.s32.totalorder %s25, 0
    %p166 = por %p164, %p165
    %p167 = scmp.ne.s32.totalorder %s153, %s154
    %p168 = scmp.eq.s32.totalorder %s26, 1
    %p169 = por %p167, %p168
    %p171 = scmp.ne.s32.totalorder %s154, %s170
    %p172 = scmp.eq.s32.totalorder %s26, 0
    %p173 = por %p171, %p172
    %s174 = ssub.s32 %s20, %s27
    %p175 = scmp.eq.s32.totalorder %s174, 0
    %s177 = sadd.s32 %s176, 1
    %s178 = scalar_select %p175, %s176, %s177
    %p181 = pneg %p175
    %p182 = scmp.eq.s32.totalorder %s20, 1
    %p183 = por %p181, %p182
    %p184 = scmp.ne.s32.totalorder %s176, %s179
    %p185 = scmp.eq.s32.totalorder %s20, 0
    %p186 = por %p184, %p185
    %p187 = scmp.ne.s32.totalorder %s176, %s179
    %p188 = scmp.eq.s32.totalorder %s25, 1
    %p189 = por %p187, %p188
    %p190 = scmp.ne.s32.totalorder %s179, %s180
    %p191 = scmp.eq.s32.totalorder %s25, 0
    %p192 = por %p190, %p191
    %p193 = scmp.ne.s32.totalorder %s179, %s180
    %p194 = scmp.eq.s32.totalorder %s26, 1
    %p195 = por %p193, %p194
    %p197 = scmp.ne.s32.totalorder %s180, %s196
    %p198 = scmp.eq.s32.totalorder %s26, 0
    %p199 = por %p197, %p198
    %s200 = ssub.s32 %s20, %s27
    %p201 = scmp.eq.s32.totalorder %s200, 0
    %s203 = sadd.s32 %s202, 1
    %s204 = scalar_select %p201, %s202, %s203
    %p207 = pneg %p201
    %p208 = scmp.eq.s32.totalorder %s20, 1
    %p209 = por %p207, %p208
    %p210 = scmp.ne.s32.totalorder %s202, %s205
    %p211 = scmp.eq.s32.totalorder %s20, 0
    %p212 = por %p210, %p211
    %p213 = scmp.ne.s32.totalorder %s202, %s205
    %p214 = scmp.eq.s32.totalorder %s25, 1
    %p215 = por %p213, %p214
    %p216 = scmp.ne.s32.totalorder %s205, %s206
    %p217 = scmp.eq.s32.totalorder %s25, 0
    %p218 = por %p216, %p217
    %p219 = scmp.ne.s32.totalorder %s205, %s206
    %p220 = scmp.eq.s32.totalorder %s26, 1
    %p221 = por %p219, %p220
    %p223 = scmp.ne.s32.totalorder %s206, %s222
    %p224 = scmp.eq.s32.totalorder %s26, 0
    %p225 = por %p223, %p224
    %s226 = ssub.s32 %s20, %s27
    %p227 = scmp.eq.s32.totalorder %s226, 0
    %s229 = sadd.s32 %s228, 1
    %s230 = scalar_select %p227, %s228, %s229
    %p233 = pneg %p227
    %p234 = scmp.eq.s32.totalorder %s20, 1
    %p235 = por %p233, %p234
    %p236 = scmp.ne.s32.totalorder %s228, %s231
    %p237 = scmp.eq.s32.totalorder %s20, 0
    %p238 = por %p236, %p237
    %p239 = scmp.ne.s32.totalorder %s228, %s231
    %p240 = scmp.eq.s32.totalorder %s25, 1
    %p241 = por %p239, %p240
    %p242 = scmp.ne.s32.totalorder %s231, %s232
    %p243 = scmp.eq.s32.totalorder %s25, 0
    %p244 = por %p242, %p243
    %p245 = scmp.ne.s32.totalorder %s231, %s232
    %p246 = scmp.eq.s32.totalorder %s26, 1
    %p247 = por %p245, %p246
    %p249 = scmp.ne.s32.totalorder %s232, %s248
    %p250 = scmp.eq.s32.totalorder %s26, 0
    %p251 = por %p249, %p250
    %s252 = ssub.s32 %s20, %s27
    %p253 = scmp.eq.s32.totalorder %s252, 0
    %s255 = sadd.s32 %s254, 1
    %s256 = scalar_select %p253, %s254, %s255
    %p259 = pneg %p253
    %p260 = scmp.eq.s32.totalorder %s20, 1
    %p261 = por %p259, %p260
    %p262 = scmp.ne.s32.totalorder %s254, %s257
    %p263 = scmp.eq.s32.totalorder %s20, 0
    %p264 = por %p262, %p263
    %p265 = scmp.ne.s32.totalorder %s254, %s257
    %p266 = scmp.eq.s32.totalorder %s25, 1
    %p267 = por %p265, %p266
    %p268 = scmp.ne.s32.totalorder %s257, %s258
    %p269 = scmp.eq.s32.totalorder %s25, 0
    %p270 = por %p268, %p269
    %p271 = scmp.ne.s32.totalorder %s257, %s258
    %p272 = scmp.eq.s32.totalorder %s26, 1
    %p273 = por %p271, %p272
    %p275 = scmp.ne.s32.totalorder %s258, %s274
    %p276 = scmp.eq.s32.totalorder %s26, 0
    %p277 = por %p275, %p276
    %s278 = ssub.s32 %s20, %s27
    %p279 = scmp.eq.s32.totalorder %s278, 0
    %s281 = sadd.s32 %s280, 1
    %s282 = scalar_select %p279, %s280, %s281
    %p285 = pneg %p279
    %p286 = scmp.eq.s32.totalorder %s20, 1
    %p287 = por %p285, %p286
    %p288 = scmp.ne.s32.totalorder %s280, %s283
    %p289 = scmp.eq.s32.totalorder %s20, 0
    %p290 = por %p288, %p289
    %p291 = scmp.ne.s32.totalorder %s280, %s283
    %p292 = scmp.eq.s32.totalorder %s25, 1
    %p293 = por %p291, %p292
    %p294 = scmp.ne.s32.totalorder %s283, %s284
    %p295 = scmp.eq.s32.totalorder %s25, 0
    %p296 = por %p294, %p295
    %p297 = scmp.ne.s32.totalorder %s283, %s284
    %p298 = scmp.eq.s32.totalorder %s26, 1
    %p299 = por %p297, %p298
    %p301 = scmp.ne.s32.totalorder %s284, %s300
    %p302 = scmp.eq.s32.totalorder %s26, 0
    %p303 = por %p301, %p302
    %s304 = ssub.s32 %s20, %s27
    %p305 = scmp.eq.s32.totalorder %s304, 0
    %s307 = sadd.s32 %s306, 1
    %s308 = scalar_select %p305, %s306, %s307
    %p311 = pneg %p305
    %p312 = scmp.eq.s32.totalorder %s20, 1
    %p313 = por %p311, %p312
    %p314 = scmp.ne.s32.totalorder %s306, %s309
    %p315 = scmp.eq.s32.totalorder %s20, 0
    %p316 = por %p314, %p315
    %p317 = scmp.ne.s32.totalorder %s306, %s309
    %p318 = scmp.eq.s32.totalorder %s25, 1
    %p319 = por %p317, %p318
    %p320 = scmp.ne.s32.totalorder %s309, %s310
    %p321 = scmp.eq.s32.totalorder %s25, 0
    %p322 = por %p320, %p321
    %p323 = scmp.ne.s32.totalorder %s309, %s310
    %p324 = scmp.eq.s32.totalorder %s26, 1
    %p325 = por %p323, %p324
    %p327 = scmp.ne.s32.totalorder %s310, %s326
    %p328 = scmp.eq.s32.totalorder %s26, 0
    %p329 = por %p327, %p328
    %s330 = ssub.s32 %s20, %s27
    %p331 = scmp.eq.s32.totalorder %s330, 0
    %s333 = sadd.s32 %s332, 1
    %s334 = scalar_select %p331, %s332, %s333
    %p337 = pneg %p331
    %p338 = scmp.eq.s32.totalorder %s20, 1
    %p339 = por %p337, %p338
    %p340 = scmp.ne.s32.totalorder %s332, %s335
    %p341 = scmp.eq.s32.totalorder %s20, 0
    %p342 = por %p340, %p341
    %p343 = scmp.ne.s32.totalorder %s332, %s335
    %p344 = scmp.eq.s32.totalorder %s25, 1
    %p345 = por %p343, %p344
    %p346 = scmp.ne.s32.totalorder %s335, %s336
    %p347 = scmp.eq.s32.totalorder %s25, 0
    %p348 = por %p346, %p347
    %p349 = scmp.ne.s32.totalorder %s335, %s336
    %p350 = scmp.eq.s32.totalorder %s26, 1
    %p351 = por %p349, %p350
    %p353 = scmp.ne.s32.totalorder %s336, %s352
    %p354 = scmp.eq.s32.totalorder %s26, 0
    %p355 = por %p353, %p354
    %s356 = ssub.s32 %s20, %s27
    %p357 = scmp.eq.s32.totalorder %s356, 0
    %s359 = sadd.s32 %s358, 1
    %s360 = scalar_select %p357, %s358, %s359
    %p363 = pneg %p357
    %p364 = scmp.eq.s32.totalorder %s20, 1
    %p365 = por %p363, %p364
    %p366 = scmp.ne.s32.totalorder %s358, %s361
    %p367 = scmp.eq.s32.totalorder %s20, 0
    %p368 = por %p366, %p367
    %p369 = scmp.ne.s32.totalorder %s358, %s361
    %p370 = scmp.eq.s32.totalorder %s25, 1
    %p371 = por %p369, %p370
    %p372 = scmp.ne.s32.totalorder %s361, %s362
    %p373 = scmp.eq.s32.totalorder %s25, 0
    %p374 = por %p372, %p373
    %p375 = scmp.ne.s32.totalorder %s361, %s362
    %p376 = scmp.eq.s32.totalorder %s26, 1
    %p377 = por %p375, %p376
    %p379 = scmp.ne.s32.totalorder %s362, %s378
    %p380 = scmp.eq.s32.totalorder %s26, 0
    %p381 = por %p379, %p380
    %s383 = sadd.s32 %s382, 1
    %p386 = scmp.eq.s32.totalorder %s20, 1
    %p387 = scmp.ne.s32.totalorder %s382, %s384
    %p388 = scmp.eq.s32.totalorder %s20, 0
    %p389 = por %p387, %p388
    %p390 = scmp.ne.s32.totalorder %s382, %s384
    %p391 = scmp.eq.s32.totalorder %s25, 1
    %p392 = por %p390, %p391
    %p393 = scmp.ne.s32.totalorder %s384, %s385
    %p394 = scmp.eq.s32.totalorder %s25, 0
    %p395 = por %p393, %p394
    %p396 = scmp.ne.s32.totalorder %s384, %s385
    %p397 = scmp.eq.s32.totalorder %s26, 1
    %p398 = por %p396, %p397
    %p400 = scmp.ne.s32.totalorder %s385, %s399
    %p401 = scmp.eq.s32.totalorder %s26, 0
    %p402 = por %p400, %p401
    %p403 = scmp.le.s32.totalorder 1, %s20
    %p404 = scmp.lt.s32.totalorder %s20, 3
    %p405 = pnand %p403, %p404
    %p406 = pneg %p405
    // Predicated region
    $region9: #{bert_crf_decode.2} parent=5 // pred_check
      _
    $region10: #{bert_crf_decode.2} parent=5 // pred_check_branch
      %408 = sbr.rel (%p405) target = $region12
    $region11: #{bert_crf_decode.2} parent=5 // pred_region
      %s409 = ssub.s32 %s20, 1
      // Predicated region
      $region13: #{bert_crf_decode.2} parent=11 // pred_check
        %p410 = pneg %p41
      $region14: #{bert_crf_decode.2} parent=11 // pred_check_branch
        %412 = sbr.rel (%p410) target = $region16
      $region15: #{bert_crf_decode.2} parent=11 // pred_region
        _
      $region16: #{bert_crf_decode.2} parent=11 // pred_fallthru
        _
      // Predicated region
      $region17: #{bert_crf_decode.2} parent=11 // pred_check
        %p413 = pneg %p62
      $region18: #{bert_crf_decode.2} parent=11 // pred_check_branch
        %415 = sbr.rel (%p413) target = $region20
      $region19: #{bert_crf_decode.2} parent=11 // pred_region
        _
      $region20: #{bert_crf_decode.2} parent=11 // pred_fallthru
        _
    $region12: #{bert_crf_decode.2} parent=5 // pred_fallthru
      _
    %p416 = scmp.lt.s32.totalorder %s20, 2
    // Predicated region
    $region21: #{bert_crf_decode.2} parent=5 // pred_check
      %p417 = pneg %p416
    $region22: #{bert_crf_decode.2} parent=5 // pred_check_branch
      %419 = sbr.rel (%p417) target = $region24
    $region23: #{bert_crf_decode.2} parent=5 // pred_region
      // Predicated region
      $region25: #{bert_crf_decode.2} parent=23 // pred_check
        %p420 = pneg %p82
      $region26: #{bert_crf_decode.2} parent=23 // pred_check_branch
        %422 = sbr.rel (%p420) target = $region28
      $region27: #{bert_crf_decode.2} parent=23 // pred_region
        %p423 = scmp.lt.s32.totalorder %s20, 1
        %s424 = scalar_select %p423, %s20, 1
        %s425 = smul.addr %s424, 4
        %s426 = smul.addr %s425, 4
        %s427 = scalar_lea.vmem %s2, %s426
      $region28: #{bert_crf_decode.2} parent=23 // pred_fallthru
        _
      // Predicated region
      $region29: #{bert_crf_decode.2} parent=23 // pred_check
        %p428 = pneg %p108
      $region30: #{bert_crf_decode.2} parent=23 // pred_check_branch
        %430 = sbr.rel (%p428) target = $region32
      $region31: #{bert_crf_decode.2} parent=23 // pred_region
        %p431 = scmp.lt.s32.totalorder %s20, 1
        %s432 = scalar_select %p431, %s20, 1
        %s433 = scalar_lea.vmem %s3, %s432
      $region32: #{bert_crf_decode.2} parent=23 // pred_fallthru
        _
      // Predicated region
      $region33: #{bert_crf_decode.2} parent=23 // pred_check
        %p434 = pneg %p134
      $region34: #{bert_crf_decode.2} parent=23 // pred_check_branch
        %436 = sbr.rel (%p434) target = $region36
      $region35: #{bert_crf_decode.2} parent=23 // pred_region
        %p437 = scmp.lt.s32.totalorder %s20, 1
        %s438 = scalar_select %p437, %s20, 1
        %s439 = smul.addr %s438, 4
        %s440 = smul.addr %s439, 4
        %s441 = scalar_lea.vmem %s4, %s440
      $region36: #{bert_crf_decode.2} parent=23 // pred_fallthru
        _
      // Predicated region
      $region37: #{bert_crf_decode.2} parent=23 // pred_check
        %p442 = pneg %p160
      $region38: #{bert_crf_decode.2} parent=23 // pred_check_branch
        %444 = sbr.rel (%p442) target = $region40
      $region39: #{bert_crf_decode.2} parent=23 // pred_region
        %p445 = scmp.lt.s32.totalorder %s20, 1
        %s446 = scalar_select %p445, %s20, 1
        %s447 = scalar_lea.vmem %s5, %s446
      $region40: #{bert_crf_decode.2} parent=23 // pred_fallthru
        _
      // Predicated region
      $region41: #{bert_crf_decode.2} parent=23 // pred_check
        %p448 = pneg %p186
      $region42: #{bert_crf_decode.2} parent=23 // pred_check_branch
        %450 = sbr.rel (%p448) target = $region44
      $region43: #{bert_crf_decode.2} parent=23 // pred_region
        %p451 = scmp.lt.s32.totalorder %s20, 1
        %s452 = scalar_select %p451, %s20, 1
        %s453 = scalar_lea.vmem %s6, %s452
      $region44: #{bert_crf_decode.2} parent=23 // pred_fallthru
        _
      // Predicated region
      $region45: #{bert_crf_decode.2} parent=23 // pred_check
        %p454 = pneg %p212
      $region46: #{bert_crf_decode.2} parent=23 // pred_check_branch
        %456 = sbr.rel (%p454) target = $region48
      $region47: #{bert_crf_decode.2} parent=23 // pred_region
        %p457 = scmp.lt.s32.totalorder %s20, 1
        %s458 = scalar_select %p457, %s20, 1
        %s459 = scalar_lea.vmem %s7, %s458
      $region48: #{bert_crf_decode.2} parent=23 // pred_fallthru
        _
      // Predicated region
      $region49: #{bert_crf_decode.2} parent=23 // pred_check
        %p460 = pneg %p238
      $region50: #{bert_crf_decode.2} parent=23 // pred_check_branch
        %462 = sbr.rel (%p460) target = $region52
      $region51: #{bert_crf_decode.2} parent=23 // pred_region
        %p463 = scmp.lt.s32.totalorder %s20, 1
        %s464 = scalar_select %p463, %s20, 1
        %s465 = smul.addr %s464, 4
        %s466 = smul.addr %s465, 4
        %s467 = scalar_lea.vmem %s8, %s466
      $region52: #{bert_crf_decode.2} parent=23 // pred_fallthru
        _
      // Predicated region
      $region53: #{bert_crf_decode.2} parent=23 // pred_check
        %p468 = pneg %p264
      $region54: #{bert_crf_decode.2} parent=23 // pred_check_branch
        %470 = sbr.rel (%p468) target = $region56
      $region55: #{bert_crf_decode.2} parent=23 // pred_region
        %p471 = scmp.lt.s32.totalorder %s20, 1
        %s472 = scalar_select %p471, %s20, 1
        %s473 = scalar_lea.vmem %s9, %s472
      $region56: #{bert_crf_decode.2} parent=23 // pred_fallthru
        _
      // Predicated region
      $region57: #{bert_crf_decode.2} parent=23 // pred_check
        %p474 = pneg %p290
      $region58: #{bert_crf_decode.2} parent=23 // pred_check_branch
        %476 = sbr.rel (%p474) target = $region60
      $region59: #{bert_crf_decode.2} parent=23 // pred_region
        %p477 = scmp.lt.s32.totalorder %s20, 1
        %s478 = scalar_select %p477, %s20, 1
        %s479 = smul.addr %s478, 8
        %s480 = smul.addr %s479, 4
        %s481 = scalar_lea.vmem %s10, %s480
      $region60: #{bert_crf_decode.2} parent=23 // pred_fallthru
        _
      // Predicated region
      $region61: #{bert_crf_decode.2} parent=23 // pred_check
        %p482 = pneg %p316
      $region62: #{bert_crf_decode.2} parent=23 // pred_check_branch
        %484 = sbr.rel (%p482) target = $region64
      $region63: #{bert_crf_decode.2} parent=23 // pred_region
        %p485 = scmp.lt.s32.totalorder %s20, 1
        %s486 = scalar_select %p485, %s20, 1
        %s487 = scalar_lea.vmem %s11, %s486
      $region64: #{bert_crf_decode.2} parent=23 // pred_fallthru
        _
      // Predicated region
      $region65: #{bert_crf_decode.2} parent=23 // pred_check
        %p488 = pneg %p342
      $region66: #{bert_crf_decode.2} parent=23 // pred_check_branch
        %490 = sbr.rel (%p488) target = $region68
      $region67: #{bert_crf_decode.2} parent=23 // pred_region
        %p491 = scmp.lt.s32.totalorder %s20, 1
        %s492 = scalar_select %p491, %s20, 1
        %s493 = scalar_lea.vmem %s12, %s492
      $region68: #{bert_crf_decode.2} parent=23 // pred_fallthru
        _
      // Predicated region
      $region69: #{bert_crf_decode.2} parent=23 // pred_check
        %p494 = pneg %p368
      $region70: #{bert_crf_decode.2} parent=23 // pred_check_branch
        %496 = sbr.rel (%p494) target = $region72
      $region71: #{bert_crf_decode.2} parent=23 // pred_region
        %p497 = scmp.lt.s32.totalorder %s20, 1
        %s498 = scalar_select %p497, %s20, 1
        %s499 = scalar_lea.vmem %s13, %s498
      $region72: #{bert_crf_decode.2} parent=23 // pred_fallthru
        _
    $region24: #{bert_crf_decode.2} parent=5 // pred_fallthru
      _
    %p500 = scmp.le.s32.totalorder 1, %s20
    %p501 = scmp.lt.s32.totalorder %s20, 3
    %p502 = pnand %p500, %p501
    %p503 = pneg %p502
    // Predicated region
    $region73: #{bert_crf_decode.2} parent=5 // pred_check
      _
    $region74: #{bert_crf_decode.2} parent=5 // pred_check_branch
      %505 = sbr.rel (%p502) target = $region76
    $region75: #{bert_crf_decode.2} parent=5 // pred_region
      %s506 = ssub.s32 %s20, 1
      %p507 = pneg %p41
      %p508 = pneg %p38
      %p509 = pneg %p62
      %p510 = pneg %p59
      %p511 = scmp.lt.s32.totalorder %s25, 1
      %s512 = scalar_select %p511, %s25, 1
      %s513 = smul.addr %s512, 4
      %s514 = smul.addr %s513, 4
      %s515 = scalar_lea.vmem %s2, %s514
      %p516 = pneg %p88
      %p517 = pneg %p85
      %p518 = scmp.lt.s32.totalorder %s25, 1
      %s519 = scalar_select %p518, %s25, 1
      %s520 = scalar_lea.vmem %s3, %s519
      %p521 = pneg %p114
      %p522 = pneg %p111
      %p523 = scmp.lt.s32.totalorder %s25, 1
      %s524 = scalar_select %p523, %s25, 1
      %s525 = smul.addr %s524, 4
      %s526 = smul.addr %s525, 4
      %s527 = scalar_lea.vmem %s4, %s526
      %p528 = pneg %p140
      %p529 = pneg %p137
      %p530 = scmp.lt.s32.totalorder %s25, 1
      %s531 = scalar_select %p530, %s25, 1
      %s532 = scalar_lea.vmem %s5, %s531
      %p533 = pneg %p166
      %p534 = pneg %p163
      %p535 = scmp.lt.s32.totalorder %s25, 1
      %s536 = scalar_select %p535, %s25, 1
      %s537 = scalar_lea.vmem %s6, %s536
      %p538 = pneg %p192
      %p539 = pneg %p189
      %p540 = scmp.lt.s32.totalorder %s25, 1
      %s541 = scalar_select %p540, %s25, 1
      %s542 = scalar_lea.vmem %s7, %s541
      %p543 = pneg %p218
      %p544 = pneg %p215
      %p545 = scmp.lt.s32.totalorder %s25, 1
      %s546 = scalar_select %p545, %s25, 1
      %s547 = smul.addr %s546, 4
      %s548 = smul.addr %s547, 4
      %s549 = scalar_lea.vmem %s8, %s548
      %p550 = pneg %p244
      %p551 = pneg %p241
      %p552 = scmp.lt.s32.totalorder %s25, 1
      %s553 = scalar_select %p552, %s25, 1
      %s554 = scalar_lea.vmem %s9, %s553
      %p555 = pneg %p270
      %p556 = pneg %p267
      %p557 = scmp.lt.s32.totalorder %s25, 1
      %s558 = scalar_select %p557, %s25, 1
      %s559 = smul.addr %s558, 8
      %s560 = smul.addr %s559, 4
      %s561 = scalar_lea.vmem %s10, %s560
      %p562 = pneg %p296
      %p563 = pneg %p293
      %p564 = scmp.lt.s32.totalorder %s25, 1
      %s565 = scalar_select %p564, %s25, 1
      %s566 = scalar_lea.vmem %s11, %s565
      %p567 = pneg %p322
      %p568 = pneg %p319
      %p569 = scmp.lt.s32.totalorder %s25, 1
      %s570 = scalar_select %p569, %s25, 1
      %s571 = scalar_lea.vmem %s12, %s570
      %p572 = pneg %p348
      %p573 = pneg %p345
      %p574 = scmp.lt.s32.totalorder %s25, 1
      %s575 = scalar_select %p574, %s25, 1
      %s576 = scalar_lea.vmem %s13, %s575
      %p577 = pneg %p374
      %p578 = pneg %p371
      %p579 = pneg %p395
      %p580 = pneg %p392
      %p581 = scmp.lt.s32.totalorder %s25, 1
      %s582 = scalar_select %p581, %s25, 1
      %s583 = smul.addr %s582, 4
      %s584 = smul.addr %s583, 4
      %s585 = scalar_lea.vmem %s2, %s584
      %p586 = scmp.lt.s32.totalorder %s25, 1
      %s587 = scalar_select %p586, %s25, 1
      %s588 = scalar_lea.vmem %s3, %s587
      %p589 = scmp.lt.s32.totalorder %s25, 1
      %s590 = scalar_select %p589, %s25, 1
      %s591 = smul.addr %s590, 4
      %s592 = smul.addr %s591, 4
      %s593 = scalar_lea.vmem %s4, %s592
      %p594 = scmp.lt.s32.totalorder %s25, 1
      %s595 = scalar_select %p594, %s25, 1
      %s596 = scalar_lea.vmem %s5, %s595
      %p597 = scmp.lt.s32.totalorder %s25, 1
      %s598 = scalar_select %p597, %s25, 1
      %s599 = scalar_lea.vmem %s6, %s598
      %p600 = scmp.lt.s32.totalorder %s25, 1
      %s601 = scalar_select %p600, %s25, 1
      %s602 = scalar_lea.vmem %s7, %s601
      %p603 = scmp.lt.s32.totalorder %s25, 1
      %s604 = scalar_select %p603, %s25, 1
      %s605 = smul.addr %s604, 4
      %s606 = smul.addr %s605, 4
      %s607 = scalar_lea.vmem %s8, %s606
      %p608 = scmp.lt.s32.totalorder %s25, 1
      %s609 = scalar_select %p608, %s25, 1
      %s610 = scalar_lea.vmem %s9, %s609
      %p611 = scmp.lt.s32.totalorder %s25, 1
      %s612 = scalar_select %p611, %s25, 1
      %s613 = smul.addr %s612, 8
      %s614 = smul.addr %s613, 4
      %s615 = scalar_lea.vmem %s10, %s614
      %p616 = scmp.lt.s32.totalorder %s25, 1
      %s617 = scalar_select %p616, %s25, 1
      %s618 = scalar_lea.vmem %s11, %s617
      %p619 = scmp.lt.s32.totalorder %s25, 1
      %s620 = scalar_select %p619, %s25, 1
      %s621 = scalar_lea.vmem %s12, %s620
      %p622 = scmp.lt.s32.totalorder %s25, 1
      %s623 = scalar_select %p622, %s25, 1
      %s624 = scalar_lea.vmem %s13, %s623
      %p626 = scmp.eq.s32.totalorder %s25, 0
      // Predicated region
      $region77: #{bert_crf_decode.2} parent=75 // pred_check
        %p627 = pneg %p626
      $region78: #{bert_crf_decode.2} parent=75 // pred_check_branch
        %629 = sbr.rel (%p627) target = $region80
      $region79: #{bert_crf_decode.2} parent=75 // pred_region
        %v630 = vld [vmem:[%s1] sm:$0xff]
        %v631 = vld [vmem:[%s1 + $0x8] sm:$0xff]
        %vm632 = vcmask 261120
        %633 = vst.msk [vmem:[%s14] sm:$0xff] %vm632, %v630
        %634 = vst.msk [vmem:[%s14 + $0x8] sm:$0xff] %vm632, %v631
      $region80: #{bert_crf_decode.2} parent=75 // pred_fallthru
        _
      %v635 = vld [vmem:[%s14] sm:$0xff]
      %v636 = vld [vmem:[%s14 + $0x8] sm:$0xff]
      %v637 = vld [vmem:[%s0] sm:$0x1]
      %v638 = vld [vmem:[%s0 + $0x1] sm:$0x1]
      %v639 = vsub.f32 1.0, %v637
      %v640 = vsub.f32 1.0, %v638
      %v641 = vmul.f32 %v639, -10000.0
      %v642 = vmul.f32 %v640, -10000.0
      %v645 = vlaneseq
      %v646 = vshrl.u32 %v645, 7
      %v647 = vsub.s32 0, %v646
      %v648 = vrot.slane %v641, %v647
      %v649 = vlaneseq
      %v650 = vshrl.u32 %v649, 7
      %v651 = vsub.s32 0, %v650
      %v652 = vrot.slane %v642, %v651
      %v655 = vpack.c.bf16 %v636, %v635
      %v656 = vld [vmem:[%s585] sm:$0xf]
      %v657 = vld [vmem:[%s585 + $0x4] sm:$0xf]
      %v658 = vld [vmem:[%s585 + $0x8] sm:$0xf]
      %v659 = vld [vmem:[%s585 + $0xc] sm:$0xf]
      %v660 = vld [vmem:[%s588] sm:$0x1]
      %v662 = vlaneseq
      %v663 = vshrl.u32 %v662, 7
      %v664 = vsub.s32 0, %v663
      %v665 = vrot.slane %v660, %v664
      %v671 = vunpack.c.l.b16 %v656
      %v672 = vunpack.c.l.b16 %v657
      %v673 = vunpack.c.l.b16 %v658
      %v674 = vunpack.c.l.b16 %v659
      %v675 = vpack.c.b16 %v672, %v671
      %v676 = vpack.c.b16 %v674, %v673
      %vm679 = vcmask 261120
      %v681 = vsel %vm679, %v655, 0
      %683 = vmatprep.subr.bf16.mxu0 0
      %684 = vmatpush1.bf16.msra.mxu0 %v675
      %685 = vmatprep.subr.bf16.mxu0 0
      %686 = vmatpush1.bf16.msra.mxu0 %v676
      %687 = vmatprep.subr.bf16.mxu0 0
      %688 = vmatpush1.bf16.msra.mxu0 0
      %689 = vmatprep.subr.bf16.mxu0 0
      %690 = vmatpush1.bf16.msra.mxu0 0
      %691 = vmatprep.subr.bf16.mxu0 0
      %692 = vmatpush1.bf16.msra.mxu0 0
      %693 = vmatprep.subr.bf16.mxu0 0
      %694 = vmatpush1.bf16.msra.mxu0 0
      %695 = vmatprep.subr.bf16.mxu0 0
      %696 = vmatpush1.bf16.msra.mxu0 0
      %697 = vmatprep.subr.bf16.mxu0 0
      %698 = vmatpush1.bf16.msra.mxu0 0
      %699 = vmatprep.subr.bf16.mxu0 0
      %700 = vmatpush1.bf16.msra.mxu0 0
      %701 = vmatprep.subr.bf16.mxu0 0
      %702 = vmatpush1.bf16.msra.mxu0 0
      %703 = vmatprep.subr.bf16.mxu0 0
      %704 = vmatpush1.bf16.msra.mxu0 0
      %705 = vmatprep.subr.bf16.mxu0 0
      %706 = vmatpush1.bf16.msra.mxu0 0
      %707 = vmatprep.subr.bf16.mxu0 0
      %708 = vmatpush1.bf16.msra.mxu0 0
      %709 = vmatprep.subr.bf16.mxu0 0
      %710 = vmatpush1.bf16.msra.mxu0 0
      %711 = vmatprep.subr.bf16.mxu0 0
      %712 = vmatpush1.bf16.msra.mxu0 0
      %713 = vmatprep.subr.bf16.mxu0 0
      %714 = vmatpush1.bf16.msra.mxu0 0
      %715 = vmatprep.mubr.bf16.mxu0 0
      %716 = vmatmul.mubr.bf16.gmra.mrb[0].mxu0 %v681
      %v717 = vpop.f32.mrb[0].mxu0
      %v718 = vadd.f32 %v665, %v717
      %v719 = vpop.f32.mrb[0].mxu0
      %v720 = vpop.f32.mrb[0].mxu0
      %v721 = vadd.f32 %v665, %v720
      %v722 = vpop.f32.mrb[0].mxu0
      %723 = vdwg.mxu0
      %v724 = vld [vmem:[%s593] sm:$0xf]
      %v725 = vld [vmem:[%s593 + $0x4] sm:$0xf]
      %v726 = vld [vmem:[%s593 + $0x8] sm:$0xf]
      %v727 = vld [vmem:[%s593 + $0xc] sm:$0xf]
      %729 = vrot.lane.b32.xlu0 %v718, 96
      %v730 = vpop.permute.xlu0 %729
      %vm731 = vcmask 130048
      %v732 = vsel %vm731, %v718, 0
      %v734 = vsel %vm731, %v730, 0
      %736 = vmatprep.subr.mxu0 0.0
      %737 = vmatpush1.xpose.msra.mxu0 %v734
      %738 = vmatprep.subr.mxu0 0.0
      %739 = vmatpush1.xpose.msra.mxu0 0.0
      %740 = vmatprep.subr.mxu0 0.0
      %741 = vmatpush1.xpose.msra.mxu0 0.0
      %742 = vmatprep.subr.mxu0 0.0
      %743 = vmatpush1.xpose.msra.mxu0 0.0
      %744 = vmatprep.subr.mxu0 0.0
      %745 = vmatpush1.xpose.msra.mxu0 0.0
      %746 = vmatprep.subr.mxu0 0.0
      %747 = vmatpush1.xpose.msra.mxu0 0.0
      %748 = vmatprep.subr.mxu0 0.0
      %749 = vmatpush1.xpose.msra.mxu0 0.0
      %750 = vmatprep.subr.mxu0 0.0
      %751 = vmatpush1.xpose.msra.mxu0 0.0
      %752 = vmatprep.subr.mxu0 0.0
      %753 = vmatpush1.xpose.msra.mxu0 0.0
      %754 = vmatprep.subr.mxu0 0.0
      %755 = vmatpush1.xpose.msra.mxu0 0.0
      %756 = vmatprep.subr.mxu0 0.0
      %757 = vmatpush1.xpose.msra.mxu0 0.0
      %758 = vmatprep.subr.mxu0 0.0
      %759 = vmatpush1.xpose.msra.mxu0 0.0
      %760 = vmatprep.subr.mxu0 0.0
      %761 = vmatpush1.xpose.msra.mxu0 0.0
      %762 = vmatprep.subr.mxu0 0.0
      %763 = vmatpush1.xpose.msra.mxu0 0.0
      %764 = vmatprep.subr.mxu0 0.0
      %765 = vmatpush1.xpose.msra.mxu0 0.0
      %766 = vmatprep.subr.mxu0 0.0
      %767 = vmatpush1.xpose.msra.mxu0 0.0
      %768 = vmatprep.subr.mxu0 0.0
      %769 = vmatpush1.xpose.msra.mxu0 0.0
      %770 = vmatprep.subr.mxu0 0.0
      %771 = vmatpush1.xpose.msra.mxu0 0.0
      %772 = vmatprep.subr.mxu0 0.0
      %773 = vmatpush1.xpose.msra.mxu0 0.0
      %774 = vmatprep.subr.mxu0 0.0
      %775 = vmatpush1.xpose.msra.mxu0 0.0
      %776 = vmatprep.subr.mxu0 0.0
      %777 = vmatpush1.xpose.msra.mxu0 0.0
      %778 = vmatprep.subr.mxu0 0.0
      %779 = vmatpush1.xpose.msra.mxu0 0.0
      %780 = vmatprep.subr.mxu0 0.0
      %781 = vmatpush1.xpose.msra.mxu0 0.0
      %782 = vmatprep.subr.mxu0 0.0
      %783 = vmatpush1.xpose.msra.mxu0 0.0
      %784 = vmatprep.subr.mxu0 0.0
      %785 = vmatpush1.xpose.msra.mxu0 0.0
      %786 = vmatprep.subr.mxu0 0.0
      %787 = vmatpush1.xpose.msra.mxu0 0.0
      %788 = vmatprep.subr.mxu0 0.0
      %789 = vmatpush1.xpose.msra.mxu0 0.0
      %790 = vmatprep.subr.mxu0 0.0
      %791 = vmatpush1.xpose.msra.mxu0 0.0
      %792 = vmatprep.subr.mxu0 0.0
      %793 = vmatpush1.xpose.msra.mxu0 0.0
      %794 = vmatprep.subr.mxu0 0.0
      %795 = vmatpush1.xpose.msra.mxu0 0.0
      %796 = vmatprep.subr.mxu0 0.0
      %797 = vmatpush1.xpose.msra.mxu0 0.0
      %798 = vmatprep.subr.mxu0 0.0
      %799 = vmatpush1.xpose.msra.mxu0 0.0
      %800 = vmatprep.mubr.f32.mxu0 0.0
      %801 = vmatmul.mubr.f32.gmra.mrb[0].mxu0 %v732
      %v802 = vpop.f32.mrb[0].mxu0
      %v803 = vadd.f32 0.0, %v802
      %v804 = vpop.f32.mrb[0].mxu0
      %805 = vdwg.mxu0
      %807 = vrot.lane.b32.xlu0 %v721, 96
      %v808 = vpop.permute.xlu0 %807
      %v809 = vsel %vm731, %v721, 0
      %v811 = vsel %vm731, %v808, 0
      %813 = vmatprep.subr.mxu0 0.0
      %814 = vmatpush1.xpose.msra.mxu0 %v811
      %815 = vmatprep.subr.mxu0 0.0
      %816 = vmatpush1.xpose.msra.mxu0 0.0
      %817 = vmatprep.subr.mxu0 0.0
      %818 = vmatpush1.xpose.msra.mxu0 0.0
      %819 = vmatprep.subr.mxu0 0.0
      %820 = vmatpush1.xpose.msra.mxu0 0.0
      %821 = vmatprep.subr.mxu0 0.0
      %822 = vmatpush1.xpose.msra.mxu0 0.0
      %823 = vmatprep.subr.mxu0 0.0
      %824 = vmatpush1.xpose.msra.mxu0 0.0
      %825 = vmatprep.subr.mxu0 0.0
      %826 = vmatpush1.xpose.msra.mxu0 0.0
      %827 = vmatprep.subr.mxu0 0.0
      %828 = vmatpush1.xpose.msra.mxu0 0.0
      %829 = vmatprep.subr.mxu0 0.0
      %830 = vmatpush1.xpose.msra.mxu0 0.0
      %831 = vmatprep.subr.mxu0 0.0
      %832 = vmatpush1.xpose.msra.mxu0 0.0
      %833 = vmatprep.subr.mxu0 0.0
      %834 = vmatpush1.xpose.msra.mxu0 0.0
      %835 = vmatprep.subr.mxu0 0.0
      %836 = vmatpush1.xpose.msra.mxu0 0.0
      %837 = vmatprep.subr.mxu0 0.0
      %838 = vmatpush1.xpose.msra.mxu0 0.0
      %839 = vmatprep.subr.mxu0 0.0
      %840 = vmatpush1.xpose.msra.mxu0 0.0
      %841 = vmatprep.subr.mxu0 0.0
      %842 = vmatpush1.xpose.msra.mxu0 0.0
      %843 = vmatprep.subr.mxu0 0.0
      %844 = vmatpush1.xpose.msra.mxu0 0.0
      %845 = vmatprep.subr.mxu0 0.0
      %846 = vmatpush1.xpose.msra.mxu0 0.0
      %847 = vmatprep.subr.mxu0 0.0
      %848 = vmatpush1.xpose.msra.mxu0 0.0
      %849 = vmatprep.subr.mxu0 0.0
      %850 = vmatpush1.xpose.msra.mxu0 0.0
      %851 = vmatprep.subr.mxu0 0.0
      %852 = vmatpush1.xpose.msra.mxu0 0.0
      %853 = vmatprep.subr.mxu0 0.0
      %854 = vmatpush1.xpose.msra.mxu0 0.0
      %855 = vmatprep.subr.mxu0 0.0
      %856 = vmatpush1.xpose.msra.mxu0 0.0
      %857 = vmatprep.subr.mxu0 0.0
      %858 = vmatpush1.xpose.msra.mxu0 0.0
      %859 = vmatprep.subr.mxu0 0.0
      %860 = vmatpush1.xpose.msra.mxu0 0.0
      %861 = vmatprep.subr.mxu0 0.0
      %862 = vmatpush1.xpose.msra.mxu0 0.0
      %863 = vmatprep.subr.mxu0 0.0
      %864 = vmatpush1.xpose.msra.mxu0 0.0
      %865 = vmatprep.subr.mxu0 0.0
      %866 = vmatpush1.xpose.msra.mxu0 0.0
      %867 = vmatprep.subr.mxu0 0.0
      %868 = vmatpush1.xpose.msra.mxu0 0.0
      %869 = vmatprep.subr.mxu0 0.0
      %870 = vmatpush1.xpose.msra.mxu0 0.0
      %871 = vmatprep.subr.mxu0 0.0
      %872 = vmatpush1.xpose.msra.mxu0 0.0
      %873 = vmatprep.subr.mxu0 0.0
      %874 = vmatpush1.xpose.msra.mxu0 0.0
      %875 = vmatprep.subr.mxu0 0.0
      %876 = vmatpush1.xpose.msra.mxu0 0.0
      %877 = vmatprep.mubr.f32.mxu0 0.0
      %878 = vmatmul.mubr.f32.gmra.mrb[0].mxu0 %v809
      %v879 = vpop.f32.mrb[0].mxu0
      %v880 = vadd.f32 0.0, %v879
      %v881 = vpop.f32.mrb[0].mxu0
      %882 = vdwg.mxu0
      %v883 = vmul.f32 %v803, 0.25
      %v884 = vmul.f32 %v880, 0.25
      %v885 = vadd.f32 %v883, %v648
      %v886 = vadd.f32 %v884, %v652
      %vm887 = vcmask 64512
      %v888 = vsel %vm887, %v885, -inf
      %889 = vmax.xlane.f32.xlu0 %v888
      %v890 = vpop.xlane.xlu0 %889
      %v891 = vsel %vm887, %v886, -inf
      %892 = vmax.xlane.f32.xlu0 %v891
      %v893 = vpop.xlane.xlu0 %892
      %v894 = vsub.f32 %v885, %v890
      %v895 = vsub.f32 %v886, %v893
      %v896 = vmul.f32 %v894, 1.442695
      %v897 = vpow.pop %v896
      %v898 = vmul.f32 %v895, 1.442695
      %v899 = vpow.pop %v898
      %v900 = vsel %vm887, %v897, 0.0
      %901 = vadd.xlane.f32.xlu0 %v900
      %v902 = vpop.xlane.xlu0 %901
      %v903 = vsel %vm887, %v899, 0.0
      %904 = vadd.xlane.f32.xlu0 %v903
      %v905 = vpop.xlane.xlu0 %904
      %v906 = vrcp.pop %v902
      %v907 = vrcp.pop %v905
      %v908 = vmul.f32 %v897, %v906
      %v909 = vmul.f32 %v899, %v907
      %910 = vrot.lane.b32.xlu0 %v718, 64
      %v911 = vpop.permute.xlu0 %910
      %v914 = vsel %vm887, %v908, 0
      %916 = vmatprep.subr.mxu0 0.0
      %917 = vmatpush1.msra.mxu0 %v911
      %918 = vmatprep.subr.mxu0 0.0
      %919 = vmatpush1.msra.mxu0 0.0
      %920 = vmatprep.subr.mxu0 0.0
      %921 = vmatpush1.msra.mxu0 0.0
      %922 = vmatprep.subr.mxu0 0.0
      %923 = vmatpush1.msra.mxu0 0.0
      %924 = vmatprep.subr.mxu0 0.0
      %925 = vmatpush1.msra.mxu0 0.0
      %926 = vmatprep.subr.mxu0 0.0
      %927 = vmatpush1.msra.mxu0 0.0
      %928 = vmatprep.subr.mxu0 0.0
      %929 = vmatpush1.msra.mxu0 0.0
      %930 = vmatprep.subr.mxu0 0.0
      %931 = vmatpush1.msra.mxu0 0.0
      %932 = vmatprep.subr.mxu0 0.0
      %933 = vmatpush1.msra.mxu0 0.0
      %934 = vmatprep.subr.mxu0 0.0
      %935 = vmatpush1.msra.mxu0 0.0
      %936 = vmatprep.subr.mxu0 0.0
      %937 = vmatpush1.msra.mxu0 0.0
      %938 = vmatprep.subr.mxu0 0.0
      %939 = vmatpush1.msra.mxu0 0.0
      %940 = vmatprep.subr.mxu0 0.0
      %941 = vmatpush1.msra.mxu0 0.0
      %942 = vmatprep.subr.mxu0 0.0
      %943 = vmatpush1.msra.mxu0 0.0
      %944 = vmatprep.subr.mxu0 0.0
      %945 = vmatpush1.msra.mxu0 0.0
      %946 = vmatprep.subr.mxu0 0.0
      %947 = vmatpush1.msra.mxu0 0.0
      %948 = vmatprep.subr.mxu0 0.0
      %949 = vmatpush1.msra.mxu0 0.0
      %950 = vmatprep.subr.mxu0 0.0
      %951 = vmatpush1.msra.mxu0 0.0
      %952 = vmatprep.subr.mxu0 0.0
      %953 = vmatpush1.msra.mxu0 0.0
      %954 = vmatprep.subr.mxu0 0.0
      %955 = vmatpush1.msra.mxu0 0.0
      %956 = vmatprep.subr.mxu0 0.0
      %957 = vmatpush1.msra.mxu0 0.0
      %958 = vmatprep.subr.mxu0 0.0
      %959 = vmatpush1.msra.mxu0 0.0
      %960 = vmatprep.subr.mxu0 0.0
      %961 = vmatpush1.msra.mxu0 0.0
      %962 = vmatprep.subr.mxu0 0.0
      %963 = vmatpush1.msra.mxu0 0.0
      %964 = vmatprep.subr.mxu0 0.0
      %965 = vmatpush1.msra.mxu0 0.0
      %966 = vmatprep.subr.mxu0 0.0
      %967 = vmatpush1.msra.mxu0 0.0
      %968 = vmatprep.subr.mxu0 0.0
      %969 = vmatpush1.msra.mxu0 0.0
      %970 = vmatprep.subr.mxu0 0.0
      %971 = vmatpush1.msra.mxu0 0.0
      %972 = vmatprep.subr.mxu0 0.0
      %973 = vmatpush1.msra.mxu0 0.0
      %974 = vmatprep.subr.mxu0 0.0
      %975 = vmatpush1.msra.mxu0 0.0
      %976 = vmatprep.subr.mxu0 0.0
      %977 = vmatpush1.msra.mxu0 0.0
      %978 = vmatprep.subr.mxu0 0.0
      %979 = vmatpush1.msra.mxu0 0.0
      %980 = vmatprep.mubr.f32.mxu0 0.0
      %981 = vmatmul.mubr.f32.gmra.mrb[0].mxu0 %v914
      %v982 = vpop.f32.mrb[0].mxu0
      %v983 = vadd.f32 0.0, %v982
      %v984 = vpop.f32.mrb[0].mxu0
      %985 = vdwg.mxu0
      %986 = vrot.lane.b32.xlu0 %v721, 64
      %v987 = vpop.permute.xlu0 %986
      %v990 = vsel %vm887, %v909, 0
      %992 = vmatprep.subr.mxu0 0.0
      %993 = vmatpush1.msra.mxu0 %v987
      %994 = vmatprep.subr.mxu0 0.0
      %995 = vmatpush1.msra.mxu0 0.0
      %996 = vmatprep.subr.mxu0 0.0
      %997 = vmatpush1.msra.mxu0 0.0
      %998 = vmatprep.subr.mxu0 0.0
      %999 = vmatpush1.msra.mxu0 0.0
      %1000 = vmatprep.subr.mxu0 0.0
      %1001 = vmatpush1.msra.mxu0 0.0
      %1002 = vmatprep.subr.mxu0 0.0
      %1003 = vmatpush1.msra.mxu0 0.0
      %1004 = vmatprep.subr.mxu0 0.0
      %1005 = vmatpush1.msra.mxu0 0.0
      %1006 = vmatprep.subr.mxu0 0.0
      %1007 = vmatpush1.msra.mxu0 0.0
      %1008 = vmatprep.subr.mxu0 0.0
      %1009 = vmatpush1.msra.mxu0 0.0
      %1010 = vmatprep.subr.mxu0 0.0
      %1011 = vmatpush1.msra.mxu0 0.0
      %1012 = vmatprep.subr.mxu0 0.0
      %1013 = vmatpush1.msra.mxu0 0.0
      %1014 = vmatprep.subr.mxu0 0.0
      %1015 = vmatpush1.msra.mxu0 0.0
      %1016 = vmatprep.subr.mxu0 0.0
      %1017 = vmatpush1.msra.mxu0 0.0
      %1018 = vmatprep.subr.mxu0 0.0
      %1019 = vmatpush1.msra.mxu0 0.0
      %1020 = vmatprep.subr.mxu0 0.0
      %1021 = vmatpush1.msra.mxu0 0.0
      %1022 = vmatprep.subr.mxu0 0.0
      %1023 = vmatpush1.msra.mxu0 0.0
      %1024 = vmatprep.subr.mxu0 0.0
      %1025 = vmatpush1.msra.mxu0 0.0
      %1026 = vmatprep.subr.mxu0 0.0
      %1027 = vmatpush1.msra.mxu0 0.0
      %1028 = vmatprep.subr.mxu0 0.0
      %1029 = vmatpush1.msra.mxu0 0.0
      %1030 = vmatprep.subr.mxu0 0.0
      %1031 = vmatpush1.msra.mxu0 0.0
      %1032 = vmatprep.subr.mxu0 0.0
      %1033 = vmatpush1.msra.mxu0 0.0
      %1034 = vmatprep.subr.mxu0 0.0
      %1035 = vmatpush1.msra.mxu0 0.0
      %1036 = vmatprep.subr.mxu0 0.0
      %1037 = vmatpush1.msra.mxu0 0.0
      %1038 = vmatprep.subr.mxu0 0.0
      %1039 = vmatpush1.msra.mxu0 0.0
      %1040 = vmatprep.subr.mxu0 0.0
      %1041 = vmatpush1.msra.mxu0 0.0
      %1042 = vmatprep.subr.mxu0 0.0
      %1043 = vmatpush1.msra.mxu0 0.0
      %1044 = vmatprep.subr.mxu0 0.0
      %1045 = vmatpush1.msra.mxu0 0.0
      %1046 = vmatprep.subr.mxu0 0.0
      %1047 = vmatpush1.msra.mxu0 0.0
      %1048 = vmatprep.subr.mxu0 0.0
      %1049 = vmatpush1.msra.mxu0 0.0
      %1050 = vmatprep.subr.mxu0 0.0
      %1051 = vmatpush1.msra.mxu0 0.0
      %1052 = vmatprep.subr.mxu0 0.0
      %1053 = vmatpush1.msra.mxu0 0.0
      %1054 = vmatprep.subr.mxu0 0.0
      %1055 = vmatpush1.msra.mxu0 0.0
      %1056 = vmatprep.mubr.f32.mxu0 0.0
      %1057 = vmatmul.mubr.f32.gmra.mrb[0].mxu0 %v990
      %v1058 = vpop.f32.mrb[0].mxu0
      %v1059 = vadd.f32 0.0, %v1058
      %v1060 = vpop.f32.mrb[0].mxu0
      %1061 = vdwg.mxu0
      %v1062 = vpack.c.bf16 %v1059, %v983
      %1063 = vrot.lane.b32.xlu0 %v718, 112
      %v1064 = vpop.permute.xlu0 %1063
      %1065 = vrot.lane.b32.xlu0 %v718, 80
      %v1066 = vpop.permute.xlu0 %1065
      %v1067 = vsel %vm731, %v1064, 0
      %v1069 = vsel %vm731, %v1066, 0
      %1071 = vmatprep.subr.mxu0 0.0
      %1072 = vmatpush1.xpose.msra.mxu0 %v1069
      %1073 = vmatprep.subr.mxu0 0.0
      %1074 = vmatpush1.xpose.msra.mxu0 0.0
      %1075 = vmatprep.subr.mxu0 0.0
      %1076 = vmatpush1.xpose.msra.mxu0 0.0
      %1077 = vmatprep.subr.mxu0 0.0
      %1078 = vmatpush1.xpose.msra.mxu0 0.0
      %1079 = vmatprep.subr.mxu0 0.0
      %1080 = vmatpush1.xpose.msra.mxu0 0.0
      %1081 = vmatprep.subr.mxu0 0.0
      %1082 = vmatpush1.xpose.msra.mxu0 0.0
      %1083 = vmatprep.subr.mxu0 0.0
      %1084 = vmatpush1.xpose.msra.mxu0 0.0
      %1085 = vmatprep.subr.mxu0 0.0
      %1086 = vmatpush1.xpose.msra.mxu0 0.0
      %1087 = vmatprep.subr.mxu0 0.0
      %1088 = vmatpush1.xpose.msra.mxu0 0.0
      %1089 = vmatprep.subr.mxu0 0.0
      %1090 = vmatpush1.xpose.msra.mxu0 0.0
      %1091 = vmatprep.subr.mxu0 0.0
      %1092 = vmatpush1.xpose.msra.mxu0 0.0
      %1093 = vmatprep.subr.mxu0 0.0
      %1094 = vmatpush1.xpose.msra.mxu0 0.0
      %1095 = vmatprep.subr.mxu0 0.0
      %1096 = vmatpush1.xpose.msra.mxu0 0.0
      %1097 = vmatprep.subr.mxu0 0.0
      %1098 = vmatpush1.xpose.msra.mxu0 0.0
      %1099 = vmatprep.subr.mxu0 0.0
      %1100 = vmatpush1.xpose.msra.mxu0 0.0
      %1101 = vmatprep.subr.mxu0 0.0
      %1102 = vmatpush1.xpose.msra.mxu0 0.0
      %1103 = vmatprep.subr.mxu0 0.0
      %1104 = vmatpush1.xpose.msra.mxu0 0.0
      %1105 = vmatprep.subr.mxu0 0.0
      %1106 = vmatpush1.xpose.msra.mxu0 0.0
      %1107 = vmatprep.subr.mxu0 0.0
      %1108 = vmatpush1.xpose.msra.mxu0 0.0
      %1109 = vmatprep.subr.mxu0 0.0
      %1110 = vmatpush1.xpose.msra.mxu0 0.0
      %1111 = vmatprep.subr.mxu0 0.0
      %1112 = vmatpush1.xpose.msra.mxu0 0.0
      %1113 = vmatprep.subr.mxu0 0.0
      %1114 = vmatpush1.xpose.msra.mxu0 0.0
      %1115 = vmatprep.subr.mxu0 0.0
      %1116 = vmatpush1.xpose.msra.mxu0 0.0
      %1117 = vmatprep.subr.mxu0 0.0
      %1118 = vmatpush1.xpose.msra.mxu0 0.0
      %1119 = vmatprep.subr.mxu0 0.0
      %1120 = vmatpush1.xpose.msra.mxu0 0.0
      %1121 = vmatprep.subr.mxu0 0.0
      %1122 = vmatpush1.xpose.msra.mxu0 0.0
      %1123 = vmatprep.subr.mxu0 0.0
      %1124 = vmatpush1.xpose.msra.mxu0 0.0
      %1125 = vmatprep.subr.mxu0 0.0
      %1126 = vmatpush1.xpose.msra.mxu0 0.0
      %1127 = vmatprep.subr.mxu0 0.0
      %1128 = vmatpush1.xpose.msra.mxu0 0.0
      %1129 = vmatprep.subr.mxu0 0.0
      %1130 = vmatpush1.xpose.msra.mxu0 0.0
      %1131 = vmatprep.subr.mxu0 0.0
      %1132 = vmatpush1.xpose.msra.mxu0 0.0
      %1133 = vmatprep.subr.mxu0 0.0
      %1134 = vmatpush1.xpose.msra.mxu0 0.0
      %1135 = vmatprep.mubr.f32.mxu0 0.0
      %1136 = vmatmul.mubr.f32.gmra.mrb[0].mxu0 %v1067
      %v1137 = vpop.f32.mrb[0].mxu0
      %v1138 = vadd.f32 0.0, %v1137
      %v1139 = vpop.f32.mrb[0].mxu0
      %1140 = vdwg.mxu0
      %1141 = vrot.lane.b32.xlu0 %v721, 112
      %v1142 = vpop.permute.xlu0 %1141
      %1143 = vrot.lane.b32.xlu0 %v721, 80
      %v1144 = vpop.permute.xlu0 %1143
      %v1145 = vsel %vm731, %v1142, 0
      %v1147 = vsel %vm731, %v1144, 0
      %1149 = vmatprep.subr.mxu0 0.0
      %1150 = vmatpush1.xpose.msra.mxu0 %v1147
      %1151 = vmatprep.subr.mxu0 0.0
      %1152 = vmatpush1.xpose.msra.mxu0 0.0
      %1153 = vmatprep.subr.mxu0 0.0
      %1154 = vmatpush1.xpose.msra.mxu0 0.0
      %1155 = vmatprep.subr.mxu0 0.0
      %1156 = vmatpush1.xpose.msra.mxu0 0.0
      %1157 = vmatprep.subr.mxu0 0.0
      %1158 = vmatpush1.xpose.msra.mxu0 0.0
      %1159 = vmatprep.subr.mxu0 0.0
      %1160 = vmatpush1.xpose.msra.mxu0 0.0
      %1161 = vmatprep.subr.mxu0 0.0
      %1162 = vmatpush1.xpose.msra.mxu0 0.0
      %1163 = vmatprep.subr.mxu0 0.0
      %1164 = vmatpush1.xpose.msra.mxu0 0.0
      %1165 = vmatprep.subr.mxu0 0.0
      %1166 = vmatpush1.xpose.msra.mxu0 0.0
      %1167 = vmatprep.subr.mxu0 0.0
      %1168 = vmatpush1.xpose.msra.mxu0 0.0
      %1169 = vmatprep.subr.mxu0 0.0
      %1170 = vmatpush1.xpose.msra.mxu0 0.0
      %1171 = vmatprep.subr.mxu0 0.0
      %1172 = vmatpush1.xpose.msra.mxu0 0.0
      %1173 = vmatprep.subr.mxu0 0.0
      %1174 = vmatpush1.xpose.msra.mxu0 0.0
      %1175 = vmatprep.subr.mxu0 0.0
      %1176 = vmatpush1.xpose.msra.mxu0 0.0
      %1177 = vmatprep.subr.mxu0 0.0
      %1178 = vmatpush1.xpose.msra.mxu0 0.0
      %1179 = vmatprep.subr.mxu0 0.0
      %1180 = vmatpush1.xpose.msra.mxu0 0.0
      %1181 = vmatprep.subr.mxu0 0.0
      %1182 = vmatpush1.xpose.msra.mxu0 0.0
      %1183 = vmatprep.subr.mxu0 0.0
      %1184 = vmatpush1.xpose.msra.mxu0 0.0
      %1185 = vmatprep.subr.mxu0 0.0
      %1186 = vmatpush1.xpose.msra.mxu0 0.0
      %1187 = vmatprep.subr.mxu0 0.0
      %1188 = vmatpush1.xpose.msra.mxu0 0.0
      %1189 = vmatprep.subr.mxu0 0.0
      %1190 = vmatpush1.xpose.msra.mxu0 0.0
      %1191 = vmatprep.subr.mxu0 0.0
      %1192 = vmatpush1.xpose.msra.mxu0 0.0
      %1193 = vmatprep.subr.mxu0 0.0
      %1194 = vmatpush1.xpose.msra.mxu0 0.0
      %1195 = vmatprep.subr.mxu0 0.0
      %1196 = vmatpush1.xpose.msra.mxu0 0.0
      %1197 = vmatprep.subr.mxu0 0.0
      %1198 = vmatpush1.xpose.msra.mxu0 0.0
      %1199 = vmatprep.subr.mxu0 0.0
      %1200 = vmatpush1.xpose.msra.mxu0 0.0
      %1201 = vmatprep.subr.mxu0 0.0
      %1202 = vmatpush1.xpose.msra.mxu0 0.0
      %1203 = vmatprep.subr.mxu0 0.0
      %1204 = vmatpush1.xpose.msra.mxu0 0.0
      %1205 = vmatprep.subr.mxu0 0.0
      %1206 = vmatpush1.xpose.msra.mxu0 0.0
      %1207 = vmatprep.subr.mxu0 0.0
      %1208 = vmatpush1.xpose.msra.mxu0 0.0
      %1209 = vmatprep.subr.mxu0 0.0
      %1210 = vmatpush1.xpose.msra.mxu0 0.0
      %1211 = vmatprep.subr.mxu0 0.0
      %1212 = vmatpush1.xpose.msra.mxu0 0.0
      %1213 = vmatprep.mubr.f32.mxu0 0.0
      %1214 = vmatmul.mubr.f32.gmra.mrb[0].mxu0 %v1145
      %v1215 = vpop.f32.mrb[0].mxu0
      %v1216 = vadd.f32 0.0, %v1215
      %v1217 = vpop.f32.mrb[0].mxu0
      %1218 = vdwg.mxu0
      %v1219 = vmul.f32 %v1138, 0.25
      %v1220 = vmul.f32 %v1216, 0.25
      %v1221 = vadd.f32 %v1219, %v648
      %v1222 = vadd.f32 %v1220, %v652
      %v1223 = vsel %vm887, %v1221, -inf
      %1224 = vmax.xlane.f32.xlu0 %v1223
      %v1225 = vpop.xlane.xlu0 %1224
      %v1226 = vsel %vm887, %v1222, -inf
      %1227 = vmax.xlane.f32.xlu0 %v1226
      %v1228 = vpop.xlane.xlu0 %1227
      %v1229 = vsub.f32 %v1221, %v1225
      %v1230 = vsub.f32 %v1222, %v1228
      %v1231 = vmul.f32 %v1229, 1.442695
      %v1232 = vpow.pop %v1231
      %v1233 = vmul.f32 %v1230, 1.442695
      %v1234 = vpow.pop %v1233
      %v1235 = vsel %vm887, %v1232, 0.0
      %1236 = vadd.xlane.f32.xlu0 %v1235
      %v1237 = vpop.xlane.xlu0 %1236
      %v1238 = vsel %vm887, %v1234, 0.0
      %1239 = vadd.xlane.f32.xlu0 %v1238
      %v1240 = vpop.xlane.xlu0 %1239
      %v1241 = vrcp.pop %v1237
      %v1242 = vrcp.pop %v1240
      %v1243 = vmul.f32 %v1232, %v1241
      %v1244 = vmul.f32 %v1234, %v1242
      %1245 = vrot.lane.b32.xlu0 %v718, 48
      %v1246 = vpop.permute.xlu0 %1245
      %v1249 = vsel %vm887, %v1243, 0
      %1251 = vmatprep.subr.mxu0 0.0
      %1252 = vmatpush1.msra.mxu0 %v1246
      %1253 = vmatprep.subr.mxu0 0.0
      %1254 = vmatpush1.msra.mxu0 0.0
      %1255 = vmatprep.subr.mxu0 0.0
      %1256 = vmatpush1.msra.mxu0 0.0
      %1257 = vmatprep.subr.mxu0 0.0
      %1258 = vmatpush1.msra.mxu0 0.0
      %1259 = vmatprep.subr.mxu0 0.0
      %1260 = vmatpush1.msra.mxu0 0.0
      %1261 = vmatprep.subr.mxu0 0.0
      %1262 = vmatpush1.msra.mxu0 0.0
      %1263 = vmatprep.subr.mxu0 0.0
      %1264 = vmatpush1.msra.mxu0 0.0
      %1265 = vmatprep.subr.mxu0 0.0
      %1266 = vmatpush1.msra.mxu0 0.0
      %1267 = vmatprep.subr.mxu0 0.0
      %1268 = vmatpush1.msra.mxu0 0.0
      %1269 = vmatprep.subr.mxu0 0.0
      %1270 = vmatpush1.msra.mxu0 0.0
      %1271 = vmatprep.subr.mxu0 0.0
      %1272 = vmatpush1.msra.mxu0 0.0
      %1273 = vmatprep.subr.mxu0 0.0
      %1274 = vmatpush1.msra.mxu0 0.0
      %1275 = vmatprep.subr.mxu0 0.0
      %1276 = vmatpush1.msra.mxu0 0.0
      %1277 = vmatprep.subr.mxu0 0.0
      %1278 = vmatpush1.msra.mxu0 0.0
      %1279 = vmatprep.subr.mxu0 0.0
      %1280 = vmatpush1.msra.mxu0 0.0
      %1281 = vmatprep.subr.mxu0 0.0
      %1282 = vmatpush1.msra.mxu0 0.0
      %1283 = vmatprep.subr.mxu0 0.0
      %1284 = vmatpush1.msra.mxu0 0.0
      %1285 = vmatprep.subr.mxu0 0.0
      %1286 = vmatpush1.msra.mxu0 0.0
      %1287 = vmatprep.subr.mxu0 0.0
      %1288 = vmatpush1.msra.mxu0 0.0
      %1289 = vmatprep.subr.mxu0 0.0
      %1290 = vmatpush1.msra.mxu0 0.0
      %1291 = vmatprep.subr.mxu0 0.0
      %1292 = vmatpush1.msra.mxu0 0.0
      %1293 = vmatprep.subr.mxu0 0.0
      %1294 = vmatpush1.msra.mxu0 0.0
      %1295 = vmatprep.subr.mxu0 0.0
      %1296 = vmatpush1.msra.mxu0 0.0
      %1297 = vmatprep.subr.mxu0 0.0
      %1298 = vmatpush1.msra.mxu0 0.0
      %1299 = vmatprep.subr.mxu0 0.0
      %1300 = vmatpush1.msra.mxu0 0.0
      %1301 = vmatprep.subr.mxu0 0.0
      %1302 = vmatpush1.msra.mxu0 0.0
      %1303 = vmatprep.subr.mxu0 0.0
      %1304 = vmatpush1.msra.mxu0 0.0
      %1305 = vmatprep.subr.mxu0 0.0
      %1306 = vmatpush1.msra.mxu0 0.0
      %1307 = vmatprep.subr.mxu0 0.0
      %1308 = vmatpush1.msra.mxu0 0.0
      %1309 = vmatprep.subr.mxu0 0.0
      %1310 = vmatpush1.msra.mxu0 0.0
      %1311 = vmatprep.subr.mxu0 0.0
      %1312 = vmatpush1.msra.mxu0 0.0
      %1313 = vmatprep.subr.mxu0 0.0
      %1314 = vmatpush1.msra.mxu0 0.0
      %1315 = vmatprep.mubr.f32.mxu0 0.0
      %1316 = vmatmul.mubr.f32.gmra.mrb[0].mxu0 %v1249
      %v1317 = vpop.f32.mrb[0].mxu0
      %v1318 = vadd.f32 0.0, %v1317
      %v1319 = vpop.f32.mrb[0].mxu0
      %1320 = vdwg.mxu0
      %1321 = vrot.lane.b32.xlu0 %v721, 48
      %v1322 = vpop.permute.xlu0 %1321
      %v1325 = vsel %vm887, %v1244, 0
      %1327 = vmatprep.subr.mxu0 0.0
      %1328 = vmatpush1.msra.mxu0 %v1322
      %1329 = vmatprep.subr.mxu0 0.0
      %1330 = vmatpush1.msra.mxu0 0.0
      %1331 = vmatprep.subr.mxu0 0.0
      %1332 = vmatpush1.msra.mxu0 0.0
      %1333 = vmatprep.subr.mxu0 0.0
      %1334 = vmatpush1.msra.mxu0 0.0
      %1335 = vmatprep.subr.mxu0 0.0
      %1336 = vmatpush1.msra.mxu0 0.0
      %1337 = vmatprep.subr.mxu0 0.0
      %1338 = vmatpush1.msra.mxu0 0.0
      %1339 = vmatprep.subr.mxu0 0.0
      %1340 = vmatpush1.msra.mxu0 0.0
      %1341 = vmatprep.subr.mxu0 0.0
      %1342 = vmatpush1.msra.mxu0 0.0
      %1343 = vmatprep.subr.mxu0 0.0
      %1344 = vmatpush1.msra.mxu0 0.0
      %1345 = vmatprep.subr.mxu0 0.0
      %1346 = vmatpush1.msra.mxu0 0.0
      %1347 = vmatprep.subr.mxu0 0.0
      %1348 = vmatpush1.msra.mxu0 0.0
      %1349 = vmatprep.subr.mxu0 0.0
      %1350 = vmatpush1.msra.mxu0 0.0
      %1351 = vmatprep.subr.mxu0 0.0
      %1352 = vmatpush1.msra.mxu0 0.0
      %1353 = vmatprep.subr.mxu0 0.0
      %1354 = vmatpush1.msra.mxu0 0.0
      %1355 = vmatprep.subr.mxu0 0.0
      %1356 = vmatpush1.msra.mxu0 0.0
      %1357 = vmatprep.subr.mxu0 0.0
      %1358 = vmatpush1.msra.mxu0 0.0
      %1359 = vmatprep.subr.mxu0 0.0
      %1360 = vmatpush1.msra.mxu0 0.0
      %1361 = vmatprep.subr.mxu0 0.0
      %1362 = vmatpush1.msra.mxu0 0.0
      %1363 = vmatprep.subr.mxu0 0.0
      %1364 = vmatpush1.msra.mxu0 0.0
      %1365 = vmatprep.subr.mxu0 0.0
      %1366 = vmatpush1.msra.mxu0 0.0
      %1367 = vmatprep.subr.mxu0 0.0
      %1368 = vmatpush1.msra.mxu0 0.0
      %1369 = vmatprep.subr.mxu0 0.0
      %1370 = vmatpush1.msra.mxu0 0.0
      %1371 = vmatprep.subr.mxu0 0.0
      %1372 = vmatpush1.msra.mxu0 0.0
      %1373 = vmatprep.subr.mxu0 0.0
      %1374 = vmatpush1.msra.mxu0 0.0
      %1375 = vmatprep.subr.mxu0 0.0
      %1376 = vmatpush1.msra.mxu0 0.0
      %1377 = vmatprep.subr.mxu0 0.0
      %1378 = vmatpush1.msra.mxu0 0.0
      %1379 = vmatprep.subr.mxu0 0.0
      %1380 = vmatpush1.msra.mxu0 0.0
      %1381 = vmatprep.subr.mxu0 0.0
      %1382 = vmatpush1.msra.mxu0 0.0
      %1383 = vmatprep.subr.mxu0 0.0
      %1384 = vmatpush1.msra.mxu0 0.0
      %1385 = vmatprep.subr.mxu0 0.0
      %1386 = vmatpush1.msra.mxu0 0.0
      %1387 = vmatprep.subr.mxu0 0.0
      %1388 = vmatpush1.msra.mxu0 0.0
      %1389 = vmatprep.subr.mxu0 0.0
      %1390 = vmatpush1.msra.mxu0 0.0
      %1391 = vmatprep.mubr.f32.mxu0 0.0
      %1392 = vmatmul.mubr.f32.gmra.mrb[0].mxu0 %v1325
      %v1393 = vpop.f32.mrb[0].mxu0
      %v1394 = vadd.f32 0.0, %v1393
      %v1395 = vpop.f32.mrb[0].mxu0
      %1396 = vdwg.mxu0
      %v1397 = vpack.c.bf16 %v1394, %v1318
      %v1400 = vunpack.c.l.b16 %v726
      %v1401 = vunpack.c.l.b16 %v727
      %v1402 = vpack.c.b16 %v1401, %v1400
      %v1405 = vsel %vm731, %v1397, 0
      %1407 = vmatprep.subr.bf16.mxu0 0
      %1408 = vmatpush1.bf16.msra.mxu0 %v1402
      %1409 = vmatprep.subr.bf16.mxu0 0
      %1410 = vmatpush1.bf16.msra.mxu0 0
      %1411 = vmatprep.subr.bf16.mxu0 0
      %1412 = vmatpush1.bf16.msra.mxu0 0
      %1413 = vmatprep.subr.bf16.mxu0 0
      %1414 = vmatpush1.bf16.msra.mxu0 0
      %1415 = vmatprep.subr.bf16.mxu0 0
      %1416 = vmatpush1.bf16.msra.mxu0 0
      %1417 = vmatprep.subr.bf16.mxu0 0
      %1418 = vmatpush1.bf16.msra.mxu0 0
      %1419 = vmatprep.subr.bf16.mxu0 0
      %1420 = vmatpush1.bf16.msra.mxu0 0
      %1421 = vmatprep.subr.bf16.mxu0 0
      %1422 = vmatpush1.bf16.msra.mxu0 0
      %1423 = vmatprep.subr.bf16.mxu0 0
      %1424 = vmatpush1.bf16.msra.mxu0 0
      %1425 = vmatprep.subr.bf16.mxu0 0
      %1426 = vmatpush1.bf16.msra.mxu0 0
      %1427 = vmatprep.subr.bf16.mxu0 0
      %1428 = vmatpush1.bf16.msra.mxu0 0
      %1429 = vmatprep.subr.bf16.mxu0 0
      %1430 = vmatpush1.bf16.msra.mxu0 0
      %1431 = vmatprep.subr.bf16.mxu0 0
      %1432 = vmatpush1.bf16.msra.mxu0 0
      %1433 = vmatprep.subr.bf16.mxu0 0
      %1434 = vmatpush1.bf16.msra.mxu0 0
      %1435 = vmatprep.subr.bf16.mxu0 0
      %1436 = vmatpush1.bf16.msra.mxu0 0
      %1437 = vmatprep.subr.bf16.mxu0 0
      %1438 = vmatpush1.bf16.msra.mxu0 0
      %1439 = vmatprep.mubr.bf16.mxu0 0
      %1440 = vmatmul.mubr.bf16.gmra.mrb[0].mxu0 %v1405
      %v1441 = vpop.f32.mrb[0].mxu0
      %v1442 = vadd.f32 0.0, %v1441
      %v1443 = vpop.f32.mrb[0].mxu0
      %v1444 = vpop.f32.mrb[0].mxu0
      %v1445 = vadd.f32 0.0, %v1444
      %v1446 = vpop.f32.mrb[0].mxu0
      %1447 = vdwg.mxu0
      %v1450 = vunpack.c.l.b16 %v724
      %v1451 = vunpack.c.l.b16 %v725
      %v1452 = vpack.c.b16 %v1451, %v1450
      %v1455 = vsel %vm731, %v1062, 0
      %1457 = vmatprep.subr.bf16.mxu0 0
      %1458 = vmatpush1.bf16.msra.mxu0 %v1452
      %1459 = vmatprep.subr.bf16.mxu0 0
      %1460 = vmatpush1.bf16.msra.mxu0 0
      %1461 = vmatprep.subr.bf16.mxu0 0
      %1462 = vmatpush1.bf16.msra.mxu0 0
      %1463 = vmatprep.subr.bf16.mxu0 0
      %1464 = vmatpush1.bf16.msra.mxu0 0
      %1465 = vmatprep.subr.bf16.mxu0 0
      %1466 = vmatpush1.bf16.msra.mxu0 0
      %1467 = vmatprep.subr.bf16.mxu0 0
      %1468 = vmatpush1.bf16.msra.mxu0 0
      %1469 = vmatprep.subr.bf16.mxu0 0
      %1470 = vmatpush1.bf16.msra.mxu0 0
      %1471 = vmatprep.subr.bf16.mxu0 0
      %1472 = vmatpush1.bf16.msra.mxu0 0
      %1473 = vmatprep.subr.bf16.mxu0 0
      %1474 = vmatpush1.bf16.msra.mxu0 0
      %1475 = vmatprep.subr.bf16.mxu0 0
      %1476 = vmatpush1.bf16.msra.mxu0 0
      %1477 = vmatprep.subr.bf16.mxu0 0
      %1478 = vmatpush1.bf16.msra.mxu0 0
      %1479 = vmatprep.subr.bf16.mxu0 0
      %1480 = vmatpush1.bf16.msra.mxu0 0
      %1481 = vmatprep.subr.bf16.mxu0 0
      %1482 = vmatpush1.bf16.msra.mxu0 0
      %1483 = vmatprep.subr.bf16.mxu0 0
      %1484 = vmatpush1.bf16.msra.mxu0 0
      %1485 = vmatprep.subr.bf16.mxu0 0
      %1486 = vmatpush1.bf16.msra.mxu0 0
      %1487 = vmatprep.subr.bf16.mxu0 0
      %1488 = vmatpush1.bf16.msra.mxu0 0
      %1489 = vmatprep.mubr.bf16.mxu0 0
      %1490 = vmatmul.mubr.bf16.gmra.mrb[0].mxu0 %v1455
      %v1491 = vpop.f32.mrb[0].mxu0
      %v1492 = vadd.f32 %v1442, %v1491
      %v1493 = vpop.f32.mrb[0].mxu0
      %v1494 = vpop.f32.mrb[0].mxu0
      %v1495 = vadd.f32 %v1445, %v1494
      %v1496 = vpop.f32.mrb[0].mxu0
      %1497 = vdwg.mxu0
      %v1498 = vld [vmem:[%s596] sm:$0x1]
      %v1500 = vlaneseq
      %v1501 = vshrl.u32 %v1500, 7
      %v1502 = vsub.s32 0, %v1501
      %v1503 = vrot.slane %v1498, %v1502
      %v1505 = vadd.f32 %v1492, %v1503
      %v1506 = vadd.f32 %v1495, %v1503
      %v1507 = vadd.f32 %v635, %v1505
      %v1508 = vadd.f32 %v636, %v1506
      %v1509 = vld [vmem:[%s599] sm:$0x1]
      %v1510 = vld [vmem:[%s602] sm:$0x1]
      %v1511 = vsel %vm679, %v1507, 0.0
      %1512 = vadd.xlane.f32.xlu0 %v1511
      %v1513 = vpop.xlane.xlu0 %1512
      %v1514 = vsel %vm679, %v1508, 0.0
      %1515 = vadd.xlane.f32.xlu0 %v1514
      %v1516 = vpop.xlane.xlu0 %1515
      %v1517 = vrcp.pop 32.0
      %v1518 = vmul.f32 %v1513, %v1517
      %v1519 = vmul.f32 %v1516, %v1517
      %v1520 = vsub.f32 %v1507, %v1518
      %v1521 = vsub.f32 %v1508, %v1519
      %v1522 = vmul.f32 %v1520, %v1520
      %v1523 = vmul.f32 %v1521, %v1521
      %v1524 = vsel %vm679, %v1522, 0.0
      %1525 = vadd.xlane.f32.xlu0 %v1524
      %v1526 = vpop.xlane.xlu0 %1525
      %v1527 = vsel %vm679, %v1523, 0.0
      %1528 = vadd.xlane.f32.xlu0 %v1527
      %v1529 = vpop.xlane.xlu0 %1528
      %v1530 = vmul.f32 %v1526, %v1517
      %v1531 = vmul.f32 %v1529, %v1517
      %v1532 = vadd.f32 %v1530, 1e-12
      %v1533 = vadd.f32 %v1531, 1e-12
      %v1534 = vrsqrt.pop %v1532
      %v1535 = vrsqrt.pop %v1533
      %v1536 = vmul.f32 %v1520, %v1534
      %v1537 = vmul.f32 %v1521, %v1535
      %v1539 = vlaneseq
      %v1540 = vshrl.u32 %v1539, 7
      %v1541 = vsub.s32 0, %v1540
      %v1542 = vrot.slane %v1509, %v1541
      %v1544 = vmul.f32 %v1536, %v1542
      %v1545 = vmul.f32 %v1537, %v1542
      %v1547 = vlaneseq
      %v1548 = vshrl.u32 %v1547, 7
      %v1549 = vsub.s32 0, %v1548
      %v1550 = vrot.slane %v1510, %v1549
      %v1552 = vadd.f32 %v1544, %v1550
      %v1553 = vadd.f32 %v1545, %v1550
      %v1554 = vpack.c.bf16 %v1553, %v1552
      %v1555 = vld [vmem:[%s607] sm:$0xf]
      %v1556 = vld [vmem:[%s607 + $0x4] sm:$0xf]
      %v1557 = vld [vmem:[%s607 + $0x8] sm:$0xf]
      %v1558 = vld [vmem:[%s607 + $0xc] sm:$0xf]
      %v1559 = vld [vmem:[%s610] sm:$0x1]
      %v1561 = vlaneseq
      %v1562 = vshrl.u32 %v1561, 7
      %v1563 = vsub.s32 0, %v1562
      %v1564 = vrot.slane %v1559, %v1563
      %v1570 = vunpack.c.l.b16 %v1555
      %v1571 = vunpack.c.l.b16 %v1556
      %v1572 = vunpack.c.l.b16 %v1557
      %v1573 = vunpack.c.l.b16 %v1558
      %v1574 = vpack.c.b16 %v1571, %v1570
      %v1575 = vpack.c.b16 %v1573, %v1572
      %v1579 = vsel %vm679, %v1554, 0
      %1581 = vmatprep.subr.bf16.mxu0 0
      %1582 = vmatpush1.bf16.msra.mxu0 %v1574
      %1583 = vmatprep.subr.bf16.mxu0 0
      %1584 = vmatpush1.bf16.msra.mxu0 %v1575
      %1585 = vmatprep.subr.bf16.mxu0 0
      %1586 = vmatpush1.bf16.msra.mxu0 0
      %1587 = vmatprep.subr.bf16.mxu0 0
      %1588 = vmatpush1.bf16.msra.mxu0 0
      %1589 = vmatprep.subr.bf16.mxu0 0
      %1590 = vmatpush1.bf16.msra.mxu0 0
      %1591 = vmatprep.subr.bf16.mxu0 0
      %1592 = vmatpush1.bf16.msra.mxu0 0
      %1593 = vmatprep.subr.bf16.mxu0 0
      %1594 = vmatpush1.bf16.msra.mxu0 0
      %1595 = vmatprep.subr.bf16.mxu0 0
      %1596 = vmatpush1.bf16.msra.mxu0 0
      %1597 = vmatprep.subr.bf16.mxu0 0
      %1598 = vmatpush1.bf16.msra.mxu0 0
      %1599 = vmatprep.subr.bf16.mxu0 0
      %1600 = vmatpush1.bf16.msra.mxu0 0
      %1601 = vmatprep.subr.bf16.mxu0 0
      %1602 = vmatpush1.bf16.msra.mxu0 0
      %1603 = vmatprep.subr.bf16.mxu0 0
      %1604 = vmatpush1.bf16.msra.mxu0 0
      %1605 = vmatprep.subr.bf16.mxu0 0
      %1606 = vmatpush1.bf16.msra.mxu0 0
      %1607 = vmatprep.subr.bf16.mxu0 0
      %1608 = vmatpush1.bf16.msra.mxu0 0
      %1609 = vmatprep.subr.bf16.mxu0 0
      %1610 = vmatpush1.bf16.msra.mxu0 0
      %1611 = vmatprep.subr.bf16.mxu0 0
      %1612 = vmatpush1.bf16.msra.mxu0 0
      %1613 = vmatprep.mubr.bf16.mxu0 0
      %1614 = vmatmul.mubr.bf16.gmra.mrb[0].mxu0 %v1579
      %v1615 = vpop.f32.mrb[0].mxu0
      %v1616 = vadd.f32 %v1564, %v1615
      %v1617 = vpop.f32.mrb[0].mxu0
      %v1618 = vpop.f32.mrb[0].mxu0
      %v1619 = vadd.f32 %v1564, %v1618
      %v1620 = vpop.f32.mrb[0].mxu0
      %1621 = vdwg.mxu0
      %v1622 = vmul.f32 %v1616, 0.5
      %v1623 = vmul.f32 %v1619, 0.5
      %v1624 = vmul.f32 %v1616, 0.044715
      %v1625 = vmul.f32 %v1619, 0.044715
      %v1626 = vmul.f32 %v1624, %v1616
      %v1627 = vmul.f32 %v1625, %v1619
      %v1628 = vmul.f32 %v1626, %v1616
      %v1629 = vmul.f32 %v1627, %v1619
      %v1630 = vadd.f32 %v1616, %v1628
      %v1631 = vadd.f32 %v1619, %v1629
      %v1632 = vmul.f32 %v1630, 0.7978846
      %v1633 = vmul.f32 %v1631, 0.7978846
      %v1634 = vtanh.pop %v1632
      %v1635 = vtanh.pop %v1633
      %v1636 = vadd.f32 %v1634, 1.0
      %v1637 = vadd.f32 %v1635, 1.0
      %v1638 = vmul.f32 %v1622, %v1636
      %v1639 = vmul.f32 %v1623, %v1637
      %v1640 = vpack.c.bf16 %v1639, %v1638
      %v1641 = vld [vmem:[%s615] sm:$0xf]
      %v1642 = vld [vmem:[%s615 + $0x4] sm:$0xf]
      %v1643 = vld [vmem:[%s615 + $0x8] sm:$0xf]
      %v1644 = vld [vmem:[%s615 + $0xc] sm:$0xf]
      %v1645 = vld [vmem:[%s615 + $0x10] sm:$0xf]
      %v1646 = vld [vmem:[%s615 + $0x14] sm:$0xf]
      %v1647 = vld [vmem:[%s615 + $0x18] sm:$0xf]
      %v1648 = vld [vmem:[%s615 + $0x1c] sm:$0xf]
      %v1649 = vld [vmem:[%s618] sm:$0x1]
      %v1651 = vlaneseq
      %v1652 = vshrl.u32 %v1651, 7
      %v1653 = vsub.s32 0, %v1652
      %v1654 = vrot.slane %v1649, %v1653
      %v1664 = vunpack.c.l.b16 %v1641
      %v1665 = vunpack.c.l.b16 %v1642
      %v1666 = vunpack.c.l.b16 %v1643
      %v1667 = vunpack.c.l.b16 %v1644
      %v1668 = vunpack.c.l.b16 %v1645
      %v1669 = vunpack.c.l.b16 %v1646
      %v1670 = vunpack.c.l.b16 %v1647
      %v1671 = vunpack.c.l.b16 %v1648
      %v1672 = vpack.c.b16 %v1665, %v1664
      %v1673 = vpack.c.b16 %v1667, %v1666
      %v1674 = vpack.c.b16 %v1669, %v1668
      %v1675 = vpack.c.b16 %v1671, %v1670
      %vm1680 = vcmask 523264
      %v1682 = vsel %vm1680, %v1640, 0
      %1684 = vmatprep.subr.bf16.mxu0 0
      %1685 = vmatpush1.bf16.msra.mxu0 %v1672
      %1686 = vmatprep.subr.bf16.mxu0 0
      %1687 = vmatpush1.bf16.msra.mxu0 %v1673
      %1688 = vmatprep.subr.bf16.mxu0 0
      %1689 = vmatpush1.bf16.msra.mxu0 %v1674
      %1690 = vmatprep.subr.bf16.mxu0 0
      %1691 = vmatpush1.bf16.msra.mxu0 %v1675
      %1692 = vmatprep.subr.bf16.mxu0 0
      %1693 = vmatpush1.bf16.msra.mxu0 0
      %1694 = vmatprep.subr.bf16.mxu0 0
      %1695 = vmatpush1.bf16.msra.mxu0 0
      %1696 = vmatprep.subr.bf16.mxu0 0
      %1697 = vmatpush1.bf16.msra.mxu0 0
      %1698 = vmatprep.subr.bf16.mxu0 0
      %1699 = vmatpush1.bf16.msra.mxu0 0
      %1700 = vmatprep.subr.bf16.mxu0 0
      %1701 = vmatpush1.bf16.msra.mxu0 0
      %1702 = vmatprep.subr.bf16.mxu0 0
      %1703 = vmatpush1.bf16.msra.mxu0 0
      %1704 = vmatprep.subr.bf16.mxu0 0
      %1705 = vmatpush1.bf16.msra.mxu0 0
      %1706 = vmatprep.subr.bf16.mxu0 0
      %1707 = vmatpush1.bf16.msra.mxu0 0
      %1708 = vmatprep.subr.bf16.mxu0 0
      %1709 = vmatpush1.bf16.msra.mxu0 0
      %1710 = vmatprep.subr.bf16.mxu0 0
      %1711 = vmatpush1.bf16.msra.mxu0 0
      %1712 = vmatprep.subr.bf16.mxu0 0
      %1713 = vmatpush1.bf16.msra.mxu0 0
      %1714 = vmatprep.subr.bf16.mxu0 0
      %1715 = vmatpush1.bf16.msra.mxu0 0
      %1716 = vmatprep.mubr.bf16.mxu0 0
      %1717 = vmatmul.mubr.bf16.gmra.mrb[0].mxu0 %v1682
      %v1718 = vpop.f32.mrb[0].mxu0
      %v1719 = vadd.f32 %v1654, %v1718
      %v1720 = vpop.f32.mrb[0].mxu0
      %v1721 = vpop.f32.mrb[0].mxu0
      %v1722 = vadd.f32 %v1654, %v1721
      %v1723 = vpop.f32.mrb[0].mxu0
      %1724 = vdwg.mxu0
      %v1725 = vadd.f32 %v1552, %v1719
      %v1726 = vadd.f32 %v1553, %v1722
      %v1727 = vld [vmem:[%s621] sm:$0x1]
      %v1728 = vld [vmem:[%s624] sm:$0x1]
      %v1729 = vsel %vm679, %v1725, 0.0
      %1730 = vadd.xlane.f32.xlu0 %v1729
      %v1731 = vpop.xlane.xlu0 %1730
      %v1732 = vsel %vm679, %v1726, 0.0
      %1733 = vadd.xlane.f32.xlu0 %v1732
      %v1734 = vpop.xlane.xlu0 %1733
      %v1735 = vmul.f32 %v1731, %v1517
      %v1736 = vmul.f32 %v1734, %v1517
      %v1737 = vsub.f32 %v1725, %v1735
      %v1738 = vsub.f32 %v1726, %v1736
      %v1739 = vmul.f32 %v1737, %v1737
      %v1740 = vmul.f32 %v1738, %v1738
      %v1741 = vsel %vm679, %v1739, 0.0
      %1742 = vadd.xlane.f32.xlu0 %v1741
      %v1743 = vpop.xlane.xlu0 %1742
      %v1744 = vsel %vm679, %v1740, 0.0
      %1745 = vadd.xlane.f32.xlu0 %v1744
      %v1746 = vpop.xlane.xlu0 %1745
      %v1747 = vmul.f32 %v1743, %v1517
      %v1748 = vmul.f32 %v1746, %v1517
      %v1749 = vadd.f32 %v1747, 1e-12
      %v1750 = vadd.f32 %v1748, 1e-12
      %v1751 = vrsqrt.pop %v1749
      %v1752 = vrsqrt.pop %v1750
      %v1753 = vmul.f32 %v1737, %v1751
      %v1754 = vmul.f32 %v1738, %v1752
      %v1756 = vlaneseq
      %v1757 = vshrl.u32 %v1756, 7
      %v1758 = vsub.s32 0, %v1757
      %v1759 = vrot.slane %v1727, %v1758
      %v1761 = vmul.f32 %v1753, %v1759
      %v1762 = vmul.f32 %v1754, %v1759
      %v1764 = vlaneseq
      %v1765 = vshrl.u32 %v1764, 7
      %v1766 = vsub.s32 0, %v1765
      %v1767 = vrot.slane %v1728, %v1766
      %v1769 = vadd.f32 %v1761, %v1767
      %v1770 = vadd.f32 %v1762, %v1767
      %1771 = vst.msk [vmem:[%s14] sm:$0xff] %vm679, %v1769
      %1772 = vst.msk [vmem:[%s14 + $0x8] sm:$0xff] %vm679, %v1770
      // Predicated region
      $region81: #{bert_crf_decode.2} parent=75 // pred_check
        %p1773 = pneg %p392
      $region82: #{bert_crf_decode.2} parent=75 // pred_check_branch
        %1775 = sbr.rel (%p1773) target = $region84
      $region83: #{bert_crf_decode.2} parent=75 // pred_region
        _
      $region84: #{bert_crf_decode.2} parent=75 // pred_fallthru
        _
      // Predicated region
      $region85: #{bert_crf_decode.2} parent=75 // pred_check
        %p1776 = pneg %p392
      $region86: #{bert_crf_decode.2} parent=75 // pred_check_branch
        %1778 = sbr.rel (%p1776) target = $region88
      $region87: #{bert_crf_decode.2} parent=75 // pred_region
        _
      $region88: #{bert_crf_decode.2} parent=75 // pred_fallthru
        _
    $region76: #{bert_crf_decode.2} parent=5 // pred_fallthru
      _
    %p1779 = scmp.le.s32.totalorder 2, %s20
    // Predicated region
    $region89: #{bert_crf_decode.2} parent=5 // pred_check
      %p1780 = pneg %p1779
    $region90: #{bert_crf_decode.2} parent=5 // pred_check_branch
      %1782 = sbr.rel (%p1780) target = $region92
    $region91: #{bert_crf_decode.2} parent=5 // pred_region
      %s1783 = ssub.s32 %s20, 2
    $region92: #{bert_crf_decode.2} parent=5 // pred_fallthru
      _
  $region6: #{bert_crf_decode.2} parent=0 // loop_footer
    %s24 = sadd.s32 1, %s20
  $region7: #{bert_crf_decode.2} parent=0 // loop_footer_branch
    %19 = sbr.rel target = $region3
  $region8: #{bert_crf_decode.2} parent=0 // loop_exit
    _

</llo_original>
